<compile_context>
chip_gen: v7x
topology: tpu7x:2x2x1
jax: 0.10.0
libtpu: 0.0.40
codegen_flags: <defaults>
</compile_context>

<pallas_src>
import jax
import jax.numpy as jnp
from jax import lax
from jax.experimental import pallas as pl
from jax.experimental.pallas import tpu as pltpu


def _make_basic_block_kernel(Nb, H, W, Cin, C, use_projection, act_dtype):
    """conv3x3(+folded bn1)+relu -> conv3x3(+folded bn2) -> (+shortcut) -> relu.

    Each conv is 3 whole-plane MXU matmuls of shape
    (Nb*H*W, 3*Ck) x (3*Ck, C): the three kw taps live in the contraction dim
    (weights pre-concatenated in the wrapper)."""
    M = Nb * H * W

    def taps(a, Ck):
        # a: (Nb, H, W, Ck) -> (Nb, H+2, W, 3*Ck).  Row slice [kh:kh+H] is the
        # merged-kw operand for vertical tap kh (zero halo), built entirely in
        # registers / VMEM temps -- no padded scratch round-trip.
        zc = jnp.zeros((Nb, H, 1, Ck), a.dtype)
        left = jnp.concatenate([zc, a[:, :, :W - 1, :]], axis=2)   # in[.., w-1]
        right = jnp.concatenate([a[:, :, 1:, :], zc], axis=2)      # in[.., w+1]
        sw = jnp.concatenate([left, a, right], axis=-1)            # (Nb,H,W,3Ck)
        zr = jnp.zeros((Nb, 1, W, 3 * Ck), a.dtype)
        return jnp.concatenate([zr, sw, zr], axis=1)               # (Nb,H+2,W,3Ck)

    def kernel(*refs):
        if use_projection:
            (x_ref, w1_ref, b1_ref, w2_ref, b2_ref,
             wsc_ref, bsc_ref, out_ref) = refs
        else:
            (x_ref, w1_ref, b1_ref, w2_ref, b2_ref, out_ref) = refs

        x = x_ref[...]                                   # (Nb, H, W, Cin) bf16

        # ---- conv1 (3x3, pad=1); BN1 scale pre-folded into w1 ----
        xt = taps(x, Cin)
        acc1 = jnp.dot(xt[:, 0:H].reshape(M, 3 * Cin), w1_ref[0],
                       preferred_element_type=jnp.float32)
        for kh in (1, 2):
            acc1 = acc1 + jnp.dot(xt[:, kh:kh + H].reshape(M, 3 * Cin),
                                  w1_ref[kh],
                                  preferred_element_type=jnp.float32)
        h1 = jnp.maximum(acc1 + b1_ref[...], 0.0).astype(act_dtype)
        h1 = h1.reshape(Nb, H, W, C)

        # ---- shortcut seeds the conv2 accumulator (epilogue = relu + cast) --
        x2d = x.reshape(M, Cin)
        if use_projection:
            acc2 = jnp.dot(x2d, wsc_ref[...],
                           preferred_element_type=jnp.float32) + bsc_ref[...]
        else:
            acc2 = x2d.astype(jnp.float32)
        acc2 = acc2 + b2_ref[...]

        # ---- conv2 (3x3, pad=1); BN2 scale pre-folded into w2 ----
        ht = taps(h1, C)
        for kh in range(3):
            acc2 = acc2 + jnp.dot(ht[:, kh:kh + H].reshape(M, 3 * C),
                                  w2_ref[kh],
                                  preferred_element_type=jnp.float32)

        # Single aligned (M, C) store in the activation dtype (bf16).
        out_ref[...] = jnp.maximum(acc2, 0.0).astype(out_ref.dtype)

    return kernel


def _fold_and_pack(params, act_dtype):
    """Fold eval-mode BN scale into conv weights (f32), concatenate the kw taps
    along the input-channel axis (K = 3*Cin per kh), cast to compute dtype.
    Biases stay f32 for the epilogue."""
    C = params["w1"].shape[-1]
    Cin = params["w1"].shape[2]
    w1 = (params["w1"] * params["s1"].reshape(1, 1, 1, C)).astype(act_dtype)
    w2 = (params["w2"] * params["s2"].reshape(1, 1, 1, C)).astype(act_dtype)
    fp = {
        # (3, 3, Ci, C) -> (3, 3*Ci, C); reshape merges (kw, ci) kw-major,
        # matching the [left | center | right] channel-concat of the operand.
        "w1": w1.reshape(3, 3 * Cin, C),
        "b1": params["b1"].astype(jnp.float32).reshape(1, C),
        "w2": w2.reshape(3, 3 * C, C),
        "b2": params["b2"].astype(jnp.float32).reshape(1, C),
    }
    if "wsc" in params:
        fp["wsc"] = (params["wsc"] * params["ssc"].reshape(1, C)).astype(act_dtype)
        fp["bsc"] = params["bsc"].astype(jnp.float32).reshape(1, C)
    return fp


def _pick_block_n(N, H, W):
    """Batch elements folded per grid step.  Enforces M = Nb*H*W % 8 == 0 (or
    falls back to the full batch, which is always a legal full-dim block),
    targets M ~ 1024, and keeps >= 2 grid steps when possible (v7x: 2 TCs)."""
    HW = H * W
    cands = [nb for nb in range(1, N + 1)
             if N % nb == 0 and (nb * HW) % 8 == 0]
    if not cands:
        return N
    target = 1024
    multi = [nb for nb in cands if N // nb >= 2 and nb * HW >= 128]
    pool = multi if multi else cands
    return min(pool, key=lambda nb: abs(nb * HW - target))


def _vmem_limit_bytes():
    # v5e/v6e: 128 MiB physical, v7x: 64 MiB.  Use ~3/4 of it, capped.
    try:
        cap = int(pltpu.get_tpu_info().vmem_capacity_bytes)
    except Exception:
        cap = 64 * 1024 * 1024
    return int(max(32 * 1024 * 1024, min(cap * 3 // 4, 96 * 1024 * 1024)))


def basic_block_forward_nhwc(x_nhwc, params, stride=1, act_dtype=jnp.bfloat16,
                             block_n=None):
    """NHWC entry point (use this between chained blocks: no pad / transpose
    HBM passes). Returns NHWC in act_dtype."""
    assert stride == 1, "only stride=1 implemented"
    N, H, W, Cin = x_nhwc.shape
    C = params["w1"].shape[-1]
    use_projection = "wsc" in params
    if not use_projection:
        assert Cin == C, "identity shortcut requires in_planes == planes"

    Nb = _pick_block_n(N, H, W) if block_n is None else block_n
    assert N % Nb == 0
    M = Nb * H * W

    fp = _fold_and_pack(params, act_dtype)
    x = x_nhwc.astype(act_dtype)

    kernel = _make_basic_block_kernel(Nb, H, W, Cin, C, use_projection, act_dtype)

    def build(single_buffer_consts):
        def const_spec(shape):
            zeros = (0,) * len(shape)
            kwargs = {}
            if single_buffer_consts:
                # Constants index block 0 every step -> no need to double-buffer.
                kwargs["pipeline_mode"] = pl.Buffered(buffer_count=1)
            return pl.BlockSpec(shape, lambda n, _z=zeros: _z, **kwargs)

        in_specs = [
            pl.BlockSpec((Nb, H, W, Cin), lambda n: (n, 0, 0, 0)),   # x block
            const_spec((3, 3 * Cin, C)), const_spec((1, C)),         # w1', b1
            const_spec((3, 3 * C, C)), const_spec((1, C)),           # w2', b2
        ]
        if use_projection:
            in_specs += [const_spec((Cin, C)), const_spec((1, C))]   # wsc', bsc

        # Output as a 2D (N*H*W, C) slab: one aligned block store per step.
        return pl.pallas_call(
            kernel,
            out_shape=jax.ShapeDtypeStruct((N * H * W, C), act_dtype),
            grid=(N // Nb,),
            in_specs=in_specs,
            out_specs=pl.BlockSpec((M, C), lambda n: (n, 0)),
            compiler_params=pltpu.CompilerParams(
                dimension_semantics=("parallel",),
                vmem_limit_bytes=_vmem_limit_bytes(),
            ),
        )

    args = [x, fp["w1"], fp["b1"], fp["w2"], fp["b2"]]
    if use_projection:
        args += [fp["wsc"], fp["bsc"]]

    try:
        out2d = build(True)(*args)
    except Exception:
        # This JAX version does not accept pipeline_mode=pl.Buffered(1);
        # fall back to default (double-buffered) constants.
        out2d = build(False)(*args)

    return out2d.reshape(N, H, W, C)


def basic_block_forward(x_nchw, params, stride=1, act_dtype=jnp.bfloat16,
                        block_n=None):
    """PyTorch-style NCHW wrapper around the NHWC kernel path."""
    x = jnp.transpose(x_nchw, (0, 2, 3, 1))
    out = basic_block_forward_nhwc(x, params, stride, act_dtype, block_n)
    return jnp.transpose(out, (0, 3, 1, 2))


def init_params(key, in_planes, planes, stride=1):
    """Deterministic synthetic parameters.  Conv weights generated in PyTorch
    OIHW layout then converted to HWIO.  BN folded to scale/bias (eval mode)."""
    eps = 1e-5
    ks = jax.random.split(key, 16)

    def conv_w(k, cout, cin, kh, kw):
        w_oihw = 0.1 * jax.random.normal(k, (cout, cin, kh, kw), jnp.float32)
        return jnp.transpose(w_oihw, (2, 3, 1, 0))  # HWIO

    def bn(kg, kb, km, kv, c):
        gamma = 1.0 + 0.1 * jax.random.normal(kg, (c,), jnp.float32)
        beta = 0.1 * jax.random.normal(kb, (c,), jnp.float32)
        mean = 0.1 * jax.random.normal(km, (c,), jnp.float32)
        var = 1.0 + 0.1 * jax.random.uniform(kv, (c,), jnp.float32)
        scale = gamma / jnp.sqrt(var + eps)
        bias = beta - mean * scale
        return scale.reshape(1, c), bias.reshape(1, c)

    p = {}
    p["w1"] = conv_w(ks[0], planes, in_planes, 3, 3)
    p["s1"], p["b1"] = bn(ks[1], ks[2], ks[3], ks[4], planes)
    p["w2"] = conv_w(ks[5], planes, planes, 3, 3)
    p["s2"], p["b2"] = bn(ks[6], ks[7], ks[8], ks[9], planes)
    if stride != 1 or in_planes != planes:
        p["wsc"] = conv_w(ks[10], planes, in_planes, 1, 1)[0, 0]  # (Cin, C)
        p["ssc"], p["bsc"] = bn(ks[11], ks[12], ks[13], ks[14], planes)
    return p


def ref_basic_block(x_nchw, params, act_dtype=jnp.bfloat16):
    """Pure-JAX reference (lax convolutions) with the same bf16-in / f32-accum
    precision choices as the kernel.  Returns NCHW float32."""
    C = params["w1"].shape[-1]
    w1 = (params["w1"] * params["s1"].reshape(1, 1, 1, C)).astype(act_dtype)
    w2 = (params["w2"] * params["s2"].reshape(1, 1, 1, C)).astype(act_dtype)
    x = jnp.transpose(x_nchw, (0, 2, 3, 1)).astype(act_dtype)
    dn = ('NHWC', 'HWIO', 'NHWC')

    def conv(v, w):
        return lax.conv_general_dilated(v, w, (1, 1), 'SAME',
                                        dimension_numbers=dn,
                                        preferred_element_type=jnp.float32)

    h1 = jnp.maximum(conv(x, w1) + params["b1"], 0.0).astype(act_dtype)
    o = conv(h1, w2) + params["b2"]
    if "wsc" in params:
        wsc = (params["wsc"] * params["ssc"].reshape(1, C)).astype(act_dtype)
        sc = conv(x, wsc.reshape(1, 1, *wsc.shape)) + params["bsc"]
    else:
        sc = x.astype(jnp.float32)
    out = jnp.maximum(o + sc, 0.0)
    return jnp.transpose(out, (0, 3, 1, 2))


if __name__ == "__main__":
    key = jax.random.PRNGKey(0)
    kx1, kx2, kp1, kp2 = jax.random.split(key, 4)

    # Case 1: projection shortcut (in_planes=4 != planes=8), stride=1, 16x16.
    x1 = jax.random.normal(kx1, (2, 4, 16, 16), jnp.float32)
    p1 = init_params(kp1, 4, 8)
    y1 = jax.block_until_ready(basic_block_forward(x1, p1))
    r1 = ref_basic_block(x1, p1)
    err1 = float(jnp.max(jnp.abs(y1.astype(jnp.float32) - r1)))
    assert jnp.allclose(y1.astype(jnp.float32), r1, atol=5e-2, rtol=5e-2), err1

    # Case 2: identity shortcut (in_planes == planes == 8), stride=1, 8x8.
    x2 = jax.random.normal(kx2, (2, 8, 8, 8), jnp.float32)
    p2 = init_params(kp2, 8, 8)
    y2 = jax.block_until_ready(basic_block_forward(x2, p2))
    r2 = ref_basic_block(x2, p2)
    err2 = float(jnp.max(jnp.abs(y2.astype(jnp.float32) - r2)))
    assert jnp.allclose(y2.astype(jnp.float32), r2, atol=5e-2, rtol=5e-2), err2

    print("KERNEL_OK")
</pallas_src>

<mosaic_0001>
module attributes {stable_mosaic.version = 11 : i64} {
  func.func @kernel(%arg0: i32, %arg1: memref<1x16x16x4xbf16, #tpu.memory_space<vmem>>, %arg2: memref<3x12x8xbf16, #tpu.memory_space<vmem>>, %arg3: memref<1x8xf32, #tpu.memory_space<vmem>>, %arg4: memref<3x24x8xbf16, #tpu.memory_space<vmem>>, %arg5: memref<1x8xf32, #tpu.memory_space<vmem>>, %arg6: memref<4x8xbf16, #tpu.memory_space<vmem>>, %arg7: memref<1x8xf32, #tpu.memory_space<vmem>>, %arg8: memref<256x8xbf16, #tpu.memory_space<vmem>>) attributes {dimension_semantics = [#tpu.dimension_semantics<parallel>], iteration_bounds = array<i64: 2>, scalar_prefetch = 0 : i64, scratch_operands = 0 : i64, tpu.core_type = #tpu.core_type<tc>, window_params = [{transform_indices = @transform_0, window_bounds = array<i64: 1, 16, 16, 4>}, {pipeline_mode = #tpu.pipeline_mode<synchronous>, transform_indices = @transform_1, window_bounds = array<i64: 3, 12, 8>}, {pipeline_mode = #tpu.pipeline_mode<synchronous>, transform_indices = @transform_2, window_bounds = array<i64: 1, 8>}, {pipeline_mode = #tpu.pipeline_mode<synchronous>, transform_indices = @transform_3, window_bounds = array<i64: 3, 24, 8>}, {pipeline_mode = #tpu.pipeline_mode<synchronous>, transform_indices = @transform_4, window_bounds = array<i64: 1, 8>}, {pipeline_mode = #tpu.pipeline_mode<synchronous>, transform_indices = @transform_5, window_bounds = array<i64: 4, 8>}, {pipeline_mode = #tpu.pipeline_mode<synchronous>, transform_indices = @transform_6, window_bounds = array<i64: 1, 8>}, {transform_indices = @transform_7, window_bounds = array<i64: 256, 8>}]} {
    %c0 = arith.constant 0 : index
    %c0_0 = arith.constant 0 : index
    %c0_1 = arith.constant 0 : index
    %c0_2 = arith.constant 0 : index
    %0 = vector.load %arg1[%c0, %c0_0, %c0_1, %c0_2] : memref<1x16x16x4xbf16, #tpu.memory_space<vmem>>, vector<1x16x16x4xbf16>
    %cst = arith.constant 0.000000e+00 : bf16
    %1 = vector.broadcast %cst : bf16 to vector<1x16x1x4xbf16>
    %2 = vector.extract_strided_slice %0 {offsets = [0, 0, 0, 0], sizes = [1, 16, 15, 4], strides = [1, 1, 1, 1]} : vector<1x16x16x4xbf16> to vector<1x16x15x4xbf16>
    %3 = tpu.concatenate %1, %2 in 2 : vector<1x16x1x4xbf16>, vector<1x16x15x4xbf16> -> vector<1x16x16x4xbf16>
    %4 = vector.extract_strided_slice %0 {offsets = [0, 0, 1, 0], sizes = [1, 16, 15, 4], strides = [1, 1, 1, 1]} : vector<1x16x16x4xbf16> to vector<1x16x15x4xbf16>
    %5 = tpu.concatenate %4, %1 in 2 : vector<1x16x15x4xbf16>, vector<1x16x1x4xbf16> -> vector<1x16x16x4xbf16>
    %6 = tpu.concatenate %3, %0, %5 in 3 : vector<1x16x16x4xbf16>, vector<1x16x16x4xbf16>, vector<1x16x16x4xbf16> -> vector<1x16x16x12xbf16>
    %cst_3 = arith.constant 0.000000e+00 : bf16
    %7 = vector.broadcast %cst_3 : bf16 to vector<1x1x16x12xbf16>
    %8 = tpu.concatenate %7, %6, %7 in 1 : vector<1x1x16x12xbf16>, vector<1x16x16x12xbf16>, vector<1x1x16x12xbf16> -> vector<1x18x16x12xbf16>
    %9 = vector.extract_strided_slice %8 {offsets = [0, 0, 0, 0], sizes = [1, 16, 16, 12], strides = [1, 1, 1, 1]} : vector<1x18x16x12xbf16> to vector<1x16x16x12xbf16>
    %10 = vector.shape_cast %9 : vector<1x16x16x12xbf16> to vector<256x12xbf16>
    %c0_4 = arith.constant 0 : index
    %c0_5 = arith.constant 0 : index
    %c0_6 = arith.constant 0 : index
    %11 = vector.load %arg2[%c0_4, %c0_5, %c0_6] : memref<3x12x8xbf16, #tpu.memory_space<vmem>>, vector<1x12x8xbf16>
    %12 = vector.shape_cast %11 : vector<1x12x8xbf16> to vector<12x8xbf16>
    %cst_7 = arith.constant dense<0.000000e+00> : vector<256x8xf32>
    %13 = tpu.matmul %10, %12, %cst_7 {dimension_numbers = #tpu.dot_dimension_numbers<[1], [0], [0], [1], [0, 0, 1, 1], [], []>} : vector<256x12xbf16>, vector<12x8xbf16>, vector<256x8xf32> -> vector<256x8xf32>
    %14 = vector.extract_strided_slice %8 {offsets = [0, 1, 0, 0], sizes = [1, 16, 16, 12], strides = [1, 1, 1, 1]} : vector<1x18x16x12xbf16> to vector<1x16x16x12xbf16>
    %15 = vector.shape_cast %14 : vector<1x16x16x12xbf16> to vector<256x12xbf16>
    %c1 = arith.constant 1 : index
    %c0_8 = arith.constant 0 : index
    %c0_9 = arith.constant 0 : index
    %16 = vector.load %arg2[%c1, %c0_8, %c0_9] : memref<3x12x8xbf16, #tpu.memory_space<vmem>>, vector<1x12x8xbf16>
    %17 = vector.shape_cast %16 : vector<1x12x8xbf16> to vector<12x8xbf16>
    %cst_10 = arith.constant dense<0.000000e+00> : vector<256x8xf32>
    %18 = tpu.matmul %15, %17, %cst_10 {dimension_numbers = #tpu.dot_dimension_numbers<[1], [0], [0], [1], [0, 0, 1, 1], [], []>} : vector<256x12xbf16>, vector<12x8xbf16>, vector<256x8xf32> -> vector<256x8xf32>
    %19 = arith.addf %13, %18 : vector<256x8xf32>
    %20 = vector.extract_strided_slice %8 {offsets = [0, 2, 0, 0], sizes = [1, 16, 16, 12], strides = [1, 1, 1, 1]} : vector<1x18x16x12xbf16> to vector<1x16x16x12xbf16>
    %21 = vector.shape_cast %20 : vector<1x16x16x12xbf16> to vector<256x12xbf16>
    %c2 = arith.constant 2 : index
    %c0_11 = arith.constant 0 : index
    %c0_12 = arith.constant 0 : index
    %22 = vector.load %arg2[%c2, %c0_11, %c0_12] : memref<3x12x8xbf16, #tpu.memory_space<vmem>>, vector<1x12x8xbf16>
    %23 = vector.shape_cast %22 : vector<1x12x8xbf16> to vector<12x8xbf16>
    %cst_13 = arith.constant dense<0.000000e+00> : vector<256x8xf32>
    %24 = tpu.matmul %21, %23, %cst_13 {dimension_numbers = #tpu.dot_dimension_numbers<[1], [0], [0], [1], [0, 0, 1, 1], [], []>} : vector<256x12xbf16>, vector<12x8xbf16>, vector<256x8xf32> -> vector<256x8xf32>
    %25 = arith.addf %19, %24 : vector<256x8xf32>
    %c0_14 = arith.constant 0 : index
    %c0_15 = arith.constant 0 : index
    %26 = vector.load %arg3[%c0_14, %c0_15] : memref<1x8xf32, #tpu.memory_space<vmem>>, vector<1x8xf32>
    %27 = vector.broadcast %26 : vector<1x8xf32> to vector<256x8xf32>
    %28 = arith.addf %25, %27 : vector<256x8xf32>
    %cst_16 = arith.constant 0.000000e+00 : f32
    %29 = vector.broadcast %cst_16 : f32 to vector<256x8xf32>
    %30 = arith.maximumf %28, %29 : vector<256x8xf32>
    %31 = arith.truncf %30 : vector<256x8xf32> to vector<256x8xbf16>
    %32 = vector.shape_cast %31 : vector<256x8xbf16> to vector<1x16x16x8xbf16>
    %33 = vector.shape_cast %0 : vector<1x16x16x4xbf16> to vector<256x4xbf16>
    %c0_17 = arith.constant 0 : index
    %c0_18 = arith.constant 0 : index
    %34 = vector.load %arg6[%c0_17, %c0_18] : memref<4x8xbf16, #tpu.memory_space<vmem>>, vector<4x8xbf16>
    %cst_19 = arith.constant dense<0.000000e+00> : vector<256x8xf32>
    %35 = tpu.matmul %33, %34, %cst_19 {dimension_numbers = #tpu.dot_dimension_numbers<[1], [0], [0], [1], [0, 0, 1, 1], [], []>} : vector<256x4xbf16>, vector<4x8xbf16>, vector<256x8xf32> -> vector<256x8xf32>
    %c0_20 = arith.constant 0 : index
    %c0_21 = arith.constant 0 : index
    %36 = vector.load %arg7[%c0_20, %c0_21] : memref<1x8xf32, #tpu.memory_space<vmem>>, vector<1x8xf32>
    %37 = vector.broadcast %36 : vector<1x8xf32> to vector<256x8xf32>
    %38 = arith.addf %35, %37 : vector<256x8xf32>
    %c0_22 = arith.constant 0 : index
    %c0_23 = arith.constant 0 : index
    %39 = vector.load %arg5[%c0_22, %c0_23] : memref<1x8xf32, #tpu.memory_space<vmem>>, vector<1x8xf32>
    %40 = vector.broadcast %39 : vector<1x8xf32> to vector<256x8xf32>
    %41 = arith.addf %38, %40 : vector<256x8xf32>
    %cst_24 = arith.constant 0.000000e+00 : bf16
    %42 = vector.broadcast %cst_24 : bf16 to vector<1x16x1x8xbf16>
    %43 = vector.extract_strided_slice %32 {offsets = [0, 0, 0, 0], sizes = [1, 16, 15, 8], strides = [1, 1, 1, 1]} : vector<1x16x16x8xbf16> to vector<1x16x15x8xbf16>
    %44 = tpu.concatenate %42, %43 in 2 : vector<1x16x1x8xbf16>, vector<1x16x15x8xbf16> -> vector<1x16x16x8xbf16>
    %45 = vector.extract_strided_slice %32 {offsets = [0, 0, 1, 0], sizes = [1, 16, 15, 8], strides = [1, 1, 1, 1]} : vector<1x16x16x8xbf16> to vector<1x16x15x8xbf16>
    %46 = tpu.concatenate %45, %42 in 2 : vector<1x16x15x8xbf16>, vector<1x16x1x8xbf16> -> vector<1x16x16x8xbf16>
    %47 = tpu.concatenate %44, %32, %46 in 3 : vector<1x16x16x8xbf16>, vector<1x16x16x8xbf16>, vector<1x16x16x8xbf16> -> vector<1x16x16x24xbf16>
    %cst_25 = arith.constant 0.000000e+00 : bf16
    %48 = vector.broadcast %cst_25 : bf16 to vector<1x1x16x24xbf16>
    %49 = tpu.concatenate %48, %47, %48 in 1 : vector<1x1x16x24xbf16>, vector<1x16x16x24xbf16>, vector<1x1x16x24xbf16> -> vector<1x18x16x24xbf16>
    %50 = vector.extract_strided_slice %49 {offsets = [0, 0, 0, 0], sizes = [1, 16, 16, 24], strides = [1, 1, 1, 1]} : vector<1x18x16x24xbf16> to vector<1x16x16x24xbf16>
    %51 = vector.shape_cast %50 : vector<1x16x16x24xbf16> to vector<256x24xbf16>
    %c0_26 = arith.constant 0 : index
    %c0_27 = arith.constant 0 : index
    %c0_28 = arith.constant 0 : index
    %52 = vector.load %arg4[%c0_26, %c0_27, %c0_28] : memref<3x24x8xbf16, #tpu.memory_space<vmem>>, vector<1x24x8xbf16>
    %53 = vector.shape_cast %52 : vector<1x24x8xbf16> to vector<24x8xbf16>
    %cst_29 = arith.constant dense<0.000000e+00> : vector<256x8xf32>
    %54 = tpu.matmul %51, %53, %cst_29 {dimension_numbers = #tpu.dot_dimension_numbers<[1], [0], [0], [1], [0, 0, 1, 1], [], []>} : vector<256x24xbf16>, vector<24x8xbf16>, vector<256x8xf32> -> vector<256x8xf32>
    %55 = arith.addf %41, %54 : vector<256x8xf32>
    %56 = vector.extract_strided_slice %49 {offsets = [0, 1, 0, 0], sizes = [1, 16, 16, 24], strides = [1, 1, 1, 1]} : vector<1x18x16x24xbf16> to vector<1x16x16x24xbf16>
    %57 = vector.shape_cast %56 : vector<1x16x16x24xbf16> to vector<256x24xbf16>
    %c1_30 = arith.constant 1 : index
    %c0_31 = arith.constant 0 : index
    %c0_32 = arith.constant 0 : index
    %58 = vector.load %arg4[%c1_30, %c0_31, %c0_32] : memref<3x24x8xbf16, #tpu.memory_space<vmem>>, vector<1x24x8xbf16>
    %59 = vector.shape_cast %58 : vector<1x24x8xbf16> to vector<24x8xbf16>
    %cst_33 = arith.constant dense<0.000000e+00> : vector<256x8xf32>
    %60 = tpu.matmul %57, %59, %cst_33 {dimension_numbers = #tpu.dot_dimension_numbers<[1], [0], [0], [1], [0, 0, 1, 1], [], []>} : vector<256x24xbf16>, vector<24x8xbf16>, vector<256x8xf32> -> vector<256x8xf32>
    %61 = arith.addf %55, %60 : vector<256x8xf32>
    %62 = vector.extract_strided_slice %49 {offsets = [0, 2, 0, 0], sizes = [1, 16, 16, 24], strides = [1, 1, 1, 1]} : vector<1x18x16x24xbf16> to vector<1x16x16x24xbf16>
    %63 = vector.shape_cast %62 : vector<1x16x16x24xbf16> to vector<256x24xbf16>
    %c2_34 = arith.constant 2 : index
    %c0_35 = arith.constant 0 : index
    %c0_36 = arith.constant 0 : index
    %64 = vector.load %arg4[%c2_34, %c0_35, %c0_36] : memref<3x24x8xbf16, #tpu.memory_space<vmem>>, vector<1x24x8xbf16>
    %65 = vector.shape_cast %64 : vector<1x24x8xbf16> to vector<24x8xbf16>
    %cst_37 = arith.constant dense<0.000000e+00> : vector<256x8xf32>
    %66 = tpu.matmul %63, %65, %cst_37 {dimension_numbers = #tpu.dot_dimension_numbers<[1], [0], [0], [1], [0, 0, 1, 1], [], []>} : vector<256x24xbf16>, vector<24x8xbf16>, vector<256x8xf32> -> vector<256x8xf32>
    %67 = arith.addf %61, %66 : vector<256x8xf32>
    %cst_38 = arith.constant 0.000000e+00 : f32
    %68 = vector.broadcast %cst_38 : f32 to vector<256x8xf32>
    %69 = arith.maximumf %67, %68 : vector<256x8xf32>
    %70 = arith.truncf %69 : vector<256x8xf32> to vector<256x8xbf16>
    %c0_39 = arith.constant 0 : index
    %c0_40 = arith.constant 0 : index
    %71 = vector.load %arg8[%c0_39, %c0_40] : memref<256x8xbf16, #tpu.memory_space<vmem>>, vector<256x8xbf16>
    tpu.vector_store %arg8[%c0_39, %c0_40], %70 {strides = array<i32>} : memref<256x8xbf16, #tpu.memory_space<vmem>>, vector<256x8xbf16>,
    return
  }
  func.func @transform_0(%arg0: i32) -> (i32, i32, i32, i32) {
    %c0_i32 = arith.constant 0 : i32
    %c0_i32_0 = arith.constant 0 : i32
    %c0_i32_1 = arith.constant 0 : i32
    %c0_i32_2 = arith.constant 0 : i32
    return %arg0, %c0_i32, %c0_i32_0, %c0_i32_1 : i32, i32, i32, i32
  }
  func.func @transform_1(%arg0: i32) -> (i32, i32, i32) {
    %c0_i32 = arith.constant 0 : i32
    %c0_i32_0 = arith.constant 0 : i32
    %c0_i32_1 = arith.constant 0 : i32
    %c0_i32_2 = arith.constant 0 : i32
    return %c0_i32, %c0_i32_0, %c0_i32_1 : i32, i32, i32
  }
  func.func @transform_2(%arg0: i32) -> (i32, i32) {
    %c0_i32 = arith.constant 0 : i32
    %c0_i32_0 = arith.constant 0 : i32
    %c0_i32_1 = arith.constant 0 : i32
    return %c0_i32, %c0_i32_0 : i32, i32
  }
  func.func @transform_3(%arg0: i32) -> (i32, i32, i32) {
    %c0_i32 = arith.constant 0 : i32
    %c0_i32_0 = arith.constant 0 : i32
    %c0_i32_1 = arith.constant 0 : i32
    %c0_i32_2 = arith.constant 0 : i32
    return %c0_i32, %c0_i32_0, %c0_i32_1 : i32, i32, i32
  }
  func.func @transform_4(%arg0: i32) -> (i32, i32) {
    %c0_i32 = arith.constant 0 : i32
    %c0_i32_0 = arith.constant 0 : i32
    %c0_i32_1 = arith.constant 0 : i32
    return %c0_i32, %c0_i32_0 : i32, i32
  }
  func.func @transform_5(%arg0: i32) -> (i32, i32) {
    %c0_i32 = arith.constant 0 : i32
    %c0_i32_0 = arith.constant 0 : i32
    %c0_i32_1 = arith.constant 0 : i32
    return %c0_i32, %c0_i32_0 : i32, i32
  }
  func.func @transform_6(%arg0: i32) -> (i32, i32) {
    %c0_i32 = arith.constant 0 : i32
    %c0_i32_0 = arith.constant 0 : i32
    %c0_i32_1 = arith.constant 0 : i32
    return %c0_i32, %c0_i32_0 : i32, i32
  }
  func.func @transform_7(%arg0: i32) -> (i32, i32) {
    %c0_i32 = arith.constant 0 : i32
    %c0_i32_0 = arith.constant 0 : i32
    return %arg0, %c0_i32 : i32, i32
  }
}

module attributes {stable_mosaic.version = 11 : i64} {
  func.func @kernel(%arg0: i32, %arg1: memref<1x16x16x4xbf16, #tpu.memory_space<vmem>>, %arg2: memref<3x12x8xbf16, #tpu.memory_space<vmem>>, %arg3: memref<1x8xf32, #tpu.memory_space<vmem>>, %arg4: memref<3x24x8xbf16, #tpu.memory_space<vmem>>, %arg5: memref<1x8xf32, #tpu.memory_space<vmem>>, %arg6: memref<4x8xbf16, #tpu.memory_space<vmem>>, %arg7: memref<1x8xf32, #tpu.memory_space<vmem>>, %arg8: memref<256x8xbf16, #tpu.memory_space<vmem>>) attributes {dimension_semantics = [#tpu.dimension_semantics<parallel>], iteration_bounds = array<i64: 2>, scalar_prefetch = 0 : i64, scratch_operands = 0 : i64, tpu.core_type = #tpu.core_type<tc>, window_params = [{transform_indices = @transform_0, window_bounds = array<i64: 1, 16, 16, 4>}, {pipeline_mode = #tpu.pipeline_mode<synchronous>, transform_indices = @transform_1, window_bounds = array<i64: 3, 12, 8>}, {pipeline_mode = #tpu.pipeline_mode<synchronous>, transform_indices = @transform_2, window_bounds = array<i64: 1, 8>}, {pipeline_mode = #tpu.pipeline_mode<synchronous>, transform_indices = @transform_3, window_bounds = array<i64: 3, 24, 8>}, {pipeline_mode = #tpu.pipeline_mode<synchronous>, transform_indices = @transform_4, window_bounds = array<i64: 1, 8>}, {pipeline_mode = #tpu.pipeline_mode<synchronous>, transform_indices = @transform_5, window_bounds = array<i64: 4, 8>}, {pipeline_mode = #tpu.pipeline_mode<synchronous>, transform_indices = @transform_6, window_bounds = array<i64: 1, 8>}, {transform_indices = @transform_7, window_bounds = array<i64: 256, 8>}]} {
    %c0 = arith.constant 0 : index
    %c0_0 = arith.constant 0 : index
    %c0_1 = arith.constant 0 : index
    %c0_2 = arith.constant 0 : index
    %0 = vector.load %arg1[%c0, %c0_0, %c0_1, %c0_2] : memref<1x16x16x4xbf16, #tpu.memory_space<vmem>>, vector<1x16x16x4xbf16>
    %cst = arith.constant 0.000000e+00 : bf16
    %1 = vector.broadcast %cst : bf16 to vector<1x16x1x4xbf16>
    %2 = vector.extract_strided_slice %0 {offsets = [0, 0, 0, 0], sizes = [1, 16, 15, 4], strides = [1, 1, 1, 1]} : vector<1x16x16x4xbf16> to vector<1x16x15x4xbf16>
    %3 = tpu.concatenate %1, %2 in 2 : vector<1x16x1x4xbf16>, vector<1x16x15x4xbf16> -> vector<1x16x16x4xbf16>
    %4 = vector.extract_strided_slice %0 {offsets = [0, 0, 1, 0], sizes = [1, 16, 15, 4], strides = [1, 1, 1, 1]} : vector<1x16x16x4xbf16> to vector<1x16x15x4xbf16>
    %5 = tpu.concatenate %4, %1 in 2 : vector<1x16x15x4xbf16>, vector<1x16x1x4xbf16> -> vector<1x16x16x4xbf16>
    %6 = tpu.concatenate %3, %0, %5 in 3 : vector<1x16x16x4xbf16>, vector<1x16x16x4xbf16>, vector<1x16x16x4xbf16> -> vector<1x16x16x12xbf16>
    %cst_3 = arith.constant 0.000000e+00 : bf16
    %7 = vector.broadcast %cst_3 : bf16 to vector<1x1x16x12xbf16>
    %8 = tpu.concatenate %7, %6, %7 in 1 : vector<1x1x16x12xbf16>, vector<1x16x16x12xbf16>, vector<1x1x16x12xbf16> -> vector<1x18x16x12xbf16>
    %9 = vector.extract_strided_slice %8 {offsets = [0, 0, 0, 0], sizes = [1, 16, 16, 12], strides = [1, 1, 1, 1]} : vector<1x18x16x12xbf16> to vector<1x16x16x12xbf16>
    %10 = vector.shape_cast %9 : vector<1x16x16x12xbf16> to vector<256x12xbf16>
    %c0_4 = arith.constant 0 : index
    %c0_5 = arith.constant 0 : index
    %c0_6 = arith.constant 0 : index
    %11 = vector.load %arg2[%c0_4, %c0_5, %c0_6] : memref<3x12x8xbf16, #tpu.memory_space<vmem>>, vector<1x12x8xbf16>
    %12 = vector.shape_cast %11 : vector<1x12x8xbf16> to vector<12x8xbf16>
    %cst_7 = arith.constant dense<0.000000e+00> : vector<256x8xf32>
    %13 = tpu.matmul %10, %12, %cst_7 {dimension_numbers = #tpu.dot_dimension_numbers<[1], [0], [0], [1], [0, 0, 1, 1], [], []>} : vector<256x12xbf16>, vector<12x8xbf16>, vector<256x8xf32> -> vector<256x8xf32>
    %14 = vector.extract_strided_slice %8 {offsets = [0, 1, 0, 0], sizes = [1, 16, 16, 12], strides = [1, 1, 1, 1]} : vector<1x18x16x12xbf16> to vector<1x16x16x12xbf16>
    %15 = vector.shape_cast %14 : vector<1x16x16x12xbf16> to vector<256x12xbf16>
    %c1 = arith.constant 1 : index
    %c0_8 = arith.constant 0 : index
    %c0_9 = arith.constant 0 : index
    %16 = vector.load %arg2[%c1, %c0_8, %c0_9] : memref<3x12x8xbf16, #tpu.memory_space<vmem>>, vector<1x12x8xbf16>
    %17 = vector.shape_cast %16 : vector<1x12x8xbf16> to vector<12x8xbf16>
    %cst_10 = arith.constant dense<0.000000e+00> : vector<256x8xf32>
    %18 = tpu.matmul %15, %17, %cst_10 {dimension_numbers = #tpu.dot_dimension_numbers<[1], [0], [0], [1], [0, 0, 1, 1], [], []>} : vector<256x12xbf16>, vector<12x8xbf16>, vector<256x8xf32> -> vector<256x8xf32>
    %19 = arith.addf %13, %18 : vector<256x8xf32>
    %20 = vector.extract_strided_slice %8 {offsets = [0, 2, 0, 0], sizes = [1, 16, 16, 12], strides = [1, 1, 1, 1]} : vector<1x18x16x12xbf16> to vector<1x16x16x12xbf16>
    %21 = vector.shape_cast %20 : vector<1x16x16x12xbf16> to vector<256x12xbf16>
    %c2 = arith.constant 2 : index
    %c0_11 = arith.constant 0 : index
    %c0_12 = arith.constant 0 : index
    %22 = vector.load %arg2[%c2, %c0_11, %c0_12] : memref<3x12x8xbf16, #tpu.memory_space<vmem>>, vector<1x12x8xbf16>
    %23 = vector.shape_cast %22 : vector<1x12x8xbf16> to vector<12x8xbf16>
    %cst_13 = arith.constant dense<0.000000e+00> : vector<256x8xf32>
    %24 = tpu.matmul %21, %23, %cst_13 {dimension_numbers = #tpu.dot_dimension_numbers<[1], [0], [0], [1], [0, 0, 1, 1], [], []>} : vector<256x12xbf16>, vector<12x8xbf16>, vector<256x8xf32> -> vector<256x8xf32>
    %25 = arith.addf %19, %24 : vector<256x8xf32>
    %c0_14 = arith.constant 0 : index
    %c0_15 = arith.constant 0 : index
    %26 = vector.load %arg3[%c0_14, %c0_15] : memref<1x8xf32, #tpu.memory_space<vmem>>, vector<1x8xf32>
    %27 = vector.broadcast %26 : vector<1x8xf32> to vector<256x8xf32>
    %28 = arith.addf %25, %27 : vector<256x8xf32>
    %cst_16 = arith.constant 0.000000e+00 : f32
    %29 = vector.broadcast %cst_16 : f32 to vector<256x8xf32>
    %30 = arith.maximumf %28, %29 : vector<256x8xf32>
    %31 = arith.truncf %30 : vector<256x8xf32> to vector<256x8xbf16>
    %32 = vector.shape_cast %31 : vector<256x8xbf16> to vector<1x16x16x8xbf16>
    %33 = vector.shape_cast %0 : vector<1x16x16x4xbf16> to vector<256x4xbf16>
    %c0_17 = arith.constant 0 : index
    %c0_18 = arith.constant 0 : index
    %34 = vector.load %arg6[%c0_17, %c0_18] : memref<4x8xbf16, #tpu.memory_space<vmem>>, vector<4x8xbf16>
    %cst_19 = arith.constant dense<0.000000e+00> : vector<256x8xf32>
    %35 = tpu.matmul %33, %34, %cst_19 {dimension_numbers = #tpu.dot_dimension_numbers<[1], [0], [0], [1], [0, 0, 1, 1], [], []>} : vector<256x4xbf16>, vector<4x8xbf16>, vector<256x8xf32> -> vector<256x8xf32>
    %c0_20 = arith.constant 0 : index
    %c0_21 = arith.constant 0 : index
    %36 = vector.load %arg7[%c0_20, %c0_21] : memref<1x8xf32, #tpu.memory_space<vmem>>, vector<1x8xf32>
    %37 = vector.broadcast %36 : vector<1x8xf32> to vector<256x8xf32>
    %38 = arith.addf %35, %37 : vector<256x8xf32>
    %c0_22 = arith.constant 0 : index
    %c0_23 = arith.constant 0 : index
    %39 = vector.load %arg5[%c0_22, %c0_23] : memref<1x8xf32, #tpu.memory_space<vmem>>, vector<1x8xf32>
    %40 = vector.broadcast %39 : vector<1x8xf32> to vector<256x8xf32>
    %41 = arith.addf %38, %40 : vector<256x8xf32>
    %cst_24 = arith.constant 0.000000e+00 : bf16
    %42 = vector.broadcast %cst_24 : bf16 to vector<1x16x1x8xbf16>
    %43 = vector.extract_strided_slice %32 {offsets = [0, 0, 0, 0], sizes = [1, 16, 15, 8], strides = [1, 1, 1, 1]} : vector<1x16x16x8xbf16> to vector<1x16x15x8xbf16>
    %44 = tpu.concatenate %42, %43 in 2 : vector<1x16x1x8xbf16>, vector<1x16x15x8xbf16> -> vector<1x16x16x8xbf16>
    %45 = vector.extract_strided_slice %32 {offsets = [0, 0, 1, 0], sizes = [1, 16, 15, 8], strides = [1, 1, 1, 1]} : vector<1x16x16x8xbf16> to vector<1x16x15x8xbf16>
    %46 = tpu.concatenate %45, %42 in 2 : vector<1x16x15x8xbf16>, vector<1x16x1x8xbf16> -> vector<1x16x16x8xbf16>
    %47 = tpu.concatenate %44, %32, %46 in 3 : vector<1x16x16x8xbf16>, vector<1x16x16x8xbf16>, vector<1x16x16x8xbf16> -> vector<1x16x16x24xbf16>
    %cst_25 = arith.constant 0.000000e+00 : bf16
    %48 = vector.broadcast %cst_25 : bf16 to vector<1x1x16x24xbf16>
    %49 = tpu.concatenate %48, %47, %48 in 1 : vector<1x1x16x24xbf16>, vector<1x16x16x24xbf16>, vector<1x1x16x24xbf16> -> vector<1x18x16x24xbf16>
    %50 = vector.extract_strided_slice %49 {offsets = [0, 0, 0, 0], sizes = [1, 16, 16, 24], strides = [1, 1, 1, 1]} : vector<1x18x16x24xbf16> to vector<1x16x16x24xbf16>
    %51 = vector.shape_cast %50 : vector<1x16x16x24xbf16> to vector<256x24xbf16>
    %c0_26 = arith.constant 0 : index
    %c0_27 = arith.constant 0 : index
    %c0_28 = arith.constant 0 : index
    %52 = vector.load %arg4[%c0_26, %c0_27, %c0_28] : memref<3x24x8xbf16, #tpu.memory_space<vmem>>, vector<1x24x8xbf16>
    %53 = vector.shape_cast %52 : vector<1x24x8xbf16> to vector<24x8xbf16>
    %cst_29 = arith.constant dense<0.000000e+00> : vector<256x8xf32>
    %54 = tpu.matmul %51, %53, %cst_29 {dimension_numbers = #tpu.dot_dimension_numbers<[1], [0], [0], [1], [0, 0, 1, 1], [], []>} : vector<256x24xbf16>, vector<24x8xbf16>, vector<256x8xf32> -> vector<256x8xf32>
    %55 = arith.addf %41, %54 : vector<256x8xf32>
    %56 = vector.extract_strided_slice %49 {offsets = [0, 1, 0, 0], sizes = [1, 16, 16, 24], strides = [1, 1, 1, 1]} : vector<1x18x16x24xbf16> to vector<1x16x16x24xbf16>
    %57 = vector.shape_cast %56 : vector<1x16x16x24xbf16> to vector<256x24xbf16>
    %c1_30 = arith.constant 1 : index
    %c0_31 = arith.constant 0 : index
    %c0_32 = arith.constant 0 : index
    %58 = vector.load %arg4[%c1_30, %c0_31, %c0_32] : memref<3x24x8xbf16, #tpu.memory_space<vmem>>, vector<1x24x8xbf16>
    %59 = vector.shape_cast %58 : vector<1x24x8xbf16> to vector<24x8xbf16>
    %cst_33 = arith.constant dense<0.000000e+00> : vector<256x8xf32>
    %60 = tpu.matmul %57, %59, %cst_33 {dimension_numbers = #tpu.dot_dimension_numbers<[1], [0], [0], [1], [0, 0, 1, 1], [], []>} : vector<256x24xbf16>, vector<24x8xbf16>, vector<256x8xf32> -> vector<256x8xf32>
    %61 = arith.addf %55, %60 : vector<256x8xf32>
    %62 = vector.extract_strided_slice %49 {offsets = [0, 2, 0, 0], sizes = [1, 16, 16, 24], strides = [1, 1, 1, 1]} : vector<1x18x16x24xbf16> to vector<1x16x16x24xbf16>
    %63 = vector.shape_cast %62 : vector<1x16x16x24xbf16> to vector<256x24xbf16>
    %c2_34 = arith.constant 2 : index
    %c0_35 = arith.constant 0 : index
    %c0_36 = arith.constant 0 : index
    %64 = vector.load %arg4[%c2_34, %c0_35, %c0_36] : memref<3x24x8xbf16, #tpu.memory_space<vmem>>, vector<1x24x8xbf16>
    %65 = vector.shape_cast %64 : vector<1x24x8xbf16> to vector<24x8xbf16>
    %cst_37 = arith.constant dense<0.000000e+00> : vector<256x8xf32>
    %66 = tpu.matmul %63, %65, %cst_37 {dimension_numbers = #tpu.dot_dimension_numbers<[1], [0], [0], [1], [0, 0, 1, 1], [], []>} : vector<256x24xbf16>, vector<24x8xbf16>, vector<256x8xf32> -> vector<256x8xf32>
    %67 = arith.addf %61, %66 : vector<256x8xf32>
    %cst_38 = arith.constant 0.000000e+00 : f32
    %68 = vector.broadcast %cst_38 : f32 to vector<256x8xf32>
    %69 = arith.maximumf %67, %68 : vector<256x8xf32>
    %70 = arith.truncf %69 : vector<256x8xf32> to vector<256x8xbf16>
    %c0_39 = arith.constant 0 : index
    %c0_40 = arith.constant 0 : index
    %71 = vector.load %arg8[%c0_39, %c0_40] : memref<256x8xbf16, #tpu.memory_space<vmem>>, vector<256x8xbf16>
    tpu.vector_store %arg8[%c0_39, %c0_40], %70 {strides = array<i32>} : memref<256x8xbf16, #tpu.memory_space<vmem>>, vector<256x8xbf16>,
    return
  }
  func.func @transform_0(%arg0: i32) -> (i32, i32, i32, i32) {
    %c0_i32 = arith.constant 0 : i32
    %c0_i32_0 = arith.constant 0 : i32
    %c0_i32_1 = arith.constant 0 : i32
    %c0_i32_2 = arith.constant 0 : i32
    return %arg0, %c0_i32, %c0_i32_0, %c0_i32_1 : i32, i32, i32, i32
  }
  func.func @transform_1(%arg0: i32) -> (i32, i32, i32) {
    %c0_i32 = arith.constant 0 : i32
    %c0_i32_0 = arith.constant 0 : i32
    %c0_i32_1 = arith.constant 0 : i32
    %c0_i32_2 = arith.constant 0 : i32
    return %c0_i32, %c0_i32_0, %c0_i32_1 : i32, i32, i32
  }
  func.func @transform_2(%arg0: i32) -> (i32, i32) {
    %c0_i32 = arith.constant 0 : i32
    %c0_i32_0 = arith.constant 0 : i32
    %c0_i32_1 = arith.constant 0 : i32
    return %c0_i32, %c0_i32_0 : i32, i32
  }
  func.func @transform_3(%arg0: i32) -> (i32, i32, i32) {
    %c0_i32 = arith.constant 0 : i32
    %c0_i32_0 = arith.constant 0 : i32
    %c0_i32_1 = arith.constant 0 : i32
    %c0_i32_2 = arith.constant 0 : i32
    return %c0_i32, %c0_i32_0, %c0_i32_1 : i32, i32, i32
  }
  func.func @transform_4(%arg0: i32) -> (i32, i32) {
    %c0_i32 = arith.constant 0 : i32
    %c0_i32_0 = arith.constant 0 : i32
    %c0_i32_1 = arith.constant 0 : i32
    return %c0_i32, %c0_i32_0 : i32, i32
  }
  func.func @transform_5(%arg0: i32) -> (i32, i32) {
    %c0_i32 = arith.constant 0 : i32
    %c0_i32_0 = arith.constant 0 : i32
    %c0_i32_1 = arith.constant 0 : i32
    return %c0_i32, %c0_i32_0 : i32, i32
  }
  func.func @transform_6(%arg0: i32) -> (i32, i32) {
    %c0_i32 = arith.constant 0 : i32
    %c0_i32_0 = arith.constant 0 : i32
    %c0_i32_1 = arith.constant 0 : i32
    return %c0_i32, %c0_i32_0 : i32, i32
  }
  func.func @transform_7(%arg0: i32) -> (i32, i32) {
    %c0_i32 = arith.constant 0 : i32
    %c0_i32_0 = arith.constant 0 : i32
    return %arg0, %c0_i32 : i32, i32
  }
}

</mosaic_0001>

<llo_original>
// kernel: tpu_custom_call.1
$region0: #{tpu_custom_call.1}
  #allocation0 [shape = 'u32[]', space=smem, size = 0x4, offset = 0x4, fixed_abs, tag = 'smem constant byte address 0x4 - core index']
  #allocation1 [shape = 'u32[144,128]{1,0:T(1,128)}', space=vmem, size = 0x12000, scoped, tag = 'internal scratch']
  %s0 = inlined_call_operand.vmem [shape: bf16[2,16,16,4], index: 0, kind: input, shape index: {}]
  %s1 = inlined_call_operand.vmem [shape: bf16[3,12,8], index: 1, kind: input, shape index: {}]
  %s2 = inlined_call_operand.vmem [shape: f32[1,8], index: 2, kind: input, shape index: {}]
  %s3 = inlined_call_operand.vmem [shape: bf16[3,24,8], index: 3, kind: input, shape index: {}]
  %s4 = inlined_call_operand.vmem [shape: f32[1,8], index: 4, kind: input, shape index: {}]
  %s5 = inlined_call_operand.vmem [shape: bf16[4,8], index: 5, kind: input, shape index: {}]
  %s6 = inlined_call_operand.vmem [shape: f32[1,8], index: 6, kind: input, shape index: {}]
  %s7 = inlined_call_operand.vmem [shape: bf16[512,8], index: 7, kind: output, shape index: {}]
  %s8 = sld [smem:[#allocation0]]
  $region61: #{tpu_custom_call.1} parent=0
    _
  %s10 = ssub.s32 1, %s8
  %s11 = scalar_select 0, %s10, %s8
  loop: start=0, step=1, limit=4
  $region2: #{tpu_custom_call.1} parent=0 // loop_pre_header
    _
  $region3: #{tpu_custom_call.1} parent=0 // loop_header
    %s13 = sphi 0, %s17
    %p14 = scmp.ge.s32.totalorder %s13, 4
    %s23 = sphi 0, %s25
    %s26 = sphi 0, %s23
    %s27 = sphi 0, %s26
    %s43 = sphi 0, %s27
    %s47 = sphi 0, %s47
    %s49 = sphi 0, %s47
    %s50 = sphi 0, %s49
    %s64 = sphi 0, %s50
    %s68 = sphi 0, %s68
    %s70 = sphi 0, %s68
    %s71 = sphi 0, %s70
    %s85 = sphi 0, %s71
    %s89 = sphi 0, %s89
    %s91 = sphi 0, %s89
    %s92 = sphi 0, %s91
    %s106 = sphi 0, %s92
    %s110 = sphi 0, %s110
    %s112 = sphi 0, %s110
    %s113 = sphi 0, %s112
    %s127 = sphi 0, %s113
    %s131 = sphi 0, %s131
    %s133 = sphi 0, %s131
    %s134 = sphi 0, %s133
    %s148 = sphi 0, %s134
    %s152 = sphi 0, %s152
    %s154 = sphi 0, %s152
    %s155 = sphi 0, %s154
    %s169 = sphi 0, %s155
    %s175 = sphi 0, %s177
    %s178 = sphi 0, %s175
    %s179 = sphi 0, %s178
    %s195 = sphi 0, %s179
  $region4: #{tpu_custom_call.1} parent=0 // loop_header_branch
    %16 = sbr.rel (%p14) target = $region8
  $region5: #{tpu_custom_call.1} parent=0 // loop_body
    %s18 = ssub.s32 %s13, 1
    %s19 = ssub.s32 %s13, 2
    %s20 = sadd.s32 %s13, 1
    %s21 = ssub.s32 %s13, %s20
    %p22 = scmp.eq.s32.totalorder %s21, 0
    %s24 = sadd.s32 %s23, 1
    %s25 = scalar_select %p22, %s23, %s24
    %p28 = pneg %p22
    %p29 = scmp.eq.s32.totalorder %s13, 1
    %p30 = por %p28, %p29
    %p31 = scmp.ne.s32.totalorder %s23, %s26
    %p32 = scmp.eq.s32.totalorder %s13, 0
    %p33 = por %p31, %p32
    %p34 = scmp.ne.s32.totalorder %s23, %s26
    %p35 = scmp.eq.s32.totalorder %s18, 1
    %p36 = por %p34, %p35
    %p37 = scmp.ne.s32.totalorder %s26, %s27
    %p38 = scmp.eq.s32.totalorder %s18, 0
    %p39 = por %p37, %p38
    %p40 = scmp.ne.s32.totalorder %s26, %s27
    %p41 = scmp.eq.s32.totalorder %s19, 1
    %p42 = por %p40, %p41
    %p44 = scmp.ne.s32.totalorder %s27, %s43
    %p45 = scmp.eq.s32.totalorder %s19, 0
    %p46 = por %p44, %p45
    %s48 = sadd.s32 %s47, 1
    %p51 = scmp.eq.s32.totalorder %s13, 1
    %p52 = scmp.ne.s32.totalorder %s47, %s49
    %p53 = scmp.eq.s32.totalorder %s13, 0
    %p54 = por %p52, %p53
    %p55 = scmp.ne.s32.totalorder %s47, %s49
    %p56 = scmp.eq.s32.totalorder %s18, 1
    %p57 = por %p55, %p56
    %p58 = scmp.ne.s32.totalorder %s49, %s50
    %p59 = scmp.eq.s32.totalorder %s18, 0
    %p60 = por %p58, %p59
    %p61 = scmp.ne.s32.totalorder %s49, %s50
    %p62 = scmp.eq.s32.totalorder %s19, 1
    %p63 = por %p61, %p62
    %p65 = scmp.ne.s32.totalorder %s50, %s64
    %p66 = scmp.eq.s32.totalorder %s19, 0
    %p67 = por %p65, %p66
    %s69 = sadd.s32 %s68, 1
    %p72 = scmp.eq.s32.totalorder %s13, 1
    %p73 = scmp.ne.s32.totalorder %s68, %s70
    %p74 = scmp.eq.s32.totalorder %s13, 0
    %p75 = por %p73, %p74
    %p76 = scmp.ne.s32.totalorder %s68, %s70
    %p77 = scmp.eq.s32.totalorder %s18, 1
    %p78 = por %p76, %p77
    %p79 = scmp.ne.s32.totalorder %s70, %s71
    %p80 = scmp.eq.s32.totalorder %s18, 0
    %p81 = por %p79, %p80
    %p82 = scmp.ne.s32.totalorder %s70, %s71
    %p83 = scmp.eq.s32.totalorder %s19, 1
    %p84 = por %p82, %p83
    %p86 = scmp.ne.s32.totalorder %s71, %s85
    %p87 = scmp.eq.s32.totalorder %s19, 0
    %p88 = por %p86, %p87
    %s90 = sadd.s32 %s89, 1
    %p93 = scmp.eq.s32.totalorder %s13, 1
    %p94 = scmp.ne.s32.totalorder %s89, %s91
    %p95 = scmp.eq.s32.totalorder %s13, 0
    %p96 = por %p94, %p95
    %p97 = scmp.ne.s32.totalorder %s89, %s91
    %p98 = scmp.eq.s32.totalorder %s18, 1
    %p99 = por %p97, %p98
    %p100 = scmp.ne.s32.totalorder %s91, %s92
    %p101 = scmp.eq.s32.totalorder %s18, 0
    %p102 = por %p100, %p101
    %p103 = scmp.ne.s32.totalorder %s91, %s92
    %p104 = scmp.eq.s32.totalorder %s19, 1
    %p105 = por %p103, %p104
    %p107 = scmp.ne.s32.totalorder %s92, %s106
    %p108 = scmp.eq.s32.totalorder %s19, 0
    %p109 = por %p107, %p108
    %s111 = sadd.s32 %s110, 1
    %p114 = scmp.eq.s32.totalorder %s13, 1
    %p115 = scmp.ne.s32.totalorder %s110, %s112
    %p116 = scmp.eq.s32.totalorder %s13, 0
    %p117 = por %p115, %p116
    %p118 = scmp.ne.s32.totalorder %s110, %s112
    %p119 = scmp.eq.s32.totalorder %s18, 1
    %p120 = por %p118, %p119
    %p121 = scmp.ne.s32.totalorder %s112, %s113
    %p122 = scmp.eq.s32.totalorder %s18, 0
    %p123 = por %p121, %p122
    %p124 = scmp.ne.s32.totalorder %s112, %s113
    %p125 = scmp.eq.s32.totalorder %s19, 1
    %p126 = por %p124, %p125
    %p128 = scmp.ne.s32.totalorder %s113, %s127
    %p129 = scmp.eq.s32.totalorder %s19, 0
    %p130 = por %p128, %p129
    %s132 = sadd.s32 %s131, 1
    %p135 = scmp.eq.s32.totalorder %s13, 1
    %p136 = scmp.ne.s32.totalorder %s131, %s133
    %p137 = scmp.eq.s32.totalorder %s13, 0
    %p138 = por %p136, %p137
    %p139 = scmp.ne.s32.totalorder %s131, %s133
    %p140 = scmp.eq.s32.totalorder %s18, 1
    %p141 = por %p139, %p140
    %p142 = scmp.ne.s32.totalorder %s133, %s134
    %p143 = scmp.eq.s32.totalorder %s18, 0
    %p144 = por %p142, %p143
    %p145 = scmp.ne.s32.totalorder %s133, %s134
    %p146 = scmp.eq.s32.totalorder %s19, 1
    %p147 = por %p145, %p146
    %p149 = scmp.ne.s32.totalorder %s134, %s148
    %p150 = scmp.eq.s32.totalorder %s19, 0
    %p151 = por %p149, %p150
    %s153 = sadd.s32 %s152, 1
    %p156 = scmp.eq.s32.totalorder %s13, 1
    %p157 = scmp.ne.s32.totalorder %s152, %s154
    %p158 = scmp.eq.s32.totalorder %s13, 0
    %p159 = por %p157, %p158
    %p160 = scmp.ne.s32.totalorder %s152, %s154
    %p161 = scmp.eq.s32.totalorder %s18, 1
    %p162 = por %p160, %p161
    %p163 = scmp.ne.s32.totalorder %s154, %s155
    %p164 = scmp.eq.s32.totalorder %s18, 0
    %p165 = por %p163, %p164
    %p166 = scmp.ne.s32.totalorder %s154, %s155
    %p167 = scmp.eq.s32.totalorder %s19, 1
    %p168 = por %p166, %p167
    %p170 = scmp.ne.s32.totalorder %s155, %s169
    %p171 = scmp.eq.s32.totalorder %s19, 0
    %p172 = por %p170, %p171
    %s173 = ssub.s32 %s13, %s20
    %p174 = scmp.eq.s32.totalorder %s173, 0
    %s176 = sadd.s32 %s175, 1
    %s177 = scalar_select %p174, %s175, %s176
    %p180 = pneg %p174
    %p181 = scmp.eq.s32.totalorder %s13, 1
    %p182 = por %p180, %p181
    %p183 = scmp.ne.s32.totalorder %s175, %s178
    %p184 = scmp.eq.s32.totalorder %s13, 0
    %p185 = por %p183, %p184
    %p186 = scmp.ne.s32.totalorder %s175, %s178
    %p187 = scmp.eq.s32.totalorder %s18, 1
    %p188 = por %p186, %p187
    %p189 = scmp.ne.s32.totalorder %s178, %s179
    %p190 = scmp.eq.s32.totalorder %s18, 0
    %p191 = por %p189, %p190
    %p192 = scmp.ne.s32.totalorder %s178, %s179
    %p193 = scmp.eq.s32.totalorder %s19, 1
    %p194 = por %p192, %p193
    %p196 = scmp.ne.s32.totalorder %s179, %s195
    %p197 = scmp.eq.s32.totalorder %s19, 0
    %p198 = por %p196, %p197
    %p199 = scmp.le.s32.totalorder 1, %s13
    %p200 = scmp.lt.s32.totalorder %s13, 3
    %p201 = pnand %p199, %p200
    %p202 = pneg %p201
    // Predicated region
    $region9: #{tpu_custom_call.1} parent=5 // pred_check
      _
    $region10: #{tpu_custom_call.1} parent=5 // pred_check_branch
      %204 = sbr.rel (%p201) target = $region12
    $region11: #{tpu_custom_call.1} parent=5 // pred_region
      %s205 = ssub.s32 %s13, 1
      // Predicated region
      $region13: #{tpu_custom_call.1} parent=11 // pred_check
        %p206 = pneg %p60
      $region14: #{tpu_custom_call.1} parent=11 // pred_check_branch
        %208 = sbr.rel (%p206) target = $region16
      $region15: #{tpu_custom_call.1} parent=11 // pred_region
        _
      $region16: #{tpu_custom_call.1} parent=11 // pred_fallthru
        _
      // Predicated region
      $region17: #{tpu_custom_call.1} parent=11 // pred_check
        %p209 = pneg %p81
      $region18: #{tpu_custom_call.1} parent=11 // pred_check_branch
        %211 = sbr.rel (%p209) target = $region20
      $region19: #{tpu_custom_call.1} parent=11 // pred_region
        _
      $region20: #{tpu_custom_call.1} parent=11 // pred_fallthru
        _
      // Predicated region
      $region21: #{tpu_custom_call.1} parent=11 // pred_check
        %p212 = pneg %p102
      $region22: #{tpu_custom_call.1} parent=11 // pred_check_branch
        %214 = sbr.rel (%p212) target = $region24
      $region23: #{tpu_custom_call.1} parent=11 // pred_region
        _
      $region24: #{tpu_custom_call.1} parent=11 // pred_fallthru
        _
      // Predicated region
      $region25: #{tpu_custom_call.1} parent=11 // pred_check
        %p215 = pneg %p123
      $region26: #{tpu_custom_call.1} parent=11 // pred_check_branch
        %217 = sbr.rel (%p215) target = $region28
      $region27: #{tpu_custom_call.1} parent=11 // pred_region
        _
      $region28: #{tpu_custom_call.1} parent=11 // pred_fallthru
        _
      // Predicated region
      $region29: #{tpu_custom_call.1} parent=11 // pred_check
        %p218 = pneg %p144
      $region30: #{tpu_custom_call.1} parent=11 // pred_check_branch
        %220 = sbr.rel (%p218) target = $region32
      $region31: #{tpu_custom_call.1} parent=11 // pred_region
        _
      $region32: #{tpu_custom_call.1} parent=11 // pred_fallthru
        _
      // Predicated region
      $region33: #{tpu_custom_call.1} parent=11 // pred_check
        %p221 = pneg %p165
      $region34: #{tpu_custom_call.1} parent=11 // pred_check_branch
        %223 = sbr.rel (%p221) target = $region36
      $region35: #{tpu_custom_call.1} parent=11 // pred_region
        _
      $region36: #{tpu_custom_call.1} parent=11 // pred_fallthru
        _
    $region12: #{tpu_custom_call.1} parent=5 // pred_fallthru
      _
    %p224 = scmp.lt.s32.totalorder %s13, 2
    // Predicated region
    $region37: #{tpu_custom_call.1} parent=5 // pred_check
      %p225 = pneg %p224
    $region38: #{tpu_custom_call.1} parent=5 // pred_check_branch
      %227 = sbr.rel (%p225) target = $region40
    $region39: #{tpu_custom_call.1} parent=5 // pred_region
      // Predicated region
      $region41: #{tpu_custom_call.1} parent=39 // pred_check
        %p228 = pneg %p33
      $region42: #{tpu_custom_call.1} parent=39 // pred_check_branch
        %230 = sbr.rel (%p228) target = $region44
      $region43: #{tpu_custom_call.1} parent=39 // pred_region
        %p231 = scmp.lt.s32.totalorder %s13, 1
        %s232 = scalar_select %p231, %s13, 1
        %s233 = smul.addr %s232, 32
        %s234 = smul.addr %s233, 4
        %s235 = scalar_lea.vmem %s0, %s234
      $region44: #{tpu_custom_call.1} parent=39 // pred_fallthru
        _
    $region40: #{tpu_custom_call.1} parent=5 // pred_fallthru
      _
    %p236 = scmp.le.s32.totalorder 1, %s13
    %p237 = scmp.lt.s32.totalorder %s13, 3
    %p238 = pnand %p236, %p237
    %p239 = pneg %p238
    // Predicated region
    $region45: #{tpu_custom_call.1} parent=5 // pred_check
      _
    $region46: #{tpu_custom_call.1} parent=5 // pred_check_branch
      %241 = sbr.rel (%p238) target = $region48
    $region47: #{tpu_custom_call.1} parent=5 // pred_region
      %s242 = ssub.s32 %s13, 1
      %p243 = scmp.lt.s32.totalorder %s18, 1
      %s244 = scalar_select %p243, %s18, 1
      %s245 = smul.addr %s244, 32
      %s246 = smul.addr %s245, 4
      %s247 = scalar_lea.vmem %s0, %s246
      %p248 = pneg %p39
      %p249 = pneg %p36
      %p250 = pneg %p60
      %p251 = pneg %p57
      %p252 = pneg %p81
      %p253 = pneg %p78
      %p254 = pneg %p102
      %p255 = pneg %p99
      %p256 = pneg %p123
      %p257 = pneg %p120
      %p258 = pneg %p144
      %p259 = pneg %p141
      %p260 = pneg %p165
      %p261 = pneg %p162
      %p262 = pneg %p191
      %p263 = pneg %p188
      %s264 = smul.u32 32, %s18
      %p265 = scmp.lt.s32.totalorder %s264, 63
      %s266 = scalar_select %p265, %s264, 63
      %s267 = smul.addr %s266, 4
      %s268 = scalar_lea.vmem %s7, %s267
      %p269 = scmp.lt.s32.totalorder %s18, 1
      %s270 = scalar_select %p269, %s18, 1
      %s271 = smul.addr %s270, 32
      %s272 = smul.addr %s271, 4
      %s273 = scalar_lea.vmem %s0, %s272
      %s274 = smul.u32 32, %s18
      %p275 = scmp.lt.s32.totalorder %s274, 63
      %s276 = scalar_select %p275, %s274, 63
      %s277 = smul.addr %s276, 4
      %s278 = scalar_lea.vmem %s7, %s277
      %s279 = smul.u32 32, %s18
      %v281 = vld [vmem:[%s273] sm:$0xf]
      %v282 = vld [vmem:[%s273 + $0x4] sm:$0xf]
      %v283 = vld [vmem:[%s273 + $0x8] sm:$0xf]
      %v284 = vld [vmem:[%s273 + $0xc] sm:$0xf]
      %v285 = vld [vmem:[%s273 + $0x10] sm:$0xf]
      %v286 = vld [vmem:[%s273 + $0x14] sm:$0xf]
      %v287 = vld [vmem:[%s273 + $0x18] sm:$0xf]
      %v288 = vld [vmem:[%s273 + $0x1c] sm:$0xf]
      %v289 = vld [vmem:[%s273 + $0x20] sm:$0xf]
      %v290 = vld [vmem:[%s273 + $0x24] sm:$0xf]
      %v291 = vld [vmem:[%s273 + $0x28] sm:$0xf]
      %v292 = vld [vmem:[%s273 + $0x2c] sm:$0xf]
      %v293 = vld [vmem:[%s273 + $0x30] sm:$0xf]
      %v294 = vld [vmem:[%s273 + $0x34] sm:$0xf]
      %v295 = vld [vmem:[%s273 + $0x38] sm:$0xf]
      %v296 = vld [vmem:[%s273 + $0x3c] sm:$0xf]
      %v297 = vld [vmem:[%s273 + $0x40] sm:$0xf]
      %v298 = vld [vmem:[%s273 + $0x44] sm:$0xf]
      %v299 = vld [vmem:[%s273 + $0x48] sm:$0xf]
      %v300 = vld [vmem:[%s273 + $0x4c] sm:$0xf]
      %v301 = vld [vmem:[%s273 + $0x50] sm:$0xf]
      %v302 = vld [vmem:[%s273 + $0x54] sm:$0xf]
      %v303 = vld [vmem:[%s273 + $0x58] sm:$0xf]
      %v304 = vld [vmem:[%s273 + $0x5c] sm:$0xf]
      %v305 = vld [vmem:[%s273 + $0x60] sm:$0xf]
      %v306 = vld [vmem:[%s273 + $0x64] sm:$0xf]
      %v307 = vld [vmem:[%s273 + $0x68] sm:$0xf]
      %v308 = vld [vmem:[%s273 + $0x6c] sm:$0xf]
      %v309 = vld [vmem:[%s273 + $0x70] sm:$0xf]
      %v310 = vld [vmem:[%s273 + $0x74] sm:$0xf]
      %v311 = vld [vmem:[%s273 + $0x78] sm:$0xf]
      %v312 = vld [vmem:[%s273 + $0x7c] sm:$0xf]
      %v345 = vunpack.c.l.b16 %v281
      %v346 = vunpack.c.l.b16 %v282
      %v347 = vunpack.c.l.b16 %v283
      %v348 = vunpack.c.l.b16 %v284
      %v349 = vunpack.c.l.b16 %v285
      %v350 = vunpack.c.l.b16 %v286
      %v351 = vunpack.c.l.b16 %v287
      %v352 = vunpack.c.l.b16 %v288
      %v353 = vunpack.c.l.b16 %v289
      %v354 = vunpack.c.l.b16 %v290
      %v355 = vunpack.c.l.b16 %v291
      %v356 = vunpack.c.l.b16 %v292
      %v357 = vunpack.c.l.b16 %v293
      %v358 = vunpack.c.l.b16 %v294
      %v359 = vunpack.c.l.b16 %v295
      %v360 = vunpack.c.l.b16 %v296
      %v361 = vunpack.c.l.b16 %v297
      %v362 = vunpack.c.l.b16 %v298
      %v363 = vunpack.c.l.b16 %v299
      %v364 = vunpack.c.l.b16 %v300
      %v365 = vunpack.c.l.b16 %v301
      %v366 = vunpack.c.l.b16 %v302
      %v367 = vunpack.c.l.b16 %v303
      %v368 = vunpack.c.l.b16 %v304
      %v369 = vunpack.c.l.b16 %v305
      %v370 = vunpack.c.l.b16 %v306
      %v371 = vunpack.c.l.b16 %v307
      %v372 = vunpack.c.l.b16 %v308
      %v373 = vunpack.c.l.b16 %v309
      %v374 = vunpack.c.l.b16 %v310
      %v375 = vunpack.c.l.b16 %v311
      %v376 = vunpack.c.l.b16 %v312
      %v377 = vpack.c.b16 %v346, %v345
      %v378 = vpack.c.b16 %v348, %v347
      %v379 = vpack.c.b16 %v350, %v349
      %v380 = vpack.c.b16 %v352, %v351
      %v381 = vpack.c.b16 %v354, %v353
      %v382 = vpack.c.b16 %v356, %v355
      %v383 = vpack.c.b16 %v358, %v357
      %v384 = vpack.c.b16 %v360, %v359
      %v385 = vpack.c.b16 %v362, %v361
      %v386 = vpack.c.b16 %v364, %v363
      %v387 = vpack.c.b16 %v366, %v365
      %v388 = vpack.c.b16 %v368, %v367
      %v389 = vpack.c.b16 %v370, %v369
      %v390 = vpack.c.b16 %v372, %v371
      %v391 = vpack.c.b16 %v374, %v373
      %v392 = vpack.c.b16 %v376, %v375
      %v394 = vshrl.u32 %v377, 16
      %v396 = vrot.slane %v394, 7
      %v397 = vshll.u32 %v377, 16
      %v399 = vor.u32 %v396, %v397
      %v401 = vshrl.u32 %v378, 16
      %v403 = vrot.slane %v401, 7
      %v404 = vshll.u32 %v378, 16
      %v406 = vor.u32 %v403, %v404
      %v408 = vshrl.u32 %v379, 16
      %v410 = vrot.slane %v408, 7
      %v411 = vshll.u32 %v379, 16
      %v413 = vor.u32 %v410, %v411
      %v415 = vshrl.u32 %v380, 16
      %v417 = vrot.slane %v415, 7
      %v418 = vshll.u32 %v380, 16
      %v420 = vor.u32 %v417, %v418
      %v422 = vshrl.u32 %v381, 16
      %v424 = vrot.slane %v422, 7
      %v425 = vshll.u32 %v381, 16
      %v427 = vor.u32 %v424, %v425
      %v429 = vshrl.u32 %v382, 16
      %v431 = vrot.slane %v429, 7
      %v432 = vshll.u32 %v382, 16
      %v434 = vor.u32 %v431, %v432
      %v436 = vshrl.u32 %v383, 16
      %v438 = vrot.slane %v436, 7
      %v439 = vshll.u32 %v383, 16
      %v441 = vor.u32 %v438, %v439
      %v443 = vshrl.u32 %v384, 16
      %v445 = vrot.slane %v443, 7
      %v446 = vshll.u32 %v384, 16
      %v448 = vor.u32 %v445, %v446
      %v450 = vshrl.u32 %v385, 16
      %v452 = vrot.slane %v450, 7
      %v453 = vshll.u32 %v385, 16
      %v455 = vor.u32 %v452, %v453
      %v457 = vshrl.u32 %v386, 16
      %v459 = vrot.slane %v457, 7
      %v460 = vshll.u32 %v386, 16
      %v462 = vor.u32 %v459, %v460
      %v464 = vshrl.u32 %v387, 16
      %v466 = vrot.slane %v464, 7
      %v467 = vshll.u32 %v387, 16
      %v469 = vor.u32 %v466, %v467
      %v471 = vshrl.u32 %v388, 16
      %v473 = vrot.slane %v471, 7
      %v474 = vshll.u32 %v388, 16
      %v476 = vor.u32 %v473, %v474
      %v478 = vshrl.u32 %v389, 16
      %v480 = vrot.slane %v478, 7
      %v481 = vshll.u32 %v389, 16
      %v483 = vor.u32 %v480, %v481
      %v485 = vshrl.u32 %v390, 16
      %v487 = vrot.slane %v485, 7
      %v488 = vshll.u32 %v390, 16
      %v490 = vor.u32 %v487, %v488
      %v492 = vshrl.u32 %v391, 16
      %v494 = vrot.slane %v492, 7
      %v495 = vshll.u32 %v391, 16
      %v497 = vor.u32 %v494, %v495
      %v499 = vshrl.u32 %v392, 16
      %v501 = vrot.slane %v499, 7
      %v502 = vshll.u32 %v392, 16
      %v504 = vor.u32 %v501, %v502
      %vm521 = vcmask 1040384
      %vm522 = vsmask.f32 256
      %vm523 = vmand %vm521, %vm522
      %v524 = vsel %vm523, 0, %v399
      %v525 = vsel %vm523, 0, %v406
      %v526 = vsel %vm523, 0, %v413
      %v527 = vsel %vm523, 0, %v420
      %v528 = vsel %vm523, 0, %v427
      %v529 = vsel %vm523, 0, %v434
      %v530 = vsel %vm523, 0, %v441
      %v531 = vsel %vm523, 0, %v448
      %v532 = vsel %vm523, 0, %v455
      %v533 = vsel %vm523, 0, %v462
      %v534 = vsel %vm523, 0, %v469
      %v535 = vsel %vm523, 0, %v476
      %v536 = vsel %vm523, 0, %v483
      %v537 = vsel %vm523, 0, %v490
      %v538 = vsel %vm523, 0, %v497
      %v539 = vsel %vm523, 0, %v504
      %v540 = vrot.slane %v397, 1
      %v541 = vor.u32 %v394, %v540
      %v542 = vrot.slane %v404, 1
      %v543 = vor.u32 %v401, %v542
      %v544 = vrot.slane %v411, 1
      %v545 = vor.u32 %v408, %v544
      %v546 = vrot.slane %v418, 1
      %v547 = vor.u32 %v415, %v546
      %v548 = vrot.slane %v425, 1
      %v549 = vor.u32 %v422, %v548
      %v550 = vrot.slane %v432, 1
      %v551 = vor.u32 %v429, %v550
      %v552 = vrot.slane %v439, 1
      %v553 = vor.u32 %v436, %v552
      %v554 = vrot.slane %v446, 1
      %v555 = vor.u32 %v443, %v554
      %v556 = vrot.slane %v453, 1
      %v557 = vor.u32 %v450, %v556
      %v558 = vrot.slane %v460, 1
      %v559 = vor.u32 %v457, %v558
      %v560 = vrot.slane %v467, 1
      %v561 = vor.u32 %v464, %v560
      %v562 = vrot.slane %v474, 1
      %v563 = vor.u32 %v471, %v562
      %v564 = vrot.slane %v481, 1
      %v565 = vor.u32 %v478, %v564
      %v566 = vrot.slane %v488, 1
      %v567 = vor.u32 %v485, %v566
      %v568 = vrot.slane %v495, 1
      %v569 = vor.u32 %v492, %v568
      %v570 = vrot.slane %v502, 1
      %v571 = vor.u32 %v499, %v570
      %vm588 = vcmask 1047552
      %vm589 = vsmask.f32 7424
      %vm590 = vmand %vm588, %vm589
      %v591 = vsel %vm590, %v541, 0
      %v592 = vsel %vm590, %v543, 0
      %v593 = vsel %vm590, %v545, 0
      %v594 = vsel %vm590, %v547, 0
      %v595 = vsel %vm590, %v549, 0
      %v596 = vsel %vm590, %v551, 0
      %v597 = vsel %vm590, %v553, 0
      %v598 = vsel %vm590, %v555, 0
      %v599 = vsel %vm590, %v557, 0
      %v600 = vsel %vm590, %v559, 0
      %v601 = vsel %vm590, %v561, 0
      %v602 = vsel %vm590, %v563, 0
      %v603 = vsel %vm590, %v565, 0
      %v604 = vsel %vm590, %v567, 0
      %v605 = vsel %vm590, %v569, 0
      %v606 = vsel %vm590, %v571, 0
      %607 = vrot.lane.b32.xlu0 %v377, 4
      %v608 = vpop.permute.xlu0 %607
      %609 = vrot.lane.b32.xlu0 %v378, 4
      %v610 = vpop.permute.xlu0 %609
      %611 = vrot.lane.b32.xlu0 %v379, 4
      %v612 = vpop.permute.xlu0 %611
      %613 = vrot.lane.b32.xlu0 %v380, 4
      %v614 = vpop.permute.xlu0 %613
      %615 = vrot.lane.b32.xlu0 %v381, 4
      %v616 = vpop.permute.xlu0 %615
      %617 = vrot.lane.b32.xlu0 %v382, 4
      %v618 = vpop.permute.xlu0 %617
      %619 = vrot.lane.b32.xlu0 %v383, 4
      %v620 = vpop.permute.xlu0 %619
      %621 = vrot.lane.b32.xlu0 %v384, 4
      %v622 = vpop.permute.xlu0 %621
      %623 = vrot.lane.b32.xlu0 %v385, 4
      %v624 = vpop.permute.xlu0 %623
      %625 = vrot.lane.b32.xlu0 %v386, 4
      %v626 = vpop.permute.xlu0 %625
      %627 = vrot.lane.b32.xlu0 %v387, 4
      %v628 = vpop.permute.xlu0 %627
      %629 = vrot.lane.b32.xlu0 %v388, 4
      %v630 = vpop.permute.xlu0 %629
      %631 = vrot.lane.b32.xlu0 %v389, 4
      %v632 = vpop.permute.xlu0 %631
      %633 = vrot.lane.b32.xlu0 %v390, 4
      %v634 = vpop.permute.xlu0 %633
      %635 = vrot.lane.b32.xlu0 %v391, 4
      %v636 = vpop.permute.xlu0 %635
      %637 = vrot.lane.b32.xlu0 %v392, 4
      %v638 = vpop.permute.xlu0 %637
      %655 = vrot.lane.b32.xlu0 %v591, 8
      %v656 = vpop.permute.xlu0 %655
      %657 = vrot.lane.b32.xlu0 %v592, 8
      %v658 = vpop.permute.xlu0 %657
      %659 = vrot.lane.b32.xlu0 %v593, 8
      %v660 = vpop.permute.xlu0 %659
      %661 = vrot.lane.b32.xlu0 %v594, 8
      %v662 = vpop.permute.xlu0 %661
      %663 = vrot.lane.b32.xlu0 %v595, 8
      %v664 = vpop.permute.xlu0 %663
      %665 = vrot.lane.b32.xlu0 %v596, 8
      %v666 = vpop.permute.xlu0 %665
      %667 = vrot.lane.b32.xlu0 %v597, 8
      %v668 = vpop.permute.xlu0 %667
      %669 = vrot.lane.b32.xlu0 %v598, 8
      %v670 = vpop.permute.xlu0 %669
      %671 = vrot.lane.b32.xlu0 %v599, 8
      %v672 = vpop.permute.xlu0 %671
      %673 = vrot.lane.b32.xlu0 %v600, 8
      %v674 = vpop.permute.xlu0 %673
      %675 = vrot.lane.b32.xlu0 %v601, 8
      %v676 = vpop.permute.xlu0 %675
      %677 = vrot.lane.b32.xlu0 %v602, 8
      %v678 = vpop.permute.xlu0 %677
      %679 = vrot.lane.b32.xlu0 %v603, 8
      %v680 = vpop.permute.xlu0 %679
      %681 = vrot.lane.b32.xlu0 %v604, 8
      %v682 = vpop.permute.xlu0 %681
      %683 = vrot.lane.b32.xlu0 %v605, 8
      %v684 = vpop.permute.xlu0 %683
      %685 = vrot.lane.b32.xlu0 %v606, 8
      %v686 = vpop.permute.xlu0 %685
      %vm687 = vcmask 31744
      %v690 = vsel %vm687, %v524, %v608
      %v693 = vsel %vm687, %v525, %v610
      %v696 = vsel %vm687, %v526, %v612
      %v699 = vsel %vm687, %v527, %v614
      %v702 = vsel %vm687, %v528, %v616
      %v705 = vsel %vm687, %v529, %v618
      %v708 = vsel %vm687, %v530, %v620
      %v711 = vsel %vm687, %v531, %v622
      %v714 = vsel %vm687, %v532, %v624
      %v717 = vsel %vm687, %v533, %v626
      %v720 = vsel %vm687, %v534, %v628
      %v723 = vsel %vm687, %v535, %v630
      %v726 = vsel %vm687, %v536, %v632
      %v729 = vsel %vm687, %v537, %v634
      %v732 = vsel %vm687, %v538, %v636
      %v735 = vsel %vm687, %v539, %v638
      %vm736 = vcmask 64512
      %v738 = vsel %vm736, %v690, %v656
      %v740 = vsel %vm736, %v693, %v658
      %v742 = vsel %vm736, %v696, %v660
      %v744 = vsel %vm736, %v699, %v662
      %v746 = vsel %vm736, %v702, %v664
      %v748 = vsel %vm736, %v705, %v666
      %v750 = vsel %vm736, %v708, %v668
      %v752 = vsel %vm736, %v711, %v670
      %v754 = vsel %vm736, %v714, %v672
      %v756 = vsel %vm736, %v717, %v674
      %v758 = vsel %vm736, %v720, %v676
      %v760 = vsel %vm736, %v723, %v678
      %v762 = vsel %vm736, %v726, %v680
      %v764 = vsel %vm736, %v729, %v682
      %v766 = vsel %vm736, %v732, %v684
      %v768 = vsel %vm736, %v735, %v686
      %v769 = vld [vmem:[%s1] sm:$0xf]
      %v770 = vld [vmem:[%s1 + $0x4] sm:$0x3]
      %s771 = scalar_lea.vmem %s1, 8
      %v772 = vld [vmem:[%s771] sm:$0xf]
      %v773 = vld [vmem:[%s771 + $0x4] sm:$0x3]
      %v776 = vunpack.c.l.b16 %v772
      %v777 = vunpack.c.l.b16 %v773
      %v778 = vpack.c.b16 %v777, %v776
      %vm779 = vcmask 97280
      %v780 = vsel %vm779, %v738, 0
      %v782 = vsel %vm779, %v740, 0
      %v784 = vsel %vm779, %v742, 0
      %v786 = vsel %vm779, %v744, 0
      %v788 = vsel %vm779, %v746, 0
      %v790 = vsel %vm779, %v748, 0
      %v792 = vsel %vm779, %v750, 0
      %v794 = vsel %vm779, %v752, 0
      %v796 = vsel %vm779, %v754, 0
      %v798 = vsel %vm779, %v756, 0
      %v800 = vsel %vm779, %v758, 0
      %v802 = vsel %vm779, %v760, 0
      %v804 = vsel %vm779, %v762, 0
      %v806 = vsel %vm779, %v764, 0
      %v808 = vsel %vm779, %v766, 0
      %v810 = vsel %vm779, %v768, 0
      %vm812 = vcmask 1045504
      %v814 = vsel %vm812, %v778, 0
      %816 = vmatprep.subr.bf16.mxu0 0
      %817 = vmatpush1.bf16.msra.mxu0 %v814
      %818 = vmatprep.subr.bf16.mxu0 0
      %819 = vmatpush1.bf16.msra.mxu0 0
      %820 = vmatprep.subr.bf16.mxu0 0
      %821 = vmatpush1.bf16.msra.mxu0 0
      %822 = vmatprep.subr.bf16.mxu0 0
      %823 = vmatpush1.bf16.msra.mxu0 0
      %824 = vmatprep.subr.bf16.mxu0 0
      %825 = vmatpush1.bf16.msra.mxu0 0
      %826 = vmatprep.subr.bf16.mxu0 0
      %827 = vmatpush1.bf16.msra.mxu0 0
      %828 = vmatprep.subr.bf16.mxu0 0
      %829 = vmatpush1.bf16.msra.mxu0 0
      %830 = vmatprep.subr.bf16.mxu0 0
      %831 = vmatpush1.bf16.msra.mxu0 0
      %832 = vmatprep.subr.bf16.mxu0 0
      %833 = vmatpush1.bf16.msra.mxu0 0
      %834 = vmatprep.subr.bf16.mxu0 0
      %835 = vmatpush1.bf16.msra.mxu0 0
      %836 = vmatprep.subr.bf16.mxu0 0
      %837 = vmatpush1.bf16.msra.mxu0 0
      %838 = vmatprep.subr.bf16.mxu0 0
      %839 = vmatpush1.bf16.msra.mxu0 0
      %840 = vmatprep.subr.bf16.mxu0 0
      %841 = vmatpush1.bf16.msra.mxu0 0
      %842 = vmatprep.subr.bf16.mxu0 0
      %843 = vmatpush1.bf16.msra.mxu0 0
      %844 = vmatprep.subr.bf16.mxu0 0
      %845 = vmatpush1.bf16.msra.mxu0 0
      %846 = vmatprep.subr.bf16.mxu0 0
      %847 = vmatpush1.bf16.msra.mxu0 0
      %848 = vmatprep.mubr.bf16.mxu0 0
      %849 = vmatmul.mubr.bf16.gmra.mrb[0].mxu0 %v780
      %v850 = vpop.f32.mrb[0].mxu0
      %v851 = vadd.f32 0.0, %v850
      %v852 = vpop.f32.mrb[0].mxu0
      %v853 = vpop.f32.mrb[0].mxu0
      %v854 = vadd.f32 0.0, %v853
      %v855 = vpop.f32.mrb[0].mxu0
      %856 = vmatprep.mubr.bf16.mxu0 0
      %857 = vmatmul.mubr.bf16.gmra.mrb[0].mxu0 %v782
      %v858 = vpop.f32.mrb[0].mxu0
      %v859 = vadd.f32 0.0, %v858
      %v860 = vpop.f32.mrb[0].mxu0
      %v861 = vpop.f32.mrb[0].mxu0
      %v862 = vadd.f32 0.0, %v861
      %v863 = vpop.f32.mrb[0].mxu0
      %864 = vmatprep.mubr.bf16.mxu0 0
      %865 = vmatmul.mubr.bf16.gmra.mrb[0].mxu0 %v784
      %v866 = vpop.f32.mrb[0].mxu0
      %v867 = vadd.f32 0.0, %v866
      %v868 = vpop.f32.mrb[0].mxu0
      %v869 = vpop.f32.mrb[0].mxu0
      %v870 = vadd.f32 0.0, %v869
      %v871 = vpop.f32.mrb[0].mxu0
      %872 = vmatprep.mubr.bf16.mxu0 0
      %873 = vmatmul.mubr.bf16.gmra.mrb[0].mxu0 %v786
      %v874 = vpop.f32.mrb[0].mxu0
      %v875 = vadd.f32 0.0, %v874
      %v876 = vpop.f32.mrb[0].mxu0
      %v877 = vpop.f32.mrb[0].mxu0
      %v878 = vadd.f32 0.0, %v877
      %v879 = vpop.f32.mrb[0].mxu0
      %880 = vmatprep.mubr.bf16.mxu0 0
      %881 = vmatmul.mubr.bf16.gmra.mrb[0].mxu0 %v788
      %v882 = vpop.f32.mrb[0].mxu0
      %v883 = vadd.f32 0.0, %v882
      %v884 = vpop.f32.mrb[0].mxu0
      %v885 = vpop.f32.mrb[0].mxu0
      %v886 = vadd.f32 0.0, %v885
      %v887 = vpop.f32.mrb[0].mxu0
      %888 = vmatprep.mubr.bf16.mxu0 0
      %889 = vmatmul.mubr.bf16.gmra.mrb[0].mxu0 %v790
      %v890 = vpop.f32.mrb[0].mxu0
      %v891 = vadd.f32 0.0, %v890
      %v892 = vpop.f32.mrb[0].mxu0
      %v893 = vpop.f32.mrb[0].mxu0
      %v894 = vadd.f32 0.0, %v893
      %v895 = vpop.f32.mrb[0].mxu0
      %896 = vmatprep.mubr.bf16.mxu0 0
      %897 = vmatmul.mubr.bf16.gmra.mrb[0].mxu0 %v792
      %v898 = vpop.f32.mrb[0].mxu0
      %v899 = vadd.f32 0.0, %v898
      %v900 = vpop.f32.mrb[0].mxu0
      %v901 = vpop.f32.mrb[0].mxu0
      %v902 = vadd.f32 0.0, %v901
      %v903 = vpop.f32.mrb[0].mxu0
      %904 = vmatprep.mubr.bf16.mxu0 0
      %905 = vmatmul.mubr.bf16.gmra.mrb[0].mxu0 %v794
      %v906 = vpop.f32.mrb[0].mxu0
      %v907 = vadd.f32 0.0, %v906
      %v908 = vpop.f32.mrb[0].mxu0
      %v909 = vpop.f32.mrb[0].mxu0
      %v910 = vadd.f32 0.0, %v909
      %v911 = vpop.f32.mrb[0].mxu0
      %912 = vmatprep.mubr.bf16.mxu0 0
      %913 = vmatmul.mubr.bf16.gmra.mrb[0].mxu0 %v796
      %v914 = vpop.f32.mrb[0].mxu0
      %v915 = vadd.f32 0.0, %v914
      %v916 = vpop.f32.mrb[0].mxu0
      %v917 = vpop.f32.mrb[0].mxu0
      %v918 = vadd.f32 0.0, %v917
      %v919 = vpop.f32.mrb[0].mxu0
      %920 = vmatprep.mubr.bf16.mxu0 0
      %921 = vmatmul.mubr.bf16.gmra.mrb[0].mxu0 %v798
      %v922 = vpop.f32.mrb[0].mxu0
      %v923 = vadd.f32 0.0, %v922
      %v924 = vpop.f32.mrb[0].mxu0
      %v925 = vpop.f32.mrb[0].mxu0
      %v926 = vadd.f32 0.0, %v925
      %v927 = vpop.f32.mrb[0].mxu0
      %928 = vmatprep.mubr.bf16.mxu0 0
      %929 = vmatmul.mubr.bf16.gmra.mrb[0].mxu0 %v800
      %v930 = vpop.f32.mrb[0].mxu0
      %v931 = vadd.f32 0.0, %v930
      %v932 = vpop.f32.mrb[0].mxu0
      %v933 = vpop.f32.mrb[0].mxu0
      %v934 = vadd.f32 0.0, %v933
      %v935 = vpop.f32.mrb[0].mxu0
      %936 = vmatprep.mubr.bf16.mxu0 0
      %937 = vmatmul.mubr.bf16.gmra.mrb[0].mxu0 %v802
      %v938 = vpop.f32.mrb[0].mxu0
      %v939 = vadd.f32 0.0, %v938
      %v940 = vpop.f32.mrb[0].mxu0
      %v941 = vpop.f32.mrb[0].mxu0
      %v942 = vadd.f32 0.0, %v941
      %v943 = vpop.f32.mrb[0].mxu0
      %944 = vmatprep.mubr.bf16.mxu0 0
      %945 = vmatmul.mubr.bf16.gmra.mrb[0].mxu0 %v804
      %v946 = vpop.f32.mrb[0].mxu0
      %v947 = vadd.f32 0.0, %v946
      %v948 = vpop.f32.mrb[0].mxu0
      %v949 = vpop.f32.mrb[0].mxu0
      %v950 = vadd.f32 0.0, %v949
      %v951 = vpop.f32.mrb[0].mxu0
      %952 = vmatprep.mubr.bf16.mxu0 0
      %953 = vmatmul.mubr.bf16.gmra.mrb[0].mxu0 %v806
      %v954 = vpop.f32.mrb[0].mxu0
      %v955 = vadd.f32 0.0, %v954
      %v956 = vpop.f32.mrb[0].mxu0
      %v957 = vpop.f32.mrb[0].mxu0
      %v958 = vadd.f32 0.0, %v957
      %v959 = vpop.f32.mrb[0].mxu0
      %960 = vmatprep.mubr.bf16.mxu0 0
      %961 = vmatmul.mubr.bf16.gmra.mrb[0].mxu0 %v808
      %v962 = vpop.f32.mrb[0].mxu0
      %v963 = vadd.f32 0.0, %v962
      %v964 = vpop.f32.mrb[0].mxu0
      %v965 = vpop.f32.mrb[0].mxu0
      %v966 = vadd.f32 0.0, %v965
      %v967 = vpop.f32.mrb[0].mxu0
      %968 = vmatprep.mubr.bf16.mxu0 0
      %969 = vmatmul.mubr.bf16.gmra.mrb[0].mxu0 %v810
      %v970 = vpop.f32.mrb[0].mxu0
      %v971 = vadd.f32 0.0, %v970
      %v972 = vpop.f32.mrb[0].mxu0
      %v973 = vpop.f32.mrb[0].mxu0
      %v974 = vadd.f32 0.0, %v973
      %v975 = vpop.f32.mrb[0].mxu0
      %976 = vdwg.mxu0
      %v979 = vunpack.c.l.b16 %v769
      %v980 = vunpack.c.l.b16 %v770
      %v981 = vpack.c.b16 %v980, %v979
      %v983 = vsel %vm779, 0, 0
      %v986 = vsel %vm812, %v981, 0
      %988 = vmatprep.subr.bf16.mxu0 0
      %989 = vmatpush1.bf16.msra.mxu0 %v986
      %990 = vmatprep.subr.bf16.mxu0 0
      %991 = vmatpush1.bf16.msra.mxu0 0
      %992 = vmatprep.subr.bf16.mxu0 0
      %993 = vmatpush1.bf16.msra.mxu0 0
      %994 = vmatprep.subr.bf16.mxu0 0
      %995 = vmatpush1.bf16.msra.mxu0 0
      %996 = vmatprep.subr.bf16.mxu0 0
      %997 = vmatpush1.bf16.msra.mxu0 0
      %998 = vmatprep.subr.bf16.mxu0 0
      %999 = vmatpush1.bf16.msra.mxu0 0
      %1000 = vmatprep.subr.bf16.mxu0 0
      %1001 = vmatpush1.bf16.msra.mxu0 0
      %1002 = vmatprep.subr.bf16.mxu0 0
      %1003 = vmatpush1.bf16.msra.mxu0 0
      %1004 = vmatprep.subr.bf16.mxu0 0
      %1005 = vmatpush1.bf16.msra.mxu0 0
      %1006 = vmatprep.subr.bf16.mxu0 0
      %1007 = vmatpush1.bf16.msra.mxu0 0
      %1008 = vmatprep.subr.bf16.mxu0 0
      %1009 = vmatpush1.bf16.msra.mxu0 0
      %1010 = vmatprep.subr.bf16.mxu0 0
      %1011 = vmatpush1.bf16.msra.mxu0 0
      %1012 = vmatprep.subr.bf16.mxu0 0
      %1013 = vmatpush1.bf16.msra.mxu0 0
      %1014 = vmatprep.subr.bf16.mxu0 0
      %1015 = vmatpush1.bf16.msra.mxu0 0
      %1016 = vmatprep.subr.bf16.mxu0 0
      %1017 = vmatpush1.bf16.msra.mxu0 0
      %1018 = vmatprep.subr.bf16.mxu0 0
      %1019 = vmatpush1.bf16.msra.mxu0 0
      %1020 = vmatprep.mubr.bf16.mxu0 0
      %1021 = vmatmul.mubr.bf16.gmra.mrb[0].mxu0 %v983
      %v1022 = vpop.f32.mrb[0].mxu0
      %v1023 = vadd.f32 %v851, %v1022
      %v1024 = vpop.f32.mrb[0].mxu0
      %v1025 = vpop.f32.mrb[0].mxu0
      %v1026 = vadd.f32 %v854, %v1025
      %v1027 = vpop.f32.mrb[0].mxu0
      %1028 = vmatprep.mubr.bf16.mxu0 0
      %1029 = vmatmul.mubr.bf16.gmra.mrb[0].mxu0 %v780
      %v1030 = vpop.f32.mrb[0].mxu0
      %v1031 = vadd.f32 %v859, %v1030
      %v1032 = vpop.f32.mrb[0].mxu0
      %v1033 = vpop.f32.mrb[0].mxu0
      %v1034 = vadd.f32 %v862, %v1033
      %v1035 = vpop.f32.mrb[0].mxu0
      %1036 = vmatprep.mubr.bf16.mxu0 0
      %1037 = vmatmul.mubr.bf16.gmra.mrb[0].mxu0 %v782
      %v1038 = vpop.f32.mrb[0].mxu0
      %v1039 = vadd.f32 %v867, %v1038
      %v1040 = vpop.f32.mrb[0].mxu0
      %v1041 = vpop.f32.mrb[0].mxu0
      %v1042 = vadd.f32 %v870, %v1041
      %v1043 = vpop.f32.mrb[0].mxu0
      %1044 = vmatprep.mubr.bf16.mxu0 0
      %1045 = vmatmul.mubr.bf16.gmra.mrb[0].mxu0 %v784
      %v1046 = vpop.f32.mrb[0].mxu0
      %v1047 = vadd.f32 %v875, %v1046
      %v1048 = vpop.f32.mrb[0].mxu0
      %v1049 = vpop.f32.mrb[0].mxu0
      %v1050 = vadd.f32 %v878, %v1049
      %v1051 = vpop.f32.mrb[0].mxu0
      %1052 = vmatprep.mubr.bf16.mxu0 0
      %1053 = vmatmul.mubr.bf16.gmra.mrb[0].mxu0 %v786
      %v1054 = vpop.f32.mrb[0].mxu0
      %v1055 = vadd.f32 %v883, %v1054
      %v1056 = vpop.f32.mrb[0].mxu0
      %v1057 = vpop.f32.mrb[0].mxu0
      %v1058 = vadd.f32 %v886, %v1057
      %v1059 = vpop.f32.mrb[0].mxu0
      %1060 = vmatprep.mubr.bf16.mxu0 0
      %1061 = vmatmul.mubr.bf16.gmra.mrb[0].mxu0 %v788
      %v1062 = vpop.f32.mrb[0].mxu0
      %v1063 = vadd.f32 %v891, %v1062
      %v1064 = vpop.f32.mrb[0].mxu0
      %v1065 = vpop.f32.mrb[0].mxu0
      %v1066 = vadd.f32 %v894, %v1065
      %v1067 = vpop.f32.mrb[0].mxu0
      %1068 = vmatprep.mubr.bf16.mxu0 0
      %1069 = vmatmul.mubr.bf16.gmra.mrb[0].mxu0 %v790
      %v1070 = vpop.f32.mrb[0].mxu0
      %v1071 = vadd.f32 %v899, %v1070
      %v1072 = vpop.f32.mrb[0].mxu0
      %v1073 = vpop.f32.mrb[0].mxu0
      %v1074 = vadd.f32 %v902, %v1073
      %v1075 = vpop.f32.mrb[0].mxu0
      %1076 = vmatprep.mubr.bf16.mxu0 0
      %1077 = vmatmul.mubr.bf16.gmra.mrb[0].mxu0 %v792
      %v1078 = vpop.f32.mrb[0].mxu0
      %v1079 = vadd.f32 %v907, %v1078
      %v1080 = vpop.f32.mrb[0].mxu0
      %v1081 = vpop.f32.mrb[0].mxu0
      %v1082 = vadd.f32 %v910, %v1081
      %v1083 = vpop.f32.mrb[0].mxu0
      %1084 = vmatprep.mubr.bf16.mxu0 0
      %1085 = vmatmul.mubr.bf16.gmra.mrb[0].mxu0 %v794
      %v1086 = vpop.f32.mrb[0].mxu0
      %v1087 = vadd.f32 %v915, %v1086
      %v1088 = vpop.f32.mrb[0].mxu0
      %v1089 = vpop.f32.mrb[0].mxu0
      %v1090 = vadd.f32 %v918, %v1089
      %v1091 = vpop.f32.mrb[0].mxu0
      %1092 = vmatprep.mubr.bf16.mxu0 0
      %1093 = vmatmul.mubr.bf16.gmra.mrb[0].mxu0 %v796
      %v1094 = vpop.f32.mrb[0].mxu0
      %v1095 = vadd.f32 %v923, %v1094
      %v1096 = vpop.f32.mrb[0].mxu0
      %v1097 = vpop.f32.mrb[0].mxu0
      %v1098 = vadd.f32 %v926, %v1097
      %v1099 = vpop.f32.mrb[0].mxu0
      %1100 = vmatprep.mubr.bf16.mxu0 0
      %1101 = vmatmul.mubr.bf16.gmra.mrb[0].mxu0 %v798
      %v1102 = vpop.f32.mrb[0].mxu0
      %v1103 = vadd.f32 %v931, %v1102
      %v1104 = vpop.f32.mrb[0].mxu0
      %v1105 = vpop.f32.mrb[0].mxu0
      %v1106 = vadd.f32 %v934, %v1105
      %v1107 = vpop.f32.mrb[0].mxu0
      %1108 = vmatprep.mubr.bf16.mxu0 0
      %1109 = vmatmul.mubr.bf16.gmra.mrb[0].mxu0 %v800
      %v1110 = vpop.f32.mrb[0].mxu0
      %v1111 = vadd.f32 %v939, %v1110
      %v1112 = vpop.f32.mrb[0].mxu0
      %v1113 = vpop.f32.mrb[0].mxu0
      %v1114 = vadd.f32 %v942, %v1113
      %v1115 = vpop.f32.mrb[0].mxu0
      %1116 = vmatprep.mubr.bf16.mxu0 0
      %1117 = vmatmul.mubr.bf16.gmra.mrb[0].mxu0 %v802
      %v1118 = vpop.f32.mrb[0].mxu0
      %v1119 = vadd.f32 %v947, %v1118
      %v1120 = vpop.f32.mrb[0].mxu0
      %v1121 = vpop.f32.mrb[0].mxu0
      %v1122 = vadd.f32 %v950, %v1121
      %v1123 = vpop.f32.mrb[0].mxu0
      %1124 = vmatprep.mubr.bf16.mxu0 0
      %1125 = vmatmul.mubr.bf16.gmra.mrb[0].mxu0 %v804
      %v1126 = vpop.f32.mrb[0].mxu0
      %v1127 = vadd.f32 %v955, %v1126
      %v1128 = vpop.f32.mrb[0].mxu0
      %v1129 = vpop.f32.mrb[0].mxu0
      %v1130 = vadd.f32 %v958, %v1129
      %v1131 = vpop.f32.mrb[0].mxu0
      %1132 = vmatprep.mubr.bf16.mxu0 0
      %1133 = vmatmul.mubr.bf16.gmra.mrb[0].mxu0 %v806
      %v1134 = vpop.f32.mrb[0].mxu0
      %v1135 = vadd.f32 %v963, %v1134
      %v1136 = vpop.f32.mrb[0].mxu0
      %v1137 = vpop.f32.mrb[0].mxu0
      %v1138 = vadd.f32 %v966, %v1137
      %v1139 = vpop.f32.mrb[0].mxu0
      %1140 = vmatprep.mubr.bf16.mxu0 0
      %1141 = vmatmul.mubr.bf16.gmra.mrb[0].mxu0 %v808
      %v1142 = vpop.f32.mrb[0].mxu0
      %v1143 = vadd.f32 %v971, %v1142
      %v1144 = vpop.f32.mrb[0].mxu0
      %v1145 = vpop.f32.mrb[0].mxu0
      %v1146 = vadd.f32 %v974, %v1145
      %v1147 = vpop.f32.mrb[0].mxu0
      %1148 = vdwg.mxu0
      %s1149 = scalar_lea.vmem %s1, 16
      %v1150 = vld [vmem:[%s1149] sm:$0xf]
      %v1151 = vld [vmem:[%s1149 + $0x4] sm:$0x3]
      %v1154 = vunpack.c.l.b16 %v1150
      %v1155 = vunpack.c.l.b16 %v1151
      %v1156 = vpack.c.b16 %v1155, %v1154
      %v1158 = vsel %vm812, %v1156, 0
      %1160 = vmatprep.subr.bf16.mxu0 0
      %1161 = vmatpush1.bf16.msra.mxu0 %v1158
      %1162 = vmatprep.subr.bf16.mxu0 0
      %1163 = vmatpush1.bf16.msra.mxu0 0
      %1164 = vmatprep.subr.bf16.mxu0 0
      %1165 = vmatpush1.bf16.msra.mxu0 0
      %1166 = vmatprep.subr.bf16.mxu0 0
      %1167 = vmatpush1.bf16.msra.mxu0 0
      %1168 = vmatprep.subr.bf16.mxu0 0
      %1169 = vmatpush1.bf16.msra.mxu0 0
      %1170 = vmatprep.subr.bf16.mxu0 0
      %1171 = vmatpush1.bf16.msra.mxu0 0
      %1172 = vmatprep.subr.bf16.mxu0 0
      %1173 = vmatpush1.bf16.msra.mxu0 0
      %1174 = vmatprep.subr.bf16.mxu0 0
      %1175 = vmatpush1.bf16.msra.mxu0 0
      %1176 = vmatprep.subr.bf16.mxu0 0
      %1177 = vmatpush1.bf16.msra.mxu0 0
      %1178 = vmatprep.subr.bf16.mxu0 0
      %1179 = vmatpush1.bf16.msra.mxu0 0
      %1180 = vmatprep.subr.bf16.mxu0 0
      %1181 = vmatpush1.bf16.msra.mxu0 0
      %1182 = vmatprep.subr.bf16.mxu0 0
      %1183 = vmatpush1.bf16.msra.mxu0 0
      %1184 = vmatprep.subr.bf16.mxu0 0
      %1185 = vmatpush1.bf16.msra.mxu0 0
      %1186 = vmatprep.subr.bf16.mxu0 0
      %1187 = vmatpush1.bf16.msra.mxu0 0
      %1188 = vmatprep.subr.bf16.mxu0 0
      %1189 = vmatpush1.bf16.msra.mxu0 0
      %1190 = vmatprep.subr.bf16.mxu0 0
      %1191 = vmatpush1.bf16.msra.mxu0 0
      %1192 = vmatprep.mubr.bf16.mxu0 0
      %1193 = vmatmul.mubr.bf16.gmra.mrb[0].mxu0 %v782
      %v1194 = vpop.f32.mrb[0].mxu0
      %v1195 = vadd.f32 0.0, %v1194
      %v1196 = vpop.f32.mrb[0].mxu0
      %v1197 = vpop.f32.mrb[0].mxu0
      %v1198 = vadd.f32 0.0, %v1197
      %v1199 = vpop.f32.mrb[0].mxu0
      %1200 = vmatprep.mubr.bf16.mxu0 0
      %1201 = vmatmul.mubr.bf16.gmra.mrb[0].mxu0 %v784
      %v1202 = vpop.f32.mrb[0].mxu0
      %v1203 = vadd.f32 0.0, %v1202
      %v1204 = vpop.f32.mrb[0].mxu0
      %v1205 = vpop.f32.mrb[0].mxu0
      %v1206 = vadd.f32 0.0, %v1205
      %v1207 = vpop.f32.mrb[0].mxu0
      %1208 = vmatprep.mubr.bf16.mxu0 0
      %1209 = vmatmul.mubr.bf16.gmra.mrb[0].mxu0 %v786
      %v1210 = vpop.f32.mrb[0].mxu0
      %v1211 = vadd.f32 0.0, %v1210
      %v1212 = vpop.f32.mrb[0].mxu0
      %v1213 = vpop.f32.mrb[0].mxu0
      %v1214 = vadd.f32 0.0, %v1213
      %v1215 = vpop.f32.mrb[0].mxu0
      %1216 = vmatprep.mubr.bf16.mxu0 0
      %1217 = vmatmul.mubr.bf16.gmra.mrb[0].mxu0 %v788
      %v1218 = vpop.f32.mrb[0].mxu0
      %v1219 = vadd.f32 0.0, %v1218
      %v1220 = vpop.f32.mrb[0].mxu0
      %v1221 = vpop.f32.mrb[0].mxu0
      %v1222 = vadd.f32 0.0, %v1221
      %v1223 = vpop.f32.mrb[0].mxu0
      %1224 = vmatprep.mubr.bf16.mxu0 0
      %1225 = vmatmul.mubr.bf16.gmra.mrb[0].mxu0 %v790
      %v1226 = vpop.f32.mrb[0].mxu0
      %v1227 = vadd.f32 0.0, %v1226
      %v1228 = vpop.f32.mrb[0].mxu0
      %v1229 = vpop.f32.mrb[0].mxu0
      %v1230 = vadd.f32 0.0, %v1229
      %v1231 = vpop.f32.mrb[0].mxu0
      %1232 = vmatprep.mubr.bf16.mxu0 0
      %1233 = vmatmul.mubr.bf16.gmra.mrb[0].mxu0 %v792
      %v1234 = vpop.f32.mrb[0].mxu0
      %v1235 = vadd.f32 0.0, %v1234
      %v1236 = vpop.f32.mrb[0].mxu0
      %v1237 = vpop.f32.mrb[0].mxu0
      %v1238 = vadd.f32 0.0, %v1237
      %v1239 = vpop.f32.mrb[0].mxu0
      %1240 = vmatprep.mubr.bf16.mxu0 0
      %1241 = vmatmul.mubr.bf16.gmra.mrb[0].mxu0 %v794
      %v1242 = vpop.f32.mrb[0].mxu0
      %v1243 = vadd.f32 0.0, %v1242
      %v1244 = vpop.f32.mrb[0].mxu0
      %v1245 = vpop.f32.mrb[0].mxu0
      %v1246 = vadd.f32 0.0, %v1245
      %v1247 = vpop.f32.mrb[0].mxu0
      %1248 = vmatprep.mubr.bf16.mxu0 0
      %1249 = vmatmul.mubr.bf16.gmra.mrb[0].mxu0 %v796
      %v1250 = vpop.f32.mrb[0].mxu0
      %v1251 = vadd.f32 0.0, %v1250
      %v1252 = vpop.f32.mrb[0].mxu0
      %v1253 = vpop.f32.mrb[0].mxu0
      %v1254 = vadd.f32 0.0, %v1253
      %v1255 = vpop.f32.mrb[0].mxu0
      %1256 = vmatprep.mubr.bf16.mxu0 0
      %1257 = vmatmul.mubr.bf16.gmra.mrb[0].mxu0 %v798
      %v1258 = vpop.f32.mrb[0].mxu0
      %v1259 = vadd.f32 0.0, %v1258
      %v1260 = vpop.f32.mrb[0].mxu0
      %v1261 = vpop.f32.mrb[0].mxu0
      %v1262 = vadd.f32 0.0, %v1261
      %v1263 = vpop.f32.mrb[0].mxu0
      %1264 = vmatprep.mubr.bf16.mxu0 0
      %1265 = vmatmul.mubr.bf16.gmra.mrb[0].mxu0 %v800
      %v1266 = vpop.f32.mrb[0].mxu0
      %v1267 = vadd.f32 0.0, %v1266
      %v1268 = vpop.f32.mrb[0].mxu0
      %v1269 = vpop.f32.mrb[0].mxu0
      %v1270 = vadd.f32 0.0, %v1269
      %v1271 = vpop.f32.mrb[0].mxu0
      %1272 = vmatprep.mubr.bf16.mxu0 0
      %1273 = vmatmul.mubr.bf16.gmra.mrb[0].mxu0 %v802
      %v1274 = vpop.f32.mrb[0].mxu0
      %v1275 = vadd.f32 0.0, %v1274
      %v1276 = vpop.f32.mrb[0].mxu0
      %v1277 = vpop.f32.mrb[0].mxu0
      %v1278 = vadd.f32 0.0, %v1277
      %v1279 = vpop.f32.mrb[0].mxu0
      %1280 = vmatprep.mubr.bf16.mxu0 0
      %1281 = vmatmul.mubr.bf16.gmra.mrb[0].mxu0 %v804
      %v1282 = vpop.f32.mrb[0].mxu0
      %v1283 = vadd.f32 0.0, %v1282
      %v1284 = vpop.f32.mrb[0].mxu0
      %v1285 = vpop.f32.mrb[0].mxu0
      %v1286 = vadd.f32 0.0, %v1285
      %v1287 = vpop.f32.mrb[0].mxu0
      %1288 = vmatprep.mubr.bf16.mxu0 0
      %1289 = vmatmul.mubr.bf16.gmra.mrb[0].mxu0 %v806
      %v1290 = vpop.f32.mrb[0].mxu0
      %v1291 = vadd.f32 0.0, %v1290
      %v1292 = vpop.f32.mrb[0].mxu0
      %v1293 = vpop.f32.mrb[0].mxu0
      %v1294 = vadd.f32 0.0, %v1293
      %v1295 = vpop.f32.mrb[0].mxu0
      %1296 = vmatprep.mubr.bf16.mxu0 0
      %1297 = vmatmul.mubr.bf16.gmra.mrb[0].mxu0 %v808
      %v1298 = vpop.f32.mrb[0].mxu0
      %v1299 = vadd.f32 0.0, %v1298
      %v1300 = vpop.f32.mrb[0].mxu0
      %v1301 = vpop.f32.mrb[0].mxu0
      %v1302 = vadd.f32 0.0, %v1301
      %v1303 = vpop.f32.mrb[0].mxu0
      %1304 = vmatprep.mubr.bf16.mxu0 0
      %1305 = vmatmul.mubr.bf16.gmra.mrb[0].mxu0 %v810
      %v1306 = vpop.f32.mrb[0].mxu0
      %v1307 = vadd.f32 0.0, %v1306
      %v1308 = vpop.f32.mrb[0].mxu0
      %v1309 = vpop.f32.mrb[0].mxu0
      %v1310 = vadd.f32 0.0, %v1309
      %v1311 = vpop.f32.mrb[0].mxu0
      %1312 = vmatprep.mubr.bf16.mxu0 0
      %1313 = vmatmul.mubr.bf16.gmra.mrb[0].mxu0 %v983
      %v1314 = vpop.f32.mrb[0].mxu0
      %v1315 = vadd.f32 0.0, %v1314
      %v1316 = vpop.f32.mrb[0].mxu0
      %v1317 = vpop.f32.mrb[0].mxu0
      %v1318 = vadd.f32 0.0, %v1317
      %v1319 = vpop.f32.mrb[0].mxu0
      %1320 = vdwg.mxu0
      %v1321 = vadd.f32 %v1023, %v1195
      %v1322 = vadd.f32 %v1026, %v1198
      %v1323 = vadd.f32 %v1031, %v1203
      %v1324 = vadd.f32 %v1034, %v1206
      %v1325 = vadd.f32 %v1039, %v1211
      %v1326 = vadd.f32 %v1042, %v1214
      %v1327 = vadd.f32 %v1047, %v1219
      %v1328 = vadd.f32 %v1050, %v1222
      %v1329 = vadd.f32 %v1055, %v1227
      %v1330 = vadd.f32 %v1058, %v1230
      %v1331 = vadd.f32 %v1063, %v1235
      %v1332 = vadd.f32 %v1066, %v1238
      %v1333 = vadd.f32 %v1071, %v1243
      %v1334 = vadd.f32 %v1074, %v1246
      %v1335 = vadd.f32 %v1079, %v1251
      %v1336 = vadd.f32 %v1082, %v1254
      %v1337 = vadd.f32 %v1087, %v1259
      %v1338 = vadd.f32 %v1090, %v1262
      %v1339 = vadd.f32 %v1095, %v1267
      %v1340 = vadd.f32 %v1098, %v1270
      %v1341 = vadd.f32 %v1103, %v1275
      %v1342 = vadd.f32 %v1106, %v1278
      %v1343 = vadd.f32 %v1111, %v1283
      %v1344 = vadd.f32 %v1114, %v1286
      %v1345 = vadd.f32 %v1119, %v1291
      %v1346 = vadd.f32 %v1122, %v1294
      %v1347 = vadd.f32 %v1127, %v1299
      %v1348 = vadd.f32 %v1130, %v1302
      %v1349 = vadd.f32 %v1135, %v1307
      %v1350 = vadd.f32 %v1138, %v1310
      %v1351 = vadd.f32 %v1143, %v1315
      %v1352 = vadd.f32 %v1146, %v1318
      %v1353 = vld [vmem:[%s2] sm:$0x1]
      %v1355 = vlaneseq
      %v1356 = vshrl.u32 %v1355, 7
      %v1357 = vsub.s32 0, %v1356
      %v1358 = vrot.slane %v1353, %v1357
      %v1360 = vadd.f32 %v1321, %v1358
      %v1361 = vadd.f32 %v1322, %v1358
      %v1362 = vadd.f32 %v1323, %v1358
      %v1363 = vadd.f32 %v1324, %v1358
      %v1364 = vadd.f32 %v1325, %v1358
      %v1365 = vadd.f32 %v1326, %v1358
      %v1366 = vadd.f32 %v1327, %v1358
      %v1367 = vadd.f32 %v1328, %v1358
      %v1368 = vadd.f32 %v1329, %v1358
      %v1369 = vadd.f32 %v1330, %v1358
      %v1370 = vadd.f32 %v1331, %v1358
      %v1371 = vadd.f32 %v1332, %v1358
      %v1372 = vadd.f32 %v1333, %v1358
      %v1373 = vadd.f32 %v1334, %v1358
      %v1374 = vadd.f32 %v1335, %v1358
      %v1375 = vadd.f32 %v1336, %v1358
      %v1376 = vadd.f32 %v1337, %v1358
      %v1377 = vadd.f32 %v1338, %v1358
      %v1378 = vadd.f32 %v1339, %v1358
      %v1379 = vadd.f32 %v1340, %v1358
      %v1380 = vadd.f32 %v1341, %v1358
      %v1381 = vadd.f32 %v1342, %v1358
      %v1382 = vadd.f32 %v1343, %v1358
      %v1383 = vadd.f32 %v1344, %v1358
      %v1384 = vadd.f32 %v1345, %v1358
      %v1385 = vadd.f32 %v1346, %v1358
      %v1386 = vadd.f32 %v1347, %v1358
      %v1387 = vadd.f32 %v1348, %v1358
      %v1388 = vadd.f32 %v1349, %v1358
      %v1389 = vadd.f32 %v1350, %v1358
      %v1390 = vadd.f32 %v1351, %v1358
      %v1391 = vadd.f32 %v1352, %v1358
      %v1392 = vmax.f32 %v1360, 0.0
      %v1393 = vmax.f32 %v1361, 0.0
      %v1394 = vmax.f32 %v1362, 0.0
      %v1395 = vmax.f32 %v1363, 0.0
      %v1396 = vmax.f32 %v1364, 0.0
      %v1397 = vmax.f32 %v1365, 0.0
      %v1398 = vmax.f32 %v1366, 0.0
      %v1399 = vmax.f32 %v1367, 0.0
      %v1400 = vmax.f32 %v1368, 0.0
      %v1401 = vmax.f32 %v1369, 0.0
      %v1402 = vmax.f32 %v1370, 0.0
      %v1403 = vmax.f32 %v1371, 0.0
      %v1404 = vmax.f32 %v1372, 0.0
      %v1405 = vmax.f32 %v1373, 0.0
      %v1406 = vmax.f32 %v1374, 0.0
      %v1407 = vmax.f32 %v1375, 0.0
      %v1408 = vmax.f32 %v1376, 0.0
      %v1409 = vmax.f32 %v1377, 0.0
      %v1410 = vmax.f32 %v1378, 0.0
      %v1411 = vmax.f32 %v1379, 0.0
      %v1412 = vmax.f32 %v1380, 0.0
      %v1413 = vmax.f32 %v1381, 0.0
      %v1414 = vmax.f32 %v1382, 0.0
      %v1415 = vmax.f32 %v1383, 0.0
      %v1416 = vmax.f32 %v1384, 0.0
      %v1417 = vmax.f32 %v1385, 0.0
      %v1418 = vmax.f32 %v1386, 0.0
      %v1419 = vmax.f32 %v1387, 0.0
      %v1420 = vmax.f32 %v1388, 0.0
      %v1421 = vmax.f32 %v1389, 0.0
      %v1422 = vmax.f32 %v1390, 0.0
      %v1423 = vmax.f32 %v1391, 0.0
      %v1424 = vpack.c.bf16 %v1393, %v1392
      %v1425 = vpack.c.bf16 %v1395, %v1394
      %v1426 = vpack.c.bf16 %v1397, %v1396
      %v1427 = vpack.c.bf16 %v1399, %v1398
      %v1428 = vpack.c.bf16 %v1401, %v1400
      %v1429 = vpack.c.bf16 %v1403, %v1402
      %v1430 = vpack.c.bf16 %v1405, %v1404
      %v1431 = vpack.c.bf16 %v1407, %v1406
      %v1432 = vpack.c.bf16 %v1409, %v1408
      %v1433 = vpack.c.bf16 %v1411, %v1410
      %v1434 = vpack.c.bf16 %v1413, %v1412
      %v1435 = vpack.c.bf16 %v1415, %v1414
      %v1436 = vpack.c.bf16 %v1417, %v1416
      %v1437 = vpack.c.bf16 %v1419, %v1418
      %v1438 = vpack.c.bf16 %v1421, %v1420
      %v1439 = vpack.c.bf16 %v1423, %v1422
      %v1440 = vld [vmem:[%s5] sm:$0x3]
      %v1441 = vld [vmem:[%s6] sm:$0x1]
      %v1443 = vlaneseq
      %v1444 = vshrl.u32 %v1443, 7
      %v1445 = vsub.s32 0, %v1444
      %v1446 = vrot.slane %v1441, %v1445
      %v1448 = vsel %vm687, %v377, 0
      %v1450 = vsel %vm687, %v378, 0
      %v1452 = vsel %vm687, %v379, 0
      %v1454 = vsel %vm687, %v380, 0
      %v1456 = vsel %vm687, %v381, 0
      %v1458 = vsel %vm687, %v382, 0
      %v1460 = vsel %vm687, %v383, 0
      %v1462 = vsel %vm687, %v384, 0
      %v1464 = vsel %vm687, %v385, 0
      %v1466 = vsel %vm687, %v386, 0
      %v1468 = vsel %vm687, %v387, 0
      %v1470 = vsel %vm687, %v388, 0
      %v1472 = vsel %vm687, %v389, 0
      %v1474 = vsel %vm687, %v390, 0
      %v1476 = vsel %vm687, %v391, 0
      %v1478 = vsel %vm687, %v392, 0
      %vm1480 = vcmask 1041408
      %v1482 = vsel %vm1480, %v1440, 0
      %1484 = vmatprep.subr.bf16.mxu0 0
      %1485 = vmatpush1.bf16.msra.mxu0 %v1482
      %1486 = vmatprep.subr.bf16.mxu0 0
      %1487 = vmatpush1.bf16.msra.mxu0 0
      %1488 = vmatprep.subr.bf16.mxu0 0
      %1489 = vmatpush1.bf16.msra.mxu0 0
      %1490 = vmatprep.subr.bf16.mxu0 0
      %1491 = vmatpush1.bf16.msra.mxu0 0
      %1492 = vmatprep.subr.bf16.mxu0 0
      %1493 = vmatpush1.bf16.msra.mxu0 0
      %1494 = vmatprep.subr.bf16.mxu0 0
      %1495 = vmatpush1.bf16.msra.mxu0 0
      %1496 = vmatprep.subr.bf16.mxu0 0
      %1497 = vmatpush1.bf16.msra.mxu0 0
      %1498 = vmatprep.subr.bf16.mxu0 0
      %1499 = vmatpush1.bf16.msra.mxu0 0
      %1500 = vmatprep.subr.bf16.mxu0 0
      %1501 = vmatpush1.bf16.msra.mxu0 0
      %1502 = vmatprep.subr.bf16.mxu0 0
      %1503 = vmatpush1.bf16.msra.mxu0 0
      %1504 = vmatprep.subr.bf16.mxu0 0
      %1505 = vmatpush1.bf16.msra.mxu0 0
      %1506 = vmatprep.subr.bf16.mxu0 0
      %1507 = vmatpush1.bf16.msra.mxu0 0
      %1508 = vmatprep.subr.bf16.mxu0 0
      %1509 = vmatpush1.bf16.msra.mxu0 0
      %1510 = vmatprep.subr.bf16.mxu0 0
      %1511 = vmatpush1.bf16.msra.mxu0 0
      %1512 = vmatprep.subr.bf16.mxu0 0
      %1513 = vmatpush1.bf16.msra.mxu0 0
      %1514 = vmatprep.subr.bf16.mxu0 0
      %1515 = vmatpush1.bf16.msra.mxu0 0
      %1516 = vmatprep.mubr.bf16.mxu0 0
      %1517 = vmatmul.mubr.bf16.gmra.mrb[0].mxu0 %v1448
      %v1518 = vpop.f32.mrb[0].mxu0
      %v1519 = vadd.f32 %v1446, %v1518
      %v1520 = vpop.f32.mrb[0].mxu0
      %v1521 = vpop.f32.mrb[0].mxu0
      %v1522 = vadd.f32 %v1446, %v1521
      %v1523 = vpop.f32.mrb[0].mxu0
      %1524 = vmatprep.mubr.bf16.mxu0 0
      %1525 = vmatmul.mubr.bf16.gmra.mrb[0].mxu0 %v1450
      %v1526 = vpop.f32.mrb[0].mxu0
      %v1527 = vadd.f32 %v1446, %v1526
      %v1528 = vpop.f32.mrb[0].mxu0
      %v1529 = vpop.f32.mrb[0].mxu0
      %v1530 = vadd.f32 %v1446, %v1529
      %v1531 = vpop.f32.mrb[0].mxu0
      %1532 = vmatprep.mubr.bf16.mxu0 0
      %1533 = vmatmul.mubr.bf16.gmra.mrb[0].mxu0 %v1452
      %v1534 = vpop.f32.mrb[0].mxu0
      %v1535 = vadd.f32 %v1446, %v1534
      %v1536 = vpop.f32.mrb[0].mxu0
      %v1537 = vpop.f32.mrb[0].mxu0
      %v1538 = vadd.f32 %v1446, %v1537
      %v1539 = vpop.f32.mrb[0].mxu0
      %1540 = vmatprep.mubr.bf16.mxu0 0
      %1541 = vmatmul.mubr.bf16.gmra.mrb[0].mxu0 %v1454
      %v1542 = vpop.f32.mrb[0].mxu0
      %v1543 = vadd.f32 %v1446, %v1542
      %v1544 = vpop.f32.mrb[0].mxu0
      %v1545 = vpop.f32.mrb[0].mxu0
      %v1546 = vadd.f32 %v1446, %v1545
      %v1547 = vpop.f32.mrb[0].mxu0
      %1548 = vmatprep.mubr.bf16.mxu0 0
      %1549 = vmatmul.mubr.bf16.gmra.mrb[0].mxu0 %v1456
      %v1550 = vpop.f32.mrb[0].mxu0
      %v1551 = vadd.f32 %v1446, %v1550
      %v1552 = vpop.f32.mrb[0].mxu0
      %v1553 = vpop.f32.mrb[0].mxu0
      %v1554 = vadd.f32 %v1446, %v1553
      %v1555 = vpop.f32.mrb[0].mxu0
      %1556 = vmatprep.mubr.bf16.mxu0 0
      %1557 = vmatmul.mubr.bf16.gmra.mrb[0].mxu0 %v1458
      %v1558 = vpop.f32.mrb[0].mxu0
      %v1559 = vadd.f32 %v1446, %v1558
      %v1560 = vpop.f32.mrb[0].mxu0
      %v1561 = vpop.f32.mrb[0].mxu0
      %v1562 = vadd.f32 %v1446, %v1561
      %v1563 = vpop.f32.mrb[0].mxu0
      %1564 = vmatprep.mubr.bf16.mxu0 0
      %1565 = vmatmul.mubr.bf16.gmra.mrb[0].mxu0 %v1460
      %v1566 = vpop.f32.mrb[0].mxu0
      %v1567 = vadd.f32 %v1446, %v1566
      %v1568 = vpop.f32.mrb[0].mxu0
      %v1569 = vpop.f32.mrb[0].mxu0
      %v1570 = vadd.f32 %v1446, %v1569
      %v1571 = vpop.f32.mrb[0].mxu0
      %1572 = vmatprep.mubr.bf16.mxu0 0
      %1573 = vmatmul.mubr.bf16.gmra.mrb[0].mxu0 %v1462
      %v1574 = vpop.f32.mrb[0].mxu0
      %v1575 = vadd.f32 %v1446, %v1574
      %v1576 = vpop.f32.mrb[0].mxu0
      %v1577 = vpop.f32.mrb[0].mxu0
      %v1578 = vadd.f32 %v1446, %v1577
      %v1579 = vpop.f32.mrb[0].mxu0
      %1580 = vmatprep.mubr.bf16.mxu0 0
      %1581 = vmatmul.mubr.bf16.gmra.mrb[0].mxu0 %v1464
      %v1582 = vpop.f32.mrb[0].mxu0
      %v1583 = vadd.f32 %v1446, %v1582
      %v1584 = vpop.f32.mrb[0].mxu0
      %v1585 = vpop.f32.mrb[0].mxu0
      %v1586 = vadd.f32 %v1446, %v1585
      %v1587 = vpop.f32.mrb[0].mxu0
      %1588 = vmatprep.mubr.bf16.mxu0 0
      %1589 = vmatmul.mubr.bf16.gmra.mrb[0].mxu0 %v1466
      %v1590 = vpop.f32.mrb[0].mxu0
      %v1591 = vadd.f32 %v1446, %v1590
      %v1592 = vpop.f32.mrb[0].mxu0
      %v1593 = vpop.f32.mrb[0].mxu0
      %v1594 = vadd.f32 %v1446, %v1593
      %v1595 = vpop.f32.mrb[0].mxu0
      %1596 = vmatprep.mubr.bf16.mxu0 0
      %1597 = vmatmul.mubr.bf16.gmra.mrb[0].mxu0 %v1468
      %v1598 = vpop.f32.mrb[0].mxu0
      %v1599 = vadd.f32 %v1446, %v1598
      %v1600 = vpop.f32.mrb[0].mxu0
      %v1601 = vpop.f32.mrb[0].mxu0
      %v1602 = vadd.f32 %v1446, %v1601
      %v1603 = vpop.f32.mrb[0].mxu0
      %1604 = vmatprep.mubr.bf16.mxu0 0
      %1605 = vmatmul.mubr.bf16.gmra.mrb[0].mxu0 %v1470
      %v1606 = vpop.f32.mrb[0].mxu0
      %v1607 = vadd.f32 %v1446, %v1606
      %v1608 = vpop.f32.mrb[0].mxu0
      %v1609 = vpop.f32.mrb[0].mxu0
      %v1610 = vadd.f32 %v1446, %v1609
      %v1611 = vpop.f32.mrb[0].mxu0
      %1612 = vmatprep.mubr.bf16.mxu0 0
      %1613 = vmatmul.mubr.bf16.gmra.mrb[0].mxu0 %v1472
      %v1614 = vpop.f32.mrb[0].mxu0
      %v1615 = vadd.f32 %v1446, %v1614
      %v1616 = vpop.f32.mrb[0].mxu0
      %v1617 = vpop.f32.mrb[0].mxu0
      %v1618 = vadd.f32 %v1446, %v1617
      %v1619 = vpop.f32.mrb[0].mxu0
      %1620 = vmatprep.mubr.bf16.mxu0 0
      %1621 = vmatmul.mubr.bf16.gmra.mrb[0].mxu0 %v1474
      %v1622 = vpop.f32.mrb[0].mxu0
      %v1623 = vadd.f32 %v1446, %v1622
      %v1624 = vpop.f32.mrb[0].mxu0
      %v1625 = vpop.f32.mrb[0].mxu0
      %v1626 = vadd.f32 %v1446, %v1625
      %v1627 = vpop.f32.mrb[0].mxu0
      %1628 = vmatprep.mubr.bf16.mxu0 0
      %1629 = vmatmul.mubr.bf16.gmra.mrb[0].mxu0 %v1476
      %v1630 = vpop.f32.mrb[0].mxu0
      %v1631 = vadd.f32 %v1446, %v1630
      %v1632 = vpop.f32.mrb[0].mxu0
      %v1633 = vpop.f32.mrb[0].mxu0
      %v1634 = vadd.f32 %v1446, %v1633
      %v1635 = vpop.f32.mrb[0].mxu0
      %1636 = vmatprep.mubr.bf16.mxu0 0
      %1637 = vmatmul.mubr.bf16.gmra.mrb[0].mxu0 %v1478
      %v1638 = vpop.f32.mrb[0].mxu0
      %v1639 = vadd.f32 %v1446, %v1638
      %v1640 = vpop.f32.mrb[0].mxu0
      %v1641 = vpop.f32.mrb[0].mxu0
      %v1642 = vadd.f32 %v1446, %v1641
      %v1643 = vpop.f32.mrb[0].mxu0
      %1644 = vdwg.mxu0
      %v1645 = vld [vmem:[%s4] sm:$0x1]
      %v1647 = vlaneseq
      %v1648 = vshrl.u32 %v1647, 7
      %v1649 = vsub.s32 0, %v1648
      %v1650 = vrot.slane %v1645, %v1649
      %v1652 = vadd.f32 %v1519, %v1650
      %v1653 = vadd.f32 %v1522, %v1650
      %v1654 = vadd.f32 %v1527, %v1650
      %v1655 = vadd.f32 %v1530, %v1650
      %v1656 = vadd.f32 %v1535, %v1650
      %v1657 = vadd.f32 %v1538, %v1650
      %v1658 = vadd.f32 %v1543, %v1650
      %v1659 = vadd.f32 %v1546, %v1650
      %v1660 = vadd.f32 %v1551, %v1650
      %v1661 = vadd.f32 %v1554, %v1650
      %v1662 = vadd.f32 %v1559, %v1650
      %v1663 = vadd.f32 %v1562, %v1650
      %v1664 = vadd.f32 %v1567, %v1650
      %v1665 = vadd.f32 %v1570, %v1650
      %v1666 = vadd.f32 %v1575, %v1650
      %v1667 = vadd.f32 %v1578, %v1650
      %v1668 = vadd.f32 %v1583, %v1650
      %v1669 = vadd.f32 %v1586, %v1650
      %v1670 = vadd.f32 %v1591, %v1650
      %v1671 = vadd.f32 %v1594, %v1650
      %v1672 = vadd.f32 %v1599, %v1650
      %v1673 = vadd.f32 %v1602, %v1650
      %v1674 = vadd.f32 %v1607, %v1650
      %v1675 = vadd.f32 %v1610, %v1650
      %v1676 = vadd.f32 %v1615, %v1650
      %v1677 = vadd.f32 %v1618, %v1650
      %v1678 = vadd.f32 %v1623, %v1650
      %v1679 = vadd.f32 %v1626, %v1650
      %v1680 = vadd.f32 %v1631, %v1650
      %v1681 = vadd.f32 %v1634, %v1650
      %v1682 = vadd.f32 %v1639, %v1650
      %v1683 = vadd.f32 %v1642, %v1650
      %v1685 = vshrl.u32 %v1424, 16
      %v1687 = vrot.slane %v1685, 7
      %v1688 = vshll.u32 %v1424, 16
      %v1690 = vor.u32 %v1687, %v1688
      %v1692 = vshrl.u32 %v1425, 16
      %v1694 = vrot.slane %v1692, 7
      %v1695 = vshll.u32 %v1425, 16
      %v1697 = vor.u32 %v1694, %v1695
      %v1699 = vshrl.u32 %v1426, 16
      %v1701 = vrot.slane %v1699, 7
      %v1702 = vshll.u32 %v1426, 16
      %v1704 = vor.u32 %v1701, %v1702
      %v1706 = vshrl.u32 %v1427, 16
      %v1708 = vrot.slane %v1706, 7
      %v1709 = vshll.u32 %v1427, 16
      %v1711 = vor.u32 %v1708, %v1709
      %v1713 = vshrl.u32 %v1428, 16
      %v1715 = vrot.slane %v1713, 7
      %v1716 = vshll.u32 %v1428, 16
      %v1718 = vor.u32 %v1715, %v1716
      %v1720 = vshrl.u32 %v1429, 16
      %v1722 = vrot.slane %v1720, 7
      %v1723 = vshll.u32 %v1429, 16
      %v1725 = vor.u32 %v1722, %v1723
      %v1727 = vshrl.u32 %v1430, 16
      %v1729 = vrot.slane %v1727, 7
      %v1730 = vshll.u32 %v1430, 16
      %v1732 = vor.u32 %v1729, %v1730
      %v1734 = vshrl.u32 %v1431, 16
      %v1736 = vrot.slane %v1734, 7
      %v1737 = vshll.u32 %v1431, 16
      %v1739 = vor.u32 %v1736, %v1737
      %v1741 = vshrl.u32 %v1432, 16
      %v1743 = vrot.slane %v1741, 7
      %v1744 = vshll.u32 %v1432, 16
      %v1746 = vor.u32 %v1743, %v1744
      %v1748 = vshrl.u32 %v1433, 16
      %v1750 = vrot.slane %v1748, 7
      %v1751 = vshll.u32 %v1433, 16
      %v1753 = vor.u32 %v1750, %v1751
      %v1755 = vshrl.u32 %v1434, 16
      %v1757 = vrot.slane %v1755, 7
      %v1758 = vshll.u32 %v1434, 16
      %v1760 = vor.u32 %v1757, %v1758
      %v1762 = vshrl.u32 %v1435, 16
      %v1764 = vrot.slane %v1762, 7
      %v1765 = vshll.u32 %v1435, 16
      %v1767 = vor.u32 %v1764, %v1765
      %v1769 = vshrl.u32 %v1436, 16
      %v1771 = vrot.slane %v1769, 7
      %v1772 = vshll.u32 %v1436, 16
      %v1774 = vor.u32 %v1771, %v1772
      %v1776 = vshrl.u32 %v1437, 16
      %v1778 = vrot.slane %v1776, 7
      %v1779 = vshll.u32 %v1437, 16
      %v1781 = vor.u32 %v1778, %v1779
      %v1783 = vshrl.u32 %v1438, 16
      %v1785 = vrot.slane %v1783, 7
      %v1786 = vshll.u32 %v1438, 16
      %v1788 = vor.u32 %v1785, %v1786
      %v1790 = vshrl.u32 %v1439, 16
      %v1792 = vrot.slane %v1790, 7
      %v1793 = vshll.u32 %v1439, 16
      %v1795 = vor.u32 %v1792, %v1793
      %v1812 = vsel %vm523, 0, %v1690
      %v1813 = vsel %vm523, 0, %v1697
      %v1814 = vsel %vm523, 0, %v1704
      %v1815 = vsel %vm523, 0, %v1711
      %v1816 = vsel %vm523, 0, %v1718
      %v1817 = vsel %vm523, 0, %v1725
      %v1818 = vsel %vm523, 0, %v1732
      %v1819 = vsel %vm523, 0, %v1739
      %v1820 = vsel %vm523, 0, %v1746
      %v1821 = vsel %vm523, 0, %v1753
      %v1822 = vsel %vm523, 0, %v1760
      %v1823 = vsel %vm523, 0, %v1767
      %v1824 = vsel %vm523, 0, %v1774
      %v1825 = vsel %vm523, 0, %v1781
      %v1826 = vsel %vm523, 0, %v1788
      %v1827 = vsel %vm523, 0, %v1795
      %v1828 = vrot.slane %v1688, 1
      %v1829 = vor.u32 %v1685, %v1828
      %v1830 = vrot.slane %v1695, 1
      %v1831 = vor.u32 %v1692, %v1830
      %v1832 = vrot.slane %v1702, 1
      %v1833 = vor.u32 %v1699, %v1832
      %v1834 = vrot.slane %v1709, 1
      %v1835 = vor.u32 %v1706, %v1834
      %v1836 = vrot.slane %v1716, 1
      %v1837 = vor.u32 %v1713, %v1836
      %v1838 = vrot.slane %v1723, 1
      %v1839 = vor.u32 %v1720, %v1838
      %v1840 = vrot.slane %v1730, 1
      %v1841 = vor.u32 %v1727, %v1840
      %v1842 = vrot.slane %v1737, 1
      %v1843 = vor.u32 %v1734, %v1842
      %v1844 = vrot.slane %v1744, 1
      %v1845 = vor.u32 %v1741, %v1844
      %v1846 = vrot.slane %v1751, 1
      %v1847 = vor.u32 %v1748, %v1846
      %v1848 = vrot.slane %v1758, 1
      %v1849 = vor.u32 %v1755, %v1848
      %v1850 = vrot.slane %v1765, 1
      %v1851 = vor.u32 %v1762, %v1850
      %v1852 = vrot.slane %v1772, 1
      %v1853 = vor.u32 %v1769, %v1852
      %v1854 = vrot.slane %v1779, 1
      %v1855 = vor.u32 %v1776, %v1854
      %v1856 = vrot.slane %v1786, 1
      %v1857 = vor.u32 %v1783, %v1856
      %v1858 = vrot.slane %v1793, 1
      %v1859 = vor.u32 %v1790, %v1858
      %v1876 = vsel %vm590, %v1829, 0
      %v1877 = vsel %vm590, %v1831, 0
      %v1878 = vsel %vm590, %v1833, 0
      %v1879 = vsel %vm590, %v1835, 0
      %v1880 = vsel %vm590, %v1837, 0
      %v1881 = vsel %vm590, %v1839, 0
      %v1882 = vsel %vm590, %v1841, 0
      %v1883 = vsel %vm590, %v1843, 0
      %v1884 = vsel %vm590, %v1845, 0
      %v1885 = vsel %vm590, %v1847, 0
      %v1886 = vsel %vm590, %v1849, 0
      %v1887 = vsel %vm590, %v1851, 0
      %v1888 = vsel %vm590, %v1853, 0
      %v1889 = vsel %vm590, %v1855, 0
      %v1890 = vsel %vm590, %v1857, 0
      %v1891 = vsel %vm590, %v1859, 0
      %1908 = vrot.lane.b32.xlu0 %v1424, 8
      %v1909 = vpop.permute.xlu0 %1908
      %1910 = vrot.lane.b32.xlu0 %v1425, 8
      %v1911 = vpop.permute.xlu0 %1910
      %1912 = vrot.lane.b32.xlu0 %v1426, 8
      %v1913 = vpop.permute.xlu0 %1912
      %1914 = vrot.lane.b32.xlu0 %v1427, 8
      %v1915 = vpop.permute.xlu0 %1914
      %1916 = vrot.lane.b32.xlu0 %v1428, 8
      %v1917 = vpop.permute.xlu0 %1916
      %1918 = vrot.lane.b32.xlu0 %v1429, 8
      %v1919 = vpop.permute.xlu0 %1918
      %1920 = vrot.lane.b32.xlu0 %v1430, 8
      %v1921 = vpop.permute.xlu0 %1920
      %1922 = vrot.lane.b32.xlu0 %v1431, 8
      %v1923 = vpop.permute.xlu0 %1922
      %1924 = vrot.lane.b32.xlu0 %v1432, 8
      %v1925 = vpop.permute.xlu0 %1924
      %1926 = vrot.lane.b32.xlu0 %v1433, 8
      %v1927 = vpop.permute.xlu0 %1926
      %1928 = vrot.lane.b32.xlu0 %v1434, 8
      %v1929 = vpop.permute.xlu0 %1928
      %1930 = vrot.lane.b32.xlu0 %v1435, 8
      %v1931 = vpop.permute.xlu0 %1930
      %1932 = vrot.lane.b32.xlu0 %v1436, 8
      %v1933 = vpop.permute.xlu0 %1932
      %1934 = vrot.lane.b32.xlu0 %v1437, 8
      %v1935 = vpop.permute.xlu0 %1934
      %1936 = vrot.lane.b32.xlu0 %v1438, 8
      %v1937 = vpop.permute.xlu0 %1936
      %1938 = vrot.lane.b32.xlu0 %v1439, 8
      %v1939 = vpop.permute.xlu0 %1938
      %1956 = vrot.lane.b32.xlu0 %v1876, 16
      %v1957 = vpop.permute.xlu0 %1956
      %1958 = vrot.lane.b32.xlu0 %v1877, 16
      %v1959 = vpop.permute.xlu0 %1958
      %1960 = vrot.lane.b32.xlu0 %v1878, 16
      %v1961 = vpop.permute.xlu0 %1960
      %1962 = vrot.lane.b32.xlu0 %v1879, 16
      %v1963 = vpop.permute.xlu0 %1962
      %1964 = vrot.lane.b32.xlu0 %v1880, 16
      %v1965 = vpop.permute.xlu0 %1964
      %1966 = vrot.lane.b32.xlu0 %v1881, 16
      %v1967 = vpop.permute.xlu0 %1966
      %1968 = vrot.lane.b32.xlu0 %v1882, 16
      %v1969 = vpop.permute.xlu0 %1968
      %1970 = vrot.lane.b32.xlu0 %v1883, 16
      %v1971 = vpop.permute.xlu0 %1970
      %1972 = vrot.lane.b32.xlu0 %v1884, 16
      %v1973 = vpop.permute.xlu0 %1972
      %1974 = vrot.lane.b32.xlu0 %v1885, 16
      %v1975 = vpop.permute.xlu0 %1974
      %1976 = vrot.lane.b32.xlu0 %v1886, 16
      %v1977 = vpop.permute.xlu0 %1976
      %1978 = vrot.lane.b32.xlu0 %v1887, 16
      %v1979 = vpop.permute.xlu0 %1978
      %1980 = vrot.lane.b32.xlu0 %v1888, 16
      %v1981 = vpop.permute.xlu0 %1980
      %1982 = vrot.lane.b32.xlu0 %v1889, 16
      %v1983 = vpop.permute.xlu0 %1982
      %1984 = vrot.lane.b32.xlu0 %v1890, 16
      %v1985 = vpop.permute.xlu0 %1984
      %1986 = vrot.lane.b32.xlu0 %v1891, 16
      %v1987 = vpop.permute.xlu0 %1986
      %v1990 = vsel %vm736, %v1812, %v1909
      %v1993 = vsel %vm736, %v1813, %v1911
      %v1996 = vsel %vm736, %v1814, %v1913
      %v1999 = vsel %vm736, %v1815, %v1915
      %v2002 = vsel %vm736, %v1816, %v1917
      %v2005 = vsel %vm736, %v1817, %v1919
      %v2008 = vsel %vm736, %v1818, %v1921
      %v2011 = vsel %vm736, %v1819, %v1923
      %v2014 = vsel %vm736, %v1820, %v1925
      %v2017 = vsel %vm736, %v1821, %v1927
      %v2020 = vsel %vm736, %v1822, %v1929
      %v2023 = vsel %vm736, %v1823, %v1931
      %v2026 = vsel %vm736, %v1824, %v1933
      %v2029 = vsel %vm736, %v1825, %v1935
      %v2032 = vsel %vm736, %v1826, %v1937
      %v2035 = vsel %vm736, %v1827, %v1939
      %vm2036 = vcmask 130048
      %v2038 = vsel %vm2036, %v1990, %v1957
      %v2040 = vsel %vm2036, %v1993, %v1959
      %v2042 = vsel %vm2036, %v1996, %v1961
      %v2044 = vsel %vm2036, %v1999, %v1963
      %v2046 = vsel %vm2036, %v2002, %v1965
      %v2048 = vsel %vm2036, %v2005, %v1967
      %v2050 = vsel %vm2036, %v2008, %v1969
      %v2052 = vsel %vm2036, %v2011, %v1971
      %v2054 = vsel %vm2036, %v2014, %v1973
      %v2056 = vsel %vm2036, %v2017, %v1975
      %v2058 = vsel %vm2036, %v2020, %v1977
      %v2060 = vsel %vm2036, %v2023, %v1979
      %v2062 = vsel %vm2036, %v2026, %v1981
      %v2064 = vsel %vm2036, %v2029, %v1983
      %v2066 = vsel %vm2036, %v2032, %v1985
      %v2068 = vsel %vm2036, %v2035, %v1987
      %v2069 = vld [vmem:[%s3] sm:$0xf]
      %v2070 = vld [vmem:[%s3 + $0x4] sm:$0xf]
      %v2071 = vld [vmem:[%s3 + $0x8] sm:$0xf]
      %v2075 = vunpack.c.l.b16 %v2069
      %v2076 = vunpack.c.l.b16 %v2070
      %v2077 = vunpack.c.l.b16 %v2071
      %v2078 = vpack.c.b16 %v2076, %v2075
      %v2079 = vpack.c.b16 %v2077, %v2077
      %vm2081 = vcmask 195584
      %v2082 = vsel %vm2081, 0, 0
      %v2084 = vsel %vm2081, %v2038, 0
      %v2086 = vsel %vm2081, %v2040, 0
      %v2088 = vsel %vm2081, %v2042, 0
      %v2090 = vsel %vm2081, %v2044, 0
      %v2092 = vsel %vm2081, %v2046, 0
      %v2094 = vsel %vm2081, %v2048, 0
      %v2096 = vsel %vm2081, %v2050, 0
      %v2098 = vsel %vm2081, %v2052, 0
      %v2100 = vsel %vm2081, %v2054, 0
      %v2102 = vsel %vm2081, %v2056, 0
      %v2104 = vsel %vm2081, %v2058, 0
      %v2106 = vsel %vm2081, %v2060, 0
      %v2108 = vsel %vm2081, %v2062, 0
      %v2110 = vsel %vm2081, %v2064, 0
      %v2112 = vsel %vm2081, %v2066, 0
      %vm2114 = vcmask 1043456
      %v2116 = vsel %vm2114, %v2079, 0
      %2118 = vmatprep.subr.bf16.mxu0 0
      %2119 = vmatpush1.bf16.msra.mxu0 %v2078
      %2120 = vmatprep.subr.bf16.mxu0 0
      %2121 = vmatpush1.bf16.msra.mxu0 %v2116
      %2122 = vmatprep.subr.bf16.mxu0 0
      %2123 = vmatpush1.bf16.msra.mxu0 0
      %2124 = vmatprep.subr.bf16.mxu0 0
      %2125 = vmatpush1.bf16.msra.mxu0 0
      %2126 = vmatprep.subr.bf16.mxu0 0
      %2127 = vmatpush1.bf16.msra.mxu0 0
      %2128 = vmatprep.subr.bf16.mxu0 0
      %2129 = vmatpush1.bf16.msra.mxu0 0
      %2130 = vmatprep.subr.bf16.mxu0 0
      %2131 = vmatpush1.bf16.msra.mxu0 0
      %2132 = vmatprep.subr.bf16.mxu0 0
      %2133 = vmatpush1.bf16.msra.mxu0 0
      %2134 = vmatprep.subr.bf16.mxu0 0
      %2135 = vmatpush1.bf16.msra.mxu0 0
      %2136 = vmatprep.subr.bf16.mxu0 0
      %2137 = vmatpush1.bf16.msra.mxu0 0
      %2138 = vmatprep.subr.bf16.mxu0 0
      %2139 = vmatpush1.bf16.msra.mxu0 0
      %2140 = vmatprep.subr.bf16.mxu0 0
      %2141 = vmatpush1.bf16.msra.mxu0 0
      %2142 = vmatprep.subr.bf16.mxu0 0
      %2143 = vmatpush1.bf16.msra.mxu0 0
      %2144 = vmatprep.subr.bf16.mxu0 0
      %2145 = vmatpush1.bf16.msra.mxu0 0
      %2146 = vmatprep.subr.bf16.mxu0 0
      %2147 = vmatpush1.bf16.msra.mxu0 0
      %2148 = vmatprep.subr.bf16.mxu0 0
      %2149 = vmatpush1.bf16.msra.mxu0 0
      %2150 = vmatprep.mubr.bf16.mxu0 0
      %2151 = vmatmul.mubr.bf16.gmra.mrb[0].mxu0 %v2082
      %v2152 = vpop.f32.mrb[0].mxu0
      %v2153 = vadd.f32 0.0, %v2152
      %v2154 = vpop.f32.mrb[0].mxu0
      %v2155 = vpop.f32.mrb[0].mxu0
      %v2156 = vadd.f32 0.0, %v2155
      %v2157 = vpop.f32.mrb[0].mxu0
      %2158 = vmatprep.mubr.bf16.mxu0 0
      %2159 = vmatmul.mubr.bf16.gmra.mrb[0].mxu0 %v2084
      %v2160 = vpop.f32.mrb[0].mxu0
      %v2161 = vadd.f32 0.0, %v2160
      %v2162 = vpop.f32.mrb[0].mxu0
      %v2163 = vpop.f32.mrb[0].mxu0
      %v2164 = vadd.f32 0.0, %v2163
      %v2165 = vpop.f32.mrb[0].mxu0
      %2166 = vmatprep.mubr.bf16.mxu0 0
      %2167 = vmatmul.mubr.bf16.gmra.mrb[0].mxu0 %v2086
      %v2168 = vpop.f32.mrb[0].mxu0
      %v2169 = vadd.f32 0.0, %v2168
      %v2170 = vpop.f32.mrb[0].mxu0
      %v2171 = vpop.f32.mrb[0].mxu0
      %v2172 = vadd.f32 0.0, %v2171
      %v2173 = vpop.f32.mrb[0].mxu0
      %2174 = vmatprep.mubr.bf16.mxu0 0
      %2175 = vmatmul.mubr.bf16.gmra.mrb[0].mxu0 %v2088
      %v2176 = vpop.f32.mrb[0].mxu0
      %v2177 = vadd.f32 0.0, %v2176
      %v2178 = vpop.f32.mrb[0].mxu0
      %v2179 = vpop.f32.mrb[0].mxu0
      %v2180 = vadd.f32 0.0, %v2179
      %v2181 = vpop.f32.mrb[0].mxu0
      %2182 = vmatprep.mubr.bf16.mxu0 0
      %2183 = vmatmul.mubr.bf16.gmra.mrb[0].mxu0 %v2090
      %v2184 = vpop.f32.mrb[0].mxu0
      %v2185 = vadd.f32 0.0, %v2184
      %v2186 = vpop.f32.mrb[0].mxu0
      %v2187 = vpop.f32.mrb[0].mxu0
      %v2188 = vadd.f32 0.0, %v2187
      %v2189 = vpop.f32.mrb[0].mxu0
      %2190 = vmatprep.mubr.bf16.mxu0 0
      %2191 = vmatmul.mubr.bf16.gmra.mrb[0].mxu0 %v2092
      %v2192 = vpop.f32.mrb[0].mxu0
      %v2193 = vadd.f32 0.0, %v2192
      %v2194 = vpop.f32.mrb[0].mxu0
      %v2195 = vpop.f32.mrb[0].mxu0
      %v2196 = vadd.f32 0.0, %v2195
      %v2197 = vpop.f32.mrb[0].mxu0
      %2198 = vmatprep.mubr.bf16.mxu0 0
      %2199 = vmatmul.mubr.bf16.gmra.mrb[0].mxu0 %v2094
      %v2200 = vpop.f32.mrb[0].mxu0
      %v2201 = vadd.f32 0.0, %v2200
      %v2202 = vpop.f32.mrb[0].mxu0
      %v2203 = vpop.f32.mrb[0].mxu0
      %v2204 = vadd.f32 0.0, %v2203
      %v2205 = vpop.f32.mrb[0].mxu0
      %2206 = vmatprep.mubr.bf16.mxu0 0
      %2207 = vmatmul.mubr.bf16.gmra.mrb[0].mxu0 %v2096
      %v2208 = vpop.f32.mrb[0].mxu0
      %v2209 = vadd.f32 0.0, %v2208
      %v2210 = vpop.f32.mrb[0].mxu0
      %v2211 = vpop.f32.mrb[0].mxu0
      %v2212 = vadd.f32 0.0, %v2211
      %v2213 = vpop.f32.mrb[0].mxu0
      %2214 = vmatprep.mubr.bf16.mxu0 0
      %2215 = vmatmul.mubr.bf16.gmra.mrb[0].mxu0 %v2098
      %v2216 = vpop.f32.mrb[0].mxu0
      %v2217 = vadd.f32 0.0, %v2216
      %v2218 = vpop.f32.mrb[0].mxu0
      %v2219 = vpop.f32.mrb[0].mxu0
      %v2220 = vadd.f32 0.0, %v2219
      %v2221 = vpop.f32.mrb[0].mxu0
      %2222 = vmatprep.mubr.bf16.mxu0 0
      %2223 = vmatmul.mubr.bf16.gmra.mrb[0].mxu0 %v2100
      %v2224 = vpop.f32.mrb[0].mxu0
      %v2225 = vadd.f32 0.0, %v2224
      %v2226 = vpop.f32.mrb[0].mxu0
      %v2227 = vpop.f32.mrb[0].mxu0
      %v2228 = vadd.f32 0.0, %v2227
      %v2229 = vpop.f32.mrb[0].mxu0
      %2230 = vmatprep.mubr.bf16.mxu0 0
      %2231 = vmatmul.mubr.bf16.gmra.mrb[0].mxu0 %v2102
      %v2232 = vpop.f32.mrb[0].mxu0
      %v2233 = vadd.f32 0.0, %v2232
      %v2234 = vpop.f32.mrb[0].mxu0
      %v2235 = vpop.f32.mrb[0].mxu0
      %v2236 = vadd.f32 0.0, %v2235
      %v2237 = vpop.f32.mrb[0].mxu0
      %2238 = vmatprep.mubr.bf16.mxu0 0
      %2239 = vmatmul.mubr.bf16.gmra.mrb[0].mxu0 %v2104
      %v2240 = vpop.f32.mrb[0].mxu0
      %v2241 = vadd.f32 0.0, %v2240
      %v2242 = vpop.f32.mrb[0].mxu0
      %v2243 = vpop.f32.mrb[0].mxu0
      %v2244 = vadd.f32 0.0, %v2243
      %v2245 = vpop.f32.mrb[0].mxu0
      %2246 = vmatprep.mubr.bf16.mxu0 0
      %2247 = vmatmul.mubr.bf16.gmra.mrb[0].mxu0 %v2106
      %v2248 = vpop.f32.mrb[0].mxu0
      %v2249 = vadd.f32 0.0, %v2248
      %v2250 = vpop.f32.mrb[0].mxu0
      %v2251 = vpop.f32.mrb[0].mxu0
      %v2252 = vadd.f32 0.0, %v2251
      %v2253 = vpop.f32.mrb[0].mxu0
      %2254 = vmatprep.mubr.bf16.mxu0 0
      %2255 = vmatmul.mubr.bf16.gmra.mrb[0].mxu0 %v2108
      %v2256 = vpop.f32.mrb[0].mxu0
      %v2257 = vadd.f32 0.0, %v2256
      %v2258 = vpop.f32.mrb[0].mxu0
      %v2259 = vpop.f32.mrb[0].mxu0
      %v2260 = vadd.f32 0.0, %v2259
      %v2261 = vpop.f32.mrb[0].mxu0
      %2262 = vmatprep.mubr.bf16.mxu0 0
      %2263 = vmatmul.mubr.bf16.gmra.mrb[0].mxu0 %v2110
      %v2264 = vpop.f32.mrb[0].mxu0
      %v2265 = vadd.f32 0.0, %v2264
      %v2266 = vpop.f32.mrb[0].mxu0
      %v2267 = vpop.f32.mrb[0].mxu0
      %v2268 = vadd.f32 0.0, %v2267
      %v2269 = vpop.f32.mrb[0].mxu0
      %2270 = vmatprep.mubr.bf16.mxu0 0
      %2271 = vmatmul.mubr.bf16.gmra.mrb[0].mxu0 %v2112
      %v2272 = vpop.f32.mrb[0].mxu0
      %v2273 = vadd.f32 0.0, %v2272
      %v2274 = vpop.f32.mrb[0].mxu0
      %v2275 = vpop.f32.mrb[0].mxu0
      %v2276 = vadd.f32 0.0, %v2275
      %v2277 = vpop.f32.mrb[0].mxu0
      %2278 = vdwg.mxu0
      %v2279 = vadd.f32 %v1652, %v2153
      %v2280 = vadd.f32 %v1653, %v2156
      %v2281 = vadd.f32 %v1654, %v2161
      %v2282 = vadd.f32 %v1655, %v2164
      %v2283 = vadd.f32 %v1656, %v2169
      %v2284 = vadd.f32 %v1657, %v2172
      %v2285 = vadd.f32 %v1658, %v2177
      %v2286 = vadd.f32 %v1659, %v2180
      %v2287 = vadd.f32 %v1660, %v2185
      %v2288 = vadd.f32 %v1661, %v2188
      %v2289 = vadd.f32 %v1662, %v2193
      %v2290 = vadd.f32 %v1663, %v2196
      %v2291 = vadd.f32 %v1664, %v2201
      %v2292 = vadd.f32 %v1665, %v2204
      %v2293 = vadd.f32 %v1666, %v2209
      %v2294 = vadd.f32 %v1667, %v2212
      %v2295 = vadd.f32 %v1668, %v2217
      %v2296 = vadd.f32 %v1669, %v2220
      %v2297 = vadd.f32 %v1670, %v2225
      %v2298 = vadd.f32 %v1671, %v2228
      %v2299 = vadd.f32 %v1672, %v2233
      %v2300 = vadd.f32 %v1673, %v2236
      %v2301 = vadd.f32 %v1674, %v2241
      %v2302 = vadd.f32 %v1675, %v2244
      %v2303 = vadd.f32 %v1676, %v2249
      %v2304 = vadd.f32 %v1677, %v2252
      %v2305 = vadd.f32 %v1678, %v2257
      %v2306 = vadd.f32 %v1679, %v2260
      %v2307 = vadd.f32 %v1680, %v2265
      %v2308 = vadd.f32 %v1681, %v2268
      %v2309 = vadd.f32 %v1682, %v2273
      %v2310 = vadd.f32 %v1683, %v2276
      %s2311 = scalar_lea.vmem %s3, 12
      %v2312 = vld [vmem:[%s2311] sm:$0xf]
      %v2313 = vld [vmem:[%s2311 + $0x4] sm:$0xf]
      %v2314 = vld [vmem:[%s2311 + $0x8] sm:$0xf]
      %v2318 = vunpack.c.l.b16 %v2312
      %v2319 = vunpack.c.l.b16 %v2313
      %v2320 = vunpack.c.l.b16 %v2314
      %v2321 = vpack.c.b16 %v2319, %v2318
      %v2322 = vpack.c.b16 %v2320, %v2320
      %v2324 = vsel %vm2081, %v2068, 0
      %v2327 = vsel %vm2114, %v2322, 0
      %2329 = vmatprep.subr.bf16.mxu0 0
      %2330 = vmatpush1.bf16.msra.mxu0 %v2321
      %2331 = vmatprep.subr.bf16.mxu0 0
      %2332 = vmatpush1.bf16.msra.mxu0 %v2327
      %2333 = vmatprep.subr.bf16.mxu0 0
      %2334 = vmatpush1.bf16.msra.mxu0 0
      %2335 = vmatprep.subr.bf16.mxu0 0
      %2336 = vmatpush1.bf16.msra.mxu0 0
      %2337 = vmatprep.subr.bf16.mxu0 0
      %2338 = vmatpush1.bf16.msra.mxu0 0
      %2339 = vmatprep.subr.bf16.mxu0 0
      %2340 = vmatpush1.bf16.msra.mxu0 0
      %2341 = vmatprep.subr.bf16.mxu0 0
      %2342 = vmatpush1.bf16.msra.mxu0 0
      %2343 = vmatprep.subr.bf16.mxu0 0
      %2344 = vmatpush1.bf16.msra.mxu0 0
      %2345 = vmatprep.subr.bf16.mxu0 0
      %2346 = vmatpush1.bf16.msra.mxu0 0
      %2347 = vmatprep.subr.bf16.mxu0 0
      %2348 = vmatpush1.bf16.msra.mxu0 0
      %2349 = vmatprep.subr.bf16.mxu0 0
      %2350 = vmatpush1.bf16.msra.mxu0 0
      %2351 = vmatprep.subr.bf16.mxu0 0
      %2352 = vmatpush1.bf16.msra.mxu0 0
      %2353 = vmatprep.subr.bf16.mxu0 0
      %2354 = vmatpush1.bf16.msra.mxu0 0
      %2355 = vmatprep.subr.bf16.mxu0 0
      %2356 = vmatpush1.bf16.msra.mxu0 0
      %2357 = vmatprep.subr.bf16.mxu0 0
      %2358 = vmatpush1.bf16.msra.mxu0 0
      %2359 = vmatprep.subr.bf16.mxu0 0
      %2360 = vmatpush1.bf16.msra.mxu0 0
      %2361 = vmatprep.mubr.bf16.mxu0 0
      %2362 = vmatmul.mubr.bf16.gmra.mrb[0].mxu0 %v2084
      %v2363 = vpop.f32.mrb[0].mxu0
      %v2364 = vadd.f32 0.0, %v2363
      %v2365 = vpop.f32.mrb[0].mxu0
      %v2366 = vpop.f32.mrb[0].mxu0
      %v2367 = vadd.f32 0.0, %v2366
      %v2368 = vpop.f32.mrb[0].mxu0
      %2369 = vmatprep.mubr.bf16.mxu0 0
      %2370 = vmatmul.mubr.bf16.gmra.mrb[0].mxu0 %v2086
      %v2371 = vpop.f32.mrb[0].mxu0
      %v2372 = vadd.f32 0.0, %v2371
      %v2373 = vpop.f32.mrb[0].mxu0
      %v2374 = vpop.f32.mrb[0].mxu0
      %v2375 = vadd.f32 0.0, %v2374
      %v2376 = vpop.f32.mrb[0].mxu0
      %2377 = vmatprep.mubr.bf16.mxu0 0
      %2378 = vmatmul.mubr.bf16.gmra.mrb[0].mxu0 %v2088
      %v2379 = vpop.f32.mrb[0].mxu0
      %v2380 = vadd.f32 0.0, %v2379
      %v2381 = vpop.f32.mrb[0].mxu0
      %v2382 = vpop.f32.mrb[0].mxu0
      %v2383 = vadd.f32 0.0, %v2382
      %v2384 = vpop.f32.mrb[0].mxu0
      %2385 = vmatprep.mubr.bf16.mxu0 0
      %2386 = vmatmul.mubr.bf16.gmra.mrb[0].mxu0 %v2090
      %v2387 = vpop.f32.mrb[0].mxu0
      %v2388 = vadd.f32 0.0, %v2387
      %v2389 = vpop.f32.mrb[0].mxu0
      %v2390 = vpop.f32.mrb[0].mxu0
      %v2391 = vadd.f32 0.0, %v2390
      %v2392 = vpop.f32.mrb[0].mxu0
      %2393 = vmatprep.mubr.bf16.mxu0 0
      %2394 = vmatmul.mubr.bf16.gmra.mrb[0].mxu0 %v2092
      %v2395 = vpop.f32.mrb[0].mxu0
      %v2396 = vadd.f32 0.0, %v2395
      %v2397 = vpop.f32.mrb[0].mxu0
      %v2398 = vpop.f32.mrb[0].mxu0
      %v2399 = vadd.f32 0.0, %v2398
      %v2400 = vpop.f32.mrb[0].mxu0
      %2401 = vmatprep.mubr.bf16.mxu0 0
      %2402 = vmatmul.mubr.bf16.gmra.mrb[0].mxu0 %v2094
      %v2403 = vpop.f32.mrb[0].mxu0
      %v2404 = vadd.f32 0.0, %v2403
      %v2405 = vpop.f32.mrb[0].mxu0
      %v2406 = vpop.f32.mrb[0].mxu0
      %v2407 = vadd.f32 0.0, %v2406
      %v2408 = vpop.f32.mrb[0].mxu0
      %2409 = vmatprep.mubr.bf16.mxu0 0
      %2410 = vmatmul.mubr.bf16.gmra.mrb[0].mxu0 %v2096
      %v2411 = vpop.f32.mrb[0].mxu0
      %v2412 = vadd.f32 0.0, %v2411
      %v2413 = vpop.f32.mrb[0].mxu0
      %v2414 = vpop.f32.mrb[0].mxu0
      %v2415 = vadd.f32 0.0, %v2414
      %v2416 = vpop.f32.mrb[0].mxu0
      %2417 = vmatprep.mubr.bf16.mxu0 0
      %2418 = vmatmul.mubr.bf16.gmra.mrb[0].mxu0 %v2098
      %v2419 = vpop.f32.mrb[0].mxu0
      %v2420 = vadd.f32 0.0, %v2419
      %v2421 = vpop.f32.mrb[0].mxu0
      %v2422 = vpop.f32.mrb[0].mxu0
      %v2423 = vadd.f32 0.0, %v2422
      %v2424 = vpop.f32.mrb[0].mxu0
      %2425 = vmatprep.mubr.bf16.mxu0 0
      %2426 = vmatmul.mubr.bf16.gmra.mrb[0].mxu0 %v2100
      %v2427 = vpop.f32.mrb[0].mxu0
      %v2428 = vadd.f32 0.0, %v2427
      %v2429 = vpop.f32.mrb[0].mxu0
      %v2430 = vpop.f32.mrb[0].mxu0
      %v2431 = vadd.f32 0.0, %v2430
      %v2432 = vpop.f32.mrb[0].mxu0
      %2433 = vmatprep.mubr.bf16.mxu0 0
      %2434 = vmatmul.mubr.bf16.gmra.mrb[0].mxu0 %v2102
      %v2435 = vpop.f32.mrb[0].mxu0
      %v2436 = vadd.f32 0.0, %v2435
      %v2437 = vpop.f32.mrb[0].mxu0
      %v2438 = vpop.f32.mrb[0].mxu0
      %v2439 = vadd.f32 0.0, %v2438
      %v2440 = vpop.f32.mrb[0].mxu0
      %2441 = vmatprep.mubr.bf16.mxu0 0
      %2442 = vmatmul.mubr.bf16.gmra.mrb[0].mxu0 %v2104
      %v2443 = vpop.f32.mrb[0].mxu0
      %v2444 = vadd.f32 0.0, %v2443
      %v2445 = vpop.f32.mrb[0].mxu0
      %v2446 = vpop.f32.mrb[0].mxu0
      %v2447 = vadd.f32 0.0, %v2446
      %v2448 = vpop.f32.mrb[0].mxu0
      %2449 = vmatprep.mubr.bf16.mxu0 0
      %2450 = vmatmul.mubr.bf16.gmra.mrb[0].mxu0 %v2106
      %v2451 = vpop.f32.mrb[0].mxu0
      %v2452 = vadd.f32 0.0, %v2451
      %v2453 = vpop.f32.mrb[0].mxu0
      %v2454 = vpop.f32.mrb[0].mxu0
      %v2455 = vadd.f32 0.0, %v2454
      %v2456 = vpop.f32.mrb[0].mxu0
      %2457 = vmatprep.mubr.bf16.mxu0 0
      %2458 = vmatmul.mubr.bf16.gmra.mrb[0].mxu0 %v2108
      %v2459 = vpop.f32.mrb[0].mxu0
      %v2460 = vadd.f32 0.0, %v2459
      %v2461 = vpop.f32.mrb[0].mxu0
      %v2462 = vpop.f32.mrb[0].mxu0
      %v2463 = vadd.f32 0.0, %v2462
      %v2464 = vpop.f32.mrb[0].mxu0
      %2465 = vmatprep.mubr.bf16.mxu0 0
      %2466 = vmatmul.mubr.bf16.gmra.mrb[0].mxu0 %v2110
      %v2467 = vpop.f32.mrb[0].mxu0
      %v2468 = vadd.f32 0.0, %v2467
      %v2469 = vpop.f32.mrb[0].mxu0
      %v2470 = vpop.f32.mrb[0].mxu0
      %v2471 = vadd.f32 0.0, %v2470
      %v2472 = vpop.f32.mrb[0].mxu0
      %2473 = vmatprep.mubr.bf16.mxu0 0
      %2474 = vmatmul.mubr.bf16.gmra.mrb[0].mxu0 %v2112
      %v2475 = vpop.f32.mrb[0].mxu0
      %v2476 = vadd.f32 0.0, %v2475
      %v2477 = vpop.f32.mrb[0].mxu0
      %v2478 = vpop.f32.mrb[0].mxu0
      %v2479 = vadd.f32 0.0, %v2478
      %v2480 = vpop.f32.mrb[0].mxu0
      %2481 = vmatprep.mubr.bf16.mxu0 0
      %2482 = vmatmul.mubr.bf16.gmra.mrb[0].mxu0 %v2324
      %v2483 = vpop.f32.mrb[0].mxu0
      %v2484 = vadd.f32 0.0, %v2483
      %v2485 = vpop.f32.mrb[0].mxu0
      %v2486 = vpop.f32.mrb[0].mxu0
      %v2487 = vadd.f32 0.0, %v2486
      %v2488 = vpop.f32.mrb[0].mxu0
      %2489 = vdwg.mxu0
      %v2490 = vadd.f32 %v2279, %v2364
      %v2491 = vadd.f32 %v2280, %v2367
      %v2492 = vadd.f32 %v2281, %v2372
      %v2493 = vadd.f32 %v2282, %v2375
      %v2494 = vadd.f32 %v2283, %v2380
      %v2495 = vadd.f32 %v2284, %v2383
      %v2496 = vadd.f32 %v2285, %v2388
      %v2497 = vadd.f32 %v2286, %v2391
      %v2498 = vadd.f32 %v2287, %v2396
      %v2499 = vadd.f32 %v2288, %v2399
      %v2500 = vadd.f32 %v2289, %v2404
      %v2501 = vadd.f32 %v2290, %v2407
      %v2502 = vadd.f32 %v2291, %v2412
      %v2503 = vadd.f32 %v2292, %v2415
      %v2504 = vadd.f32 %v2293, %v2420
      %v2505 = vadd.f32 %v2294, %v2423
      %v2506 = vadd.f32 %v2295, %v2428
      %v2507 = vadd.f32 %v2296, %v2431
      %v2508 = vadd.f32 %v2297, %v2436
      %v2509 = vadd.f32 %v2298, %v2439
      %v2510 = vadd.f32 %v2299, %v2444
      %v2511 = vadd.f32 %v2300, %v2447
      %v2512 = vadd.f32 %v2301, %v2452
      %v2513 = vadd.f32 %v2302, %v2455
      %v2514 = vadd.f32 %v2303, %v2460
      %v2515 = vadd.f32 %v2304, %v2463
      %v2516 = vadd.f32 %v2305, %v2468
      %v2517 = vadd.f32 %v2306, %v2471
      %v2518 = vadd.f32 %v2307, %v2476
      %v2519 = vadd.f32 %v2308, %v2479
      %v2520 = vadd.f32 %v2309, %v2484
      %v2521 = vadd.f32 %v2310, %v2487
      %s2522 = scalar_lea.vmem %s3, 24
      %v2523 = vld [vmem:[%s2522] sm:$0xf]
      %v2524 = vld [vmem:[%s2522 + $0x4] sm:$0xf]
      %v2525 = vld [vmem:[%s2522 + $0x8] sm:$0xf]
      %v2529 = vunpack.c.l.b16 %v2523
      %v2530 = vunpack.c.l.b16 %v2524
      %v2531 = vunpack.c.l.b16 %v2525
      %v2532 = vpack.c.b16 %v2530, %v2529
      %v2533 = vpack.c.b16 %v2531, %v2531
      %v2536 = vsel %vm2114, %v2533, 0
      %2538 = vmatprep.subr.bf16.mxu0 0
      %2539 = vmatpush1.bf16.msra.mxu0 %v2532
      %2540 = vmatprep.subr.bf16.mxu0 0
      %2541 = vmatpush1.bf16.msra.mxu0 %v2536
      %2542 = vmatprep.subr.bf16.mxu0 0
      %2543 = vmatpush1.bf16.msra.mxu0 0
      %2544 = vmatprep.subr.bf16.mxu0 0
      %2545 = vmatpush1.bf16.msra.mxu0 0
      %2546 = vmatprep.subr.bf16.mxu0 0
      %2547 = vmatpush1.bf16.msra.mxu0 0
      %2548 = vmatprep.subr.bf16.mxu0 0
      %2549 = vmatpush1.bf16.msra.mxu0 0
      %2550 = vmatprep.subr.bf16.mxu0 0
      %2551 = vmatpush1.bf16.msra.mxu0 0
      %2552 = vmatprep.subr.bf16.mxu0 0
      %2553 = vmatpush1.bf16.msra.mxu0 0
      %2554 = vmatprep.subr.bf16.mxu0 0
      %2555 = vmatpush1.bf16.msra.mxu0 0
      %2556 = vmatprep.subr.bf16.mxu0 0
      %2557 = vmatpush1.bf16.msra.mxu0 0
      %2558 = vmatprep.subr.bf16.mxu0 0
      %2559 = vmatpush1.bf16.msra.mxu0 0
      %2560 = vmatprep.subr.bf16.mxu0 0
      %2561 = vmatpush1.bf16.msra.mxu0 0
      %2562 = vmatprep.subr.bf16.mxu0 0
      %2563 = vmatpush1.bf16.msra.mxu0 0
      %2564 = vmatprep.subr.bf16.mxu0 0
      %2565 = vmatpush1.bf16.msra.mxu0 0
      %2566 = vmatprep.subr.bf16.mxu0 0
      %2567 = vmatpush1.bf16.msra.mxu0 0
      %2568 = vmatprep.subr.bf16.mxu0 0
      %2569 = vmatpush1.bf16.msra.mxu0 0
      %2570 = vmatprep.mubr.bf16.mxu0 0
      %2571 = vmatmul.mubr.bf16.gmra.mrb[0].mxu0 %v2086
      %v2572 = vpop.f32.mrb[0].mxu0
      %v2573 = vadd.f32 0.0, %v2572
      %v2574 = vpop.f32.mrb[0].mxu0
      %v2575 = vpop.f32.mrb[0].mxu0
      %v2576 = vadd.f32 0.0, %v2575
      %v2577 = vpop.f32.mrb[0].mxu0
      %2578 = vmatprep.mubr.bf16.mxu0 0
      %2579 = vmatmul.mubr.bf16.gmra.mrb[0].mxu0 %v2088
      %v2580 = vpop.f32.mrb[0].mxu0
      %v2581 = vadd.f32 0.0, %v2580
      %v2582 = vpop.f32.mrb[0].mxu0
      %v2583 = vpop.f32.mrb[0].mxu0
      %v2584 = vadd.f32 0.0, %v2583
      %v2585 = vpop.f32.mrb[0].mxu0
      %2586 = vmatprep.mubr.bf16.mxu0 0
      %2587 = vmatmul.mubr.bf16.gmra.mrb[0].mxu0 %v2090
      %v2588 = vpop.f32.mrb[0].mxu0
      %v2589 = vadd.f32 0.0, %v2588
      %v2590 = vpop.f32.mrb[0].mxu0
      %v2591 = vpop.f32.mrb[0].mxu0
      %v2592 = vadd.f32 0.0, %v2591
      %v2593 = vpop.f32.mrb[0].mxu0
      %2594 = vmatprep.mubr.bf16.mxu0 0
      %2595 = vmatmul.mubr.bf16.gmra.mrb[0].mxu0 %v2092
      %v2596 = vpop.f32.mrb[0].mxu0
      %v2597 = vadd.f32 0.0, %v2596
      %v2598 = vpop.f32.mrb[0].mxu0
      %v2599 = vpop.f32.mrb[0].mxu0
      %v2600 = vadd.f32 0.0, %v2599
      %v2601 = vpop.f32.mrb[0].mxu0
      %2602 = vmatprep.mubr.bf16.mxu0 0
      %2603 = vmatmul.mubr.bf16.gmra.mrb[0].mxu0 %v2094
      %v2604 = vpop.f32.mrb[0].mxu0
      %v2605 = vadd.f32 0.0, %v2604
      %v2606 = vpop.f32.mrb[0].mxu0
      %v2607 = vpop.f32.mrb[0].mxu0
      %v2608 = vadd.f32 0.0, %v2607
      %v2609 = vpop.f32.mrb[0].mxu0
      %2610 = vmatprep.mubr.bf16.mxu0 0
      %2611 = vmatmul.mubr.bf16.gmra.mrb[0].mxu0 %v2096
      %v2612 = vpop.f32.mrb[0].mxu0
      %v2613 = vadd.f32 0.0, %v2612
      %v2614 = vpop.f32.mrb[0].mxu0
      %v2615 = vpop.f32.mrb[0].mxu0
      %v2616 = vadd.f32 0.0, %v2615
      %v2617 = vpop.f32.mrb[0].mxu0
      %2618 = vmatprep.mubr.bf16.mxu0 0
      %2619 = vmatmul.mubr.bf16.gmra.mrb[0].mxu0 %v2098
      %v2620 = vpop.f32.mrb[0].mxu0
      %v2621 = vadd.f32 0.0, %v2620
      %v2622 = vpop.f32.mrb[0].mxu0
      %v2623 = vpop.f32.mrb[0].mxu0
      %v2624 = vadd.f32 0.0, %v2623
      %v2625 = vpop.f32.mrb[0].mxu0
      %2626 = vmatprep.mubr.bf16.mxu0 0
      %2627 = vmatmul.mubr.bf16.gmra.mrb[0].mxu0 %v2100
      %v2628 = vpop.f32.mrb[0].mxu0
      %v2629 = vadd.f32 0.0, %v2628
      %v2630 = vpop.f32.mrb[0].mxu0
      %v2631 = vpop.f32.mrb[0].mxu0
      %v2632 = vadd.f32 0.0, %v2631
      %v2633 = vpop.f32.mrb[0].mxu0
      %2634 = vmatprep.mubr.bf16.mxu0 0
      %2635 = vmatmul.mubr.bf16.gmra.mrb[0].mxu0 %v2102
      %v2636 = vpop.f32.mrb[0].mxu0
      %v2637 = vadd.f32 0.0, %v2636
      %v2638 = vpop.f32.mrb[0].mxu0
      %v2639 = vpop.f32.mrb[0].mxu0
      %v2640 = vadd.f32 0.0, %v2639
      %v2641 = vpop.f32.mrb[0].mxu0
      %2642 = vmatprep.mubr.bf16.mxu0 0
      %2643 = vmatmul.mubr.bf16.gmra.mrb[0].mxu0 %v2104
      %v2644 = vpop.f32.mrb[0].mxu0
      %v2645 = vadd.f32 0.0, %v2644
      %v2646 = vpop.f32.mrb[0].mxu0
      %v2647 = vpop.f32.mrb[0].mxu0
      %v2648 = vadd.f32 0.0, %v2647
      %v2649 = vpop.f32.mrb[0].mxu0
      %2650 = vmatprep.mubr.bf16.mxu0 0
      %2651 = vmatmul.mubr.bf16.gmra.mrb[0].mxu0 %v2106
      %v2652 = vpop.f32.mrb[0].mxu0
      %v2653 = vadd.f32 0.0, %v2652
      %v2654 = vpop.f32.mrb[0].mxu0
      %v2655 = vpop.f32.mrb[0].mxu0
      %v2656 = vadd.f32 0.0, %v2655
      %v2657 = vpop.f32.mrb[0].mxu0
      %2658 = vmatprep.mubr.bf16.mxu0 0
      %2659 = vmatmul.mubr.bf16.gmra.mrb[0].mxu0 %v2108
      %v2660 = vpop.f32.mrb[0].mxu0
      %v2661 = vadd.f32 0.0, %v2660
      %v2662 = vpop.f32.mrb[0].mxu0
      %v2663 = vpop.f32.mrb[0].mxu0
      %v2664 = vadd.f32 0.0, %v2663
      %v2665 = vpop.f32.mrb[0].mxu0
      %2666 = vmatprep.mubr.bf16.mxu0 0
      %2667 = vmatmul.mubr.bf16.gmra.mrb[0].mxu0 %v2110
      %v2668 = vpop.f32.mrb[0].mxu0
      %v2669 = vadd.f32 0.0, %v2668
      %v2670 = vpop.f32.mrb[0].mxu0
      %v2671 = vpop.f32.mrb[0].mxu0
      %v2672 = vadd.f32 0.0, %v2671
      %v2673 = vpop.f32.mrb[0].mxu0
      %2674 = vmatprep.mubr.bf16.mxu0 0
      %2675 = vmatmul.mubr.bf16.gmra.mrb[0].mxu0 %v2112
      %v2676 = vpop.f32.mrb[0].mxu0
      %v2677 = vadd.f32 0.0, %v2676
      %v2678 = vpop.f32.mrb[0].mxu0
      %v2679 = vpop.f32.mrb[0].mxu0
      %v2680 = vadd.f32 0.0, %v2679
      %v2681 = vpop.f32.mrb[0].mxu0
      %2682 = vmatprep.mubr.bf16.mxu0 0
      %2683 = vmatmul.mubr.bf16.gmra.mrb[0].mxu0 %v2324
      %v2684 = vpop.f32.mrb[0].mxu0
      %v2685 = vadd.f32 0.0, %v2684
      %v2686 = vpop.f32.mrb[0].mxu0
      %v2687 = vpop.f32.mrb[0].mxu0
      %v2688 = vadd.f32 0.0, %v2687
      %v2689 = vpop.f32.mrb[0].mxu0
      %2690 = vmatprep.mubr.bf16.mxu0 0
      %2691 = vmatmul.mubr.bf16.gmra.mrb[0].mxu0 %v2082
      %v2692 = vpop.f32.mrb[0].mxu0
      %v2693 = vadd.f32 0.0, %v2692
      %v2694 = vpop.f32.mrb[0].mxu0
      %v2695 = vpop.f32.mrb[0].mxu0
      %v2696 = vadd.f32 0.0, %v2695
      %v2697 = vpop.f32.mrb[0].mxu0
      %2698 = vdwg.mxu0
      %v2699 = vadd.f32 %v2490, %v2573
      %v2700 = vadd.f32 %v2491, %v2576
      %v2701 = vadd.f32 %v2492, %v2581
      %v2702 = vadd.f32 %v2493, %v2584
      %v2703 = vadd.f32 %v2494, %v2589
      %v2704 = vadd.f32 %v2495, %v2592
      %v2705 = vadd.f32 %v2496, %v2597
      %v2706 = vadd.f32 %v2497, %v2600
      %v2707 = vadd.f32 %v2498, %v2605
      %v2708 = vadd.f32 %v2499, %v2608
      %v2709 = vadd.f32 %v2500, %v2613
      %v2710 = vadd.f32 %v2501, %v2616
      %v2711 = vadd.f32 %v2502, %v2621
      %v2712 = vadd.f32 %v2503, %v2624
      %v2713 = vadd.f32 %v2504, %v2629
      %v2714 = vadd.f32 %v2505, %v2632
      %v2715 = vadd.f32 %v2506, %v2637
      %v2716 = vadd.f32 %v2507, %v2640
      %v2717 = vadd.f32 %v2508, %v2645
      %v2718 = vadd.f32 %v2509, %v2648
      %v2719 = vadd.f32 %v2510, %v2653
      %v2720 = vadd.f32 %v2511, %v2656
      %v2721 = vadd.f32 %v2512, %v2661
      %v2722 = vadd.f32 %v2513, %v2664
      %v2723 = vadd.f32 %v2514, %v2669
      %v2724 = vadd.f32 %v2515, %v2672
      %v2725 = vadd.f32 %v2516, %v2677
      %v2726 = vadd.f32 %v2517, %v2680
      %v2727 = vadd.f32 %v2518, %v2685
      %v2728 = vadd.f32 %v2519, %v2688
      %v2729 = vadd.f32 %v2520, %v2693
      %v2730 = vadd.f32 %v2521, %v2696
      %v2731 = vmax.f32 %v2699, 0.0
      %v2732 = vmax.f32 %v2700, 0.0
      %v2733 = vmax.f32 %v2701, 0.0
      %v2734 = vmax.f32 %v2702, 0.0
      %v2735 = vmax.f32 %v2703, 0.0
      %v2736 = vmax.f32 %v2704, 0.0
      %v2737 = vmax.f32 %v2705, 0.0
      %v2738 = vmax.f32 %v2706, 0.0
      %v2739 = vmax.f32 %v2707, 0.0
      %v2740 = vmax.f32 %v2708, 0.0
      %v2741 = vmax.f32 %v2709, 0.0
      %v2742 = vmax.f32 %v2710, 0.0
      %v2743 = vmax.f32 %v2711, 0.0
      %v2744 = vmax.f32 %v2712, 0.0
      %v2745 = vmax.f32 %v2713, 0.0
      %v2746 = vmax.f32 %v2714, 0.0
      %v2747 = vmax.f32 %v2715, 0.0
      %v2748 = vmax.f32 %v2716, 0.0
      %v2749 = vmax.f32 %v2717, 0.0
      %v2750 = vmax.f32 %v2718, 0.0
      %v2751 = vmax.f32 %v2719, 0.0
      %v2752 = vmax.f32 %v2720, 0.0
      %v2753 = vmax.f32 %v2721, 0.0
      %v2754 = vmax.f32 %v2722, 0.0
      %v2755 = vmax.f32 %v2723, 0.0
      %v2756 = vmax.f32 %v2724, 0.0
      %v2757 = vmax.f32 %v2725, 0.0
      %v2758 = vmax.f32 %v2726, 0.0
      %v2759 = vmax.f32 %v2727, 0.0
      %v2760 = vmax.f32 %v2728, 0.0
      %v2761 = vmax.f32 %v2729, 0.0
      %v2762 = vmax.f32 %v2730, 0.0
      %v2763 = vpack.c.bf16 %v2732, %v2731
      %v2764 = vpack.c.bf16 %v2734, %v2733
      %v2765 = vpack.c.bf16 %v2736, %v2735
      %v2766 = vpack.c.bf16 %v2738, %v2737
      %v2767 = vpack.c.bf16 %v2740, %v2739
      %v2768 = vpack.c.bf16 %v2742, %v2741
      %v2769 = vpack.c.bf16 %v2744, %v2743
      %v2770 = vpack.c.bf16 %v2746, %v2745
      %v2771 = vpack.c.bf16 %v2748, %v2747
      %v2772 = vpack.c.bf16 %v2750, %v2749
      %v2773 = vpack.c.bf16 %v2752, %v2751
      %v2774 = vpack.c.bf16 %v2754, %v2753
      %v2775 = vpack.c.bf16 %v2756, %v2755
      %v2776 = vpack.c.bf16 %v2758, %v2757
      %v2777 = vpack.c.bf16 %v2760, %v2759
      %v2778 = vpack.c.bf16 %v2762, %v2761
      %v2795 = vunpack.c.l.b16 %v2763
      %v2796 = vunpack.c.h.b16 %v2763
      %v2797 = vunpack.c.l.b16 %v2764
      %v2798 = vunpack.c.h.b16 %v2764
      %v2799 = vunpack.c.l.b16 %v2765
      %v2800 = vunpack.c.h.b16 %v2765
      %v2801 = vunpack.c.l.b16 %v2766
      %v2802 = vunpack.c.h.b16 %v2766
      %v2803 = vunpack.c.l.b16 %v2767
      %v2804 = vunpack.c.h.b16 %v2767
      %v2805 = vunpack.c.l.b16 %v2768
      %v2806 = vunpack.c.h.b16 %v2768
      %v2807 = vunpack.c.l.b16 %v2769
      %v2808 = vunpack.c.h.b16 %v2769
      %v2809 = vunpack.c.l.b16 %v2770
      %v2810 = vunpack.c.h.b16 %v2770
      %v2811 = vunpack.c.l.b16 %v2771
      %v2812 = vunpack.c.h.b16 %v2771
      %v2813 = vunpack.c.l.b16 %v2772
      %v2814 = vunpack.c.h.b16 %v2772
      %v2815 = vunpack.c.l.b16 %v2773
      %v2816 = vunpack.c.h.b16 %v2773
      %v2817 = vunpack.c.l.b16 %v2774
      %v2818 = vunpack.c.h.b16 %v2774
      %v2819 = vunpack.c.l.b16 %v2775
      %v2820 = vunpack.c.h.b16 %v2775
      %v2821 = vunpack.c.l.b16 %v2776
      %v2822 = vunpack.c.h.b16 %v2776
      %v2823 = vunpack.c.l.b16 %v2777
      %v2824 = vunpack.c.h.b16 %v2777
      %v2825 = vunpack.c.l.b16 %v2778
      %v2826 = vunpack.c.h.b16 %v2778
      %v2827 = vpack.c.b16 %v2795, %v2795
      %v2828 = vpack.c.b16 %v2796, %v2796
      %v2829 = vpack.c.b16 %v2797, %v2797
      %v2830 = vpack.c.b16 %v2798, %v2798
      %v2831 = vpack.c.b16 %v2799, %v2799
      %v2832 = vpack.c.b16 %v2800, %v2800
      %v2833 = vpack.c.b16 %v2801, %v2801
      %v2834 = vpack.c.b16 %v2802, %v2802
      %v2835 = vpack.c.b16 %v2803, %v2803
      %v2836 = vpack.c.b16 %v2804, %v2804
      %v2837 = vpack.c.b16 %v2805, %v2805
      %v2838 = vpack.c.b16 %v2806, %v2806
      %v2839 = vpack.c.b16 %v2807, %v2807
      %v2840 = vpack.c.b16 %v2808, %v2808
      %v2841 = vpack.c.b16 %v2809, %v2809
      %v2842 = vpack.c.b16 %v2810, %v2810
      %v2843 = vpack.c.b16 %v2811, %v2811
      %v2844 = vpack.c.b16 %v2812, %v2812
      %v2845 = vpack.c.b16 %v2813, %v2813
      %v2846 = vpack.c.b16 %v2814, %v2814
      %v2847 = vpack.c.b16 %v2815, %v2815
      %v2848 = vpack.c.b16 %v2816, %v2816
      %v2849 = vpack.c.b16 %v2817, %v2817
      %v2850 = vpack.c.b16 %v2818, %v2818
      %v2851 = vpack.c.b16 %v2819, %v2819
      %v2852 = vpack.c.b16 %v2820, %v2820
      %v2853 = vpack.c.b16 %v2821, %v2821
      %v2854 = vpack.c.b16 %v2822, %v2822
      %v2855 = vpack.c.b16 %v2823, %v2823
      %v2856 = vpack.c.b16 %v2824, %v2824
      %v2857 = vpack.c.b16 %v2825, %v2825
      %v2858 = vpack.c.b16 %v2826, %v2826
      %vm2891 = vcmask 60416
      %2892 = vst.msk [vmem:[%s278] sm:$0xf] %vm2891, %v2827
      %2893 = vst.msk [vmem:[%s278 + $0x4] sm:$0xf] %vm2891, %v2828
      %2894 = vst.msk [vmem:[%s278 + $0x8] sm:$0xf] %vm2891, %v2829
      %2895 = vst.msk [vmem:[%s278 + $0xc] sm:$0xf] %vm2891, %v2830
      %2896 = vst.msk [vmem:[%s278 + $0x10] sm:$0xf] %vm2891, %v2831
      %2897 = vst.msk [vmem:[%s278 + $0x14] sm:$0xf] %vm2891, %v2832
      %2898 = vst.msk [vmem:[%s278 + $0x18] sm:$0xf] %vm2891, %v2833
      %2899 = vst.msk [vmem:[%s278 + $0x1c] sm:$0xf] %vm2891, %v2834
      %2900 = vst.msk [vmem:[%s278 + $0x20] sm:$0xf] %vm2891, %v2835
      %2901 = vst.msk [vmem:[%s278 + $0x24] sm:$0xf] %vm2891, %v2836
      %2902 = vst.msk [vmem:[%s278 + $0x28] sm:$0xf] %vm2891, %v2837
      %2903 = vst.msk [vmem:[%s278 + $0x2c] sm:$0xf] %vm2891, %v2838
      %2904 = vst.msk [vmem:[%s278 + $0x30] sm:$0xf] %vm2891, %v2839
      %2905 = vst.msk [vmem:[%s278 + $0x34] sm:$0xf] %vm2891, %v2840
      %2906 = vst.msk [vmem:[%s278 + $0x38] sm:$0xf] %vm2891, %v2841
      %2907 = vst.msk [vmem:[%s278 + $0x3c] sm:$0xf] %vm2891, %v2842
      %2908 = vst.msk [vmem:[%s278 + $0x40] sm:$0xf] %vm2891, %v2843
      %2909 = vst.msk [vmem:[%s278 + $0x44] sm:$0xf] %vm2891, %v2844
      %2910 = vst.msk [vmem:[%s278 + $0x48] sm:$0xf] %vm2891, %v2845
      %2911 = vst.msk [vmem:[%s278 + $0x4c] sm:$0xf] %vm2891, %v2846
      %2912 = vst.msk [vmem:[%s278 + $0x50] sm:$0xf] %vm2891, %v2847
      %2913 = vst.msk [vmem:[%s278 + $0x54] sm:$0xf] %vm2891, %v2848
      %2914 = vst.msk [vmem:[%s278 + $0x58] sm:$0xf] %vm2891, %v2849
      %2915 = vst.msk [vmem:[%s278 + $0x5c] sm:$0xf] %vm2891, %v2850
      %2916 = vst.msk [vmem:[%s278 + $0x60] sm:$0xf] %vm2891, %v2851
      %2917 = vst.msk [vmem:[%s278 + $0x64] sm:$0xf] %vm2891, %v2852
      %2918 = vst.msk [vmem:[%s278 + $0x68] sm:$0xf] %vm2891, %v2853
      %2919 = vst.msk [vmem:[%s278 + $0x6c] sm:$0xf] %vm2891, %v2854
      %2920 = vst.msk [vmem:[%s278 + $0x70] sm:$0xf] %vm2891, %v2855
      %2921 = vst.msk [vmem:[%s278 + $0x74] sm:$0xf] %vm2891, %v2856
      %2922 = vst.msk [vmem:[%s278 + $0x78] sm:$0xf] %vm2891, %v2857
      %2923 = vst.msk [vmem:[%s278 + $0x7c] sm:$0xf] %vm2891, %v2858
      %s2924 = smul.u32 32, %s18
      %p2925 = scmp.lt.s32.totalorder %s2924, 63
      %s2926 = scalar_select %p2925, %s2924, 63
      %s2927 = smul.addr %s2926, 4
      %s2928 = scalar_lea.vmem %s7, %s2927
      // Predicated region
      $region49: #{tpu_custom_call.1} parent=47 // pred_check
        %p2929 = pneg %p188
      $region50: #{tpu_custom_call.1} parent=47 // pred_check_branch
        %2931 = sbr.rel (%p2929) target = $region52
      $region51: #{tpu_custom_call.1} parent=47 // pred_region
        %s2932 = smul.u32 32, %s18
      $region52: #{tpu_custom_call.1} parent=47 // pred_fallthru
        _
    $region48: #{tpu_custom_call.1} parent=5 // pred_fallthru
      _
    %p2933 = scmp.le.s32.totalorder 2, %s13
    // Predicated region
    $region53: #{tpu_custom_call.1} parent=5 // pred_check
      %p2934 = pneg %p2933
    $region54: #{tpu_custom_call.1} parent=5 // pred_check_branch
      %2936 = sbr.rel (%p2934) target = $region56
    $region55: #{tpu_custom_call.1} parent=5 // pred_region
      %s2937 = ssub.s32 %s13, 2
      // Predicated region
      $region57: #{tpu_custom_call.1} parent=55 // pred_check
        %p2938 = pneg %p194
      $region58: #{tpu_custom_call.1} parent=55 // pred_check_branch
        %2940 = sbr.rel (%p2938) target = $region60
      $region59: #{tpu_custom_call.1} parent=55 // pred_region
        %s2941 = smul.u32 32, %s19
        %p2942 = scmp.lt.s32.totalorder %s2941, 63
        %s2943 = scalar_select %p2942, %s2941, 63
        %s2944 = smul.addr %s2943, 4
        %s2945 = scalar_lea.vmem %s7, %s2944
      $region60: #{tpu_custom_call.1} parent=55 // pred_fallthru
        _
    $region56: #{tpu_custom_call.1} parent=5 // pred_fallthru
      _
  $region6: #{tpu_custom_call.1} parent=0 // loop_footer
    %s17 = sadd.s32 1, %s13
  $region7: #{tpu_custom_call.1} parent=0 // loop_footer_branch
    %12 = sbr.rel target = $region3
  $region8: #{tpu_custom_call.1} parent=0 // loop_exit
    _

// kernel: tpu_custom_call.1
$region0: #{tpu_custom_call.1}
  #allocation0 [shape = 'u32[]', space=smem, size = 0x4, offset = 0x4, fixed_abs, tag = 'smem constant byte address 0x4 - core index']
  #allocation1 [shape = 'u32[144,128]{1,0:T(1,128)}', space=vmem, size = 0x12000, scoped, tag = 'internal scratch']
  %s0 = inlined_call_operand.vmem [shape: bf16[2,16,16,4], index: 0, kind: input, shape index: {}]
  %s1 = inlined_call_operand.vmem [shape: bf16[3,12,8], index: 1, kind: input, shape index: {}]
  %s2 = inlined_call_operand.vmem [shape: f32[1,8], index: 2, kind: input, shape index: {}]
  %s3 = inlined_call_operand.vmem [shape: bf16[3,24,8], index: 3, kind: input, shape index: {}]
  %s4 = inlined_call_operand.vmem [shape: f32[1,8], index: 4, kind: input, shape index: {}]
  %s5 = inlined_call_operand.vmem [shape: bf16[4,8], index: 5, kind: input, shape index: {}]
  %s6 = inlined_call_operand.vmem [shape: f32[1,8], index: 6, kind: input, shape index: {}]
  %s7 = inlined_call_operand.vmem [shape: bf16[512,8], index: 7, kind: output, shape index: {}]
  %s8 = sld [smem:[#allocation0]]
  $region61: #{tpu_custom_call.1} parent=0
    _
  %s10 = ssub.s32 1, %s8
  %s11 = scalar_select 0, %s10, %s8
  loop: start=0, step=1, limit=4
  $region2: #{tpu_custom_call.1} parent=0 // loop_pre_header
    _
  $region3: #{tpu_custom_call.1} parent=0 // loop_header
    %s13 = sphi 0, %s17
    %p14 = scmp.ge.s32.totalorder %s13, 4
    %s23 = sphi 0, %s25
    %s26 = sphi 0, %s23
    %s27 = sphi 0, %s26
    %s43 = sphi 0, %s27
    %s47 = sphi 0, %s47
    %s49 = sphi 0, %s47
    %s50 = sphi 0, %s49
    %s64 = sphi 0, %s50
    %s68 = sphi 0, %s68
    %s70 = sphi 0, %s68
    %s71 = sphi 0, %s70
    %s85 = sphi 0, %s71
    %s89 = sphi 0, %s89
    %s91 = sphi 0, %s89
    %s92 = sphi 0, %s91
    %s106 = sphi 0, %s92
    %s110 = sphi 0, %s110
    %s112 = sphi 0, %s110
    %s113 = sphi 0, %s112
    %s127 = sphi 0, %s113
    %s131 = sphi 0, %s131
    %s133 = sphi 0, %s131
    %s134 = sphi 0, %s133
    %s148 = sphi 0, %s134
    %s152 = sphi 0, %s152
    %s154 = sphi 0, %s152
    %s155 = sphi 0, %s154
    %s169 = sphi 0, %s155
    %s175 = sphi 0, %s177
    %s178 = sphi 0, %s175
    %s179 = sphi 0, %s178
    %s195 = sphi 0, %s179
  $region4: #{tpu_custom_call.1} parent=0 // loop_header_branch
    %16 = sbr.rel (%p14) target = $region8
  $region5: #{tpu_custom_call.1} parent=0 // loop_body
    %s18 = ssub.s32 %s13, 1
    %s19 = ssub.s32 %s13, 2
    %s20 = sadd.s32 %s13, 1
    %s21 = ssub.s32 %s13, %s20
    %p22 = scmp.eq.s32.totalorder %s21, 0
    %s24 = sadd.s32 %s23, 1
    %s25 = scalar_select %p22, %s23, %s24
    %p28 = pneg %p22
    %p29 = scmp.eq.s32.totalorder %s13, 1
    %p30 = por %p28, %p29
    %p31 = scmp.ne.s32.totalorder %s23, %s26
    %p32 = scmp.eq.s32.totalorder %s13, 0
    %p33 = por %p31, %p32
    %p34 = scmp.ne.s32.totalorder %s23, %s26
    %p35 = scmp.eq.s32.totalorder %s18, 1
    %p36 = por %p34, %p35
    %p37 = scmp.ne.s32.totalorder %s26, %s27
    %p38 = scmp.eq.s32.totalorder %s18, 0
    %p39 = por %p37, %p38
    %p40 = scmp.ne.s32.totalorder %s26, %s27
    %p41 = scmp.eq.s32.totalorder %s19, 1
    %p42 = por %p40, %p41
    %p44 = scmp.ne.s32.totalorder %s27, %s43
    %p45 = scmp.eq.s32.totalorder %s19, 0
    %p46 = por %p44, %p45
    %s48 = sadd.s32 %s47, 1
    %p51 = scmp.eq.s32.totalorder %s13, 1
    %p52 = scmp.ne.s32.totalorder %s47, %s49
    %p53 = scmp.eq.s32.totalorder %s13, 0
    %p54 = por %p52, %p53
    %p55 = scmp.ne.s32.totalorder %s47, %s49
    %p56 = scmp.eq.s32.totalorder %s18, 1
    %p57 = por %p55, %p56
    %p58 = scmp.ne.s32.totalorder %s49, %s50
    %p59 = scmp.eq.s32.totalorder %s18, 0
    %p60 = por %p58, %p59
    %p61 = scmp.ne.s32.totalorder %s49, %s50
    %p62 = scmp.eq.s32.totalorder %s19, 1
    %p63 = por %p61, %p62
    %p65 = scmp.ne.s32.totalorder %s50, %s64
    %p66 = scmp.eq.s32.totalorder %s19, 0
    %p67 = por %p65, %p66
    %s69 = sadd.s32 %s68, 1
    %p72 = scmp.eq.s32.totalorder %s13, 1
    %p73 = scmp.ne.s32.totalorder %s68, %s70
    %p74 = scmp.eq.s32.totalorder %s13, 0
    %p75 = por %p73, %p74
    %p76 = scmp.ne.s32.totalorder %s68, %s70
    %p77 = scmp.eq.s32.totalorder %s18, 1
    %p78 = por %p76, %p77
    %p79 = scmp.ne.s32.totalorder %s70, %s71
    %p80 = scmp.eq.s32.totalorder %s18, 0
    %p81 = por %p79, %p80
    %p82 = scmp.ne.s32.totalorder %s70, %s71
    %p83 = scmp.eq.s32.totalorder %s19, 1
    %p84 = por %p82, %p83
    %p86 = scmp.ne.s32.totalorder %s71, %s85
    %p87 = scmp.eq.s32.totalorder %s19, 0
    %p88 = por %p86, %p87
    %s90 = sadd.s32 %s89, 1
    %p93 = scmp.eq.s32.totalorder %s13, 1
    %p94 = scmp.ne.s32.totalorder %s89, %s91
    %p95 = scmp.eq.s32.totalorder %s13, 0
    %p96 = por %p94, %p95
    %p97 = scmp.ne.s32.totalorder %s89, %s91
    %p98 = scmp.eq.s32.totalorder %s18, 1
    %p99 = por %p97, %p98
    %p100 = scmp.ne.s32.totalorder %s91, %s92
    %p101 = scmp.eq.s32.totalorder %s18, 0
    %p102 = por %p100, %p101
    %p103 = scmp.ne.s32.totalorder %s91, %s92
    %p104 = scmp.eq.s32.totalorder %s19, 1
    %p105 = por %p103, %p104
    %p107 = scmp.ne.s32.totalorder %s92, %s106
    %p108 = scmp.eq.s32.totalorder %s19, 0
    %p109 = por %p107, %p108
    %s111 = sadd.s32 %s110, 1
    %p114 = scmp.eq.s32.totalorder %s13, 1
    %p115 = scmp.ne.s32.totalorder %s110, %s112
    %p116 = scmp.eq.s32.totalorder %s13, 0
    %p117 = por %p115, %p116
    %p118 = scmp.ne.s32.totalorder %s110, %s112
    %p119 = scmp.eq.s32.totalorder %s18, 1
    %p120 = por %p118, %p119
    %p121 = scmp.ne.s32.totalorder %s112, %s113
    %p122 = scmp.eq.s32.totalorder %s18, 0
    %p123 = por %p121, %p122
    %p124 = scmp.ne.s32.totalorder %s112, %s113
    %p125 = scmp.eq.s32.totalorder %s19, 1
    %p126 = por %p124, %p125
    %p128 = scmp.ne.s32.totalorder %s113, %s127
    %p129 = scmp.eq.s32.totalorder %s19, 0
    %p130 = por %p128, %p129
    %s132 = sadd.s32 %s131, 1
    %p135 = scmp.eq.s32.totalorder %s13, 1
    %p136 = scmp.ne.s32.totalorder %s131, %s133
    %p137 = scmp.eq.s32.totalorder %s13, 0
    %p138 = por %p136, %p137
    %p139 = scmp.ne.s32.totalorder %s131, %s133
    %p140 = scmp.eq.s32.totalorder %s18, 1
    %p141 = por %p139, %p140
    %p142 = scmp.ne.s32.totalorder %s133, %s134
    %p143 = scmp.eq.s32.totalorder %s18, 0
    %p144 = por %p142, %p143
    %p145 = scmp.ne.s32.totalorder %s133, %s134
    %p146 = scmp.eq.s32.totalorder %s19, 1
    %p147 = por %p145, %p146
    %p149 = scmp.ne.s32.totalorder %s134, %s148
    %p150 = scmp.eq.s32.totalorder %s19, 0
    %p151 = por %p149, %p150
    %s153 = sadd.s32 %s152, 1
    %p156 = scmp.eq.s32.totalorder %s13, 1
    %p157 = scmp.ne.s32.totalorder %s152, %s154
    %p158 = scmp.eq.s32.totalorder %s13, 0
    %p159 = por %p157, %p158
    %p160 = scmp.ne.s32.totalorder %s152, %s154
    %p161 = scmp.eq.s32.totalorder %s18, 1
    %p162 = por %p160, %p161
    %p163 = scmp.ne.s32.totalorder %s154, %s155
    %p164 = scmp.eq.s32.totalorder %s18, 0
    %p165 = por %p163, %p164
    %p166 = scmp.ne.s32.totalorder %s154, %s155
    %p167 = scmp.eq.s32.totalorder %s19, 1
    %p168 = por %p166, %p167
    %p170 = scmp.ne.s32.totalorder %s155, %s169
    %p171 = scmp.eq.s32.totalorder %s19, 0
    %p172 = por %p170, %p171
    %s173 = ssub.s32 %s13, %s20
    %p174 = scmp.eq.s32.totalorder %s173, 0
    %s176 = sadd.s32 %s175, 1
    %s177 = scalar_select %p174, %s175, %s176
    %p180 = pneg %p174
    %p181 = scmp.eq.s32.totalorder %s13, 1
    %p182 = por %p180, %p181
    %p183 = scmp.ne.s32.totalorder %s175, %s178
    %p184 = scmp.eq.s32.totalorder %s13, 0
    %p185 = por %p183, %p184
    %p186 = scmp.ne.s32.totalorder %s175, %s178
    %p187 = scmp.eq.s32.totalorder %s18, 1
    %p188 = por %p186, %p187
    %p189 = scmp.ne.s32.totalorder %s178, %s179
    %p190 = scmp.eq.s32.totalorder %s18, 0
    %p191 = por %p189, %p190
    %p192 = scmp.ne.s32.totalorder %s178, %s179
    %p193 = scmp.eq.s32.totalorder %s19, 1
    %p194 = por %p192, %p193
    %p196 = scmp.ne.s32.totalorder %s179, %s195
    %p197 = scmp.eq.s32.totalorder %s19, 0
    %p198 = por %p196, %p197
    %p199 = scmp.le.s32.totalorder 1, %s13
    %p200 = scmp.lt.s32.totalorder %s13, 3
    %p201 = pnand %p199, %p200
    %p202 = pneg %p201
    // Predicated region
    $region9: #{tpu_custom_call.1} parent=5 // pred_check
      _
    $region10: #{tpu_custom_call.1} parent=5 // pred_check_branch
      %204 = sbr.rel (%p201) target = $region12
    $region11: #{tpu_custom_call.1} parent=5 // pred_region
      %s205 = ssub.s32 %s13, 1
      // Predicated region
      $region13: #{tpu_custom_call.1} parent=11 // pred_check
        %p206 = pneg %p60
      $region14: #{tpu_custom_call.1} parent=11 // pred_check_branch
        %208 = sbr.rel (%p206) target = $region16
      $region15: #{tpu_custom_call.1} parent=11 // pred_region
        _
      $region16: #{tpu_custom_call.1} parent=11 // pred_fallthru
        _
      // Predicated region
      $region17: #{tpu_custom_call.1} parent=11 // pred_check
        %p209 = pneg %p81
      $region18: #{tpu_custom_call.1} parent=11 // pred_check_branch
        %211 = sbr.rel (%p209) target = $region20
      $region19: #{tpu_custom_call.1} parent=11 // pred_region
        _
      $region20: #{tpu_custom_call.1} parent=11 // pred_fallthru
        _
      // Predicated region
      $region21: #{tpu_custom_call.1} parent=11 // pred_check
        %p212 = pneg %p102
      $region22: #{tpu_custom_call.1} parent=11 // pred_check_branch
        %214 = sbr.rel (%p212) target = $region24
      $region23: #{tpu_custom_call.1} parent=11 // pred_region
        _
      $region24: #{tpu_custom_call.1} parent=11 // pred_fallthru
        _
      // Predicated region
      $region25: #{tpu_custom_call.1} parent=11 // pred_check
        %p215 = pneg %p123
      $region26: #{tpu_custom_call.1} parent=11 // pred_check_branch
        %217 = sbr.rel (%p215) target = $region28
      $region27: #{tpu_custom_call.1} parent=11 // pred_region
        _
      $region28: #{tpu_custom_call.1} parent=11 // pred_fallthru
        _
      // Predicated region
      $region29: #{tpu_custom_call.1} parent=11 // pred_check
        %p218 = pneg %p144
      $region30: #{tpu_custom_call.1} parent=11 // pred_check_branch
        %220 = sbr.rel (%p218) target = $region32
      $region31: #{tpu_custom_call.1} parent=11 // pred_region
        _
      $region32: #{tpu_custom_call.1} parent=11 // pred_fallthru
        _
      // Predicated region
      $region33: #{tpu_custom_call.1} parent=11 // pred_check
        %p221 = pneg %p165
      $region34: #{tpu_custom_call.1} parent=11 // pred_check_branch
        %223 = sbr.rel (%p221) target = $region36
      $region35: #{tpu_custom_call.1} parent=11 // pred_region
        _
      $region36: #{tpu_custom_call.1} parent=11 // pred_fallthru
        _
    $region12: #{tpu_custom_call.1} parent=5 // pred_fallthru
      _
    %p224 = scmp.lt.s32.totalorder %s13, 2
    // Predicated region
    $region37: #{tpu_custom_call.1} parent=5 // pred_check
      %p225 = pneg %p224
    $region38: #{tpu_custom_call.1} parent=5 // pred_check_branch
      %227 = sbr.rel (%p225) target = $region40
    $region39: #{tpu_custom_call.1} parent=5 // pred_region
      // Predicated region
      $region41: #{tpu_custom_call.1} parent=39 // pred_check
        %p228 = pneg %p33
      $region42: #{tpu_custom_call.1} parent=39 // pred_check_branch
        %230 = sbr.rel (%p228) target = $region44
      $region43: #{tpu_custom_call.1} parent=39 // pred_region
        %p231 = scmp.lt.s32.totalorder %s13, 1
        %s232 = scalar_select %p231, %s13, 1
        %s233 = smul.addr %s232, 32
        %s234 = smul.addr %s233, 4
        %s235 = scalar_lea.vmem %s0, %s234
      $region44: #{tpu_custom_call.1} parent=39 // pred_fallthru
        _
    $region40: #{tpu_custom_call.1} parent=5 // pred_fallthru
      _
    %p236 = scmp.le.s32.totalorder 1, %s13
    %p237 = scmp.lt.s32.totalorder %s13, 3
    %p238 = pnand %p236, %p237
    %p239 = pneg %p238
    // Predicated region
    $region45: #{tpu_custom_call.1} parent=5 // pred_check
      _
    $region46: #{tpu_custom_call.1} parent=5 // pred_check_branch
      %241 = sbr.rel (%p238) target = $region48
    $region47: #{tpu_custom_call.1} parent=5 // pred_region
      %s242 = ssub.s32 %s13, 1
      %p243 = scmp.lt.s32.totalorder %s18, 1
      %s244 = scalar_select %p243, %s18, 1
      %s245 = smul.addr %s244, 32
      %s246 = smul.addr %s245, 4
      %s247 = scalar_lea.vmem %s0, %s246
      %p248 = pneg %p39
      %p249 = pneg %p36
      %p250 = pneg %p60
      %p251 = pneg %p57
      %p252 = pneg %p81
      %p253 = pneg %p78
      %p254 = pneg %p102
      %p255 = pneg %p99
      %p256 = pneg %p123
      %p257 = pneg %p120
      %p258 = pneg %p144
      %p259 = pneg %p141
      %p260 = pneg %p165
      %p261 = pneg %p162
      %p262 = pneg %p191
      %p263 = pneg %p188
      %s264 = smul.u32 32, %s18
      %p265 = scmp.lt.s32.totalorder %s264, 63
      %s266 = scalar_select %p265, %s264, 63
      %s267 = smul.addr %s266, 4
      %s268 = scalar_lea.vmem %s7, %s267
      %p269 = scmp.lt.s32.totalorder %s18, 1
      %s270 = scalar_select %p269, %s18, 1
      %s271 = smul.addr %s270, 32
      %s272 = smul.addr %s271, 4
      %s273 = scalar_lea.vmem %s0, %s272
      %s274 = smul.u32 32, %s18
      %p275 = scmp.lt.s32.totalorder %s274, 63
      %s276 = scalar_select %p275, %s274, 63
      %s277 = smul.addr %s276, 4
      %s278 = scalar_lea.vmem %s7, %s277
      %s279 = smul.u32 32, %s18
      %v281 = vld [vmem:[%s273] sm:$0xf]
      %v282 = vld [vmem:[%s273 + $0x4] sm:$0xf]
      %v283 = vld [vmem:[%s273 + $0x8] sm:$0xf]
      %v284 = vld [vmem:[%s273 + $0xc] sm:$0xf]
      %v285 = vld [vmem:[%s273 + $0x10] sm:$0xf]
      %v286 = vld [vmem:[%s273 + $0x14] sm:$0xf]
      %v287 = vld [vmem:[%s273 + $0x18] sm:$0xf]
      %v288 = vld [vmem:[%s273 + $0x1c] sm:$0xf]
      %v289 = vld [vmem:[%s273 + $0x20] sm:$0xf]
      %v290 = vld [vmem:[%s273 + $0x24] sm:$0xf]
      %v291 = vld [vmem:[%s273 + $0x28] sm:$0xf]
      %v292 = vld [vmem:[%s273 + $0x2c] sm:$0xf]
      %v293 = vld [vmem:[%s273 + $0x30] sm:$0xf]
      %v294 = vld [vmem:[%s273 + $0x34] sm:$0xf]
      %v295 = vld [vmem:[%s273 + $0x38] sm:$0xf]
      %v296 = vld [vmem:[%s273 + $0x3c] sm:$0xf]
      %v297 = vld [vmem:[%s273 + $0x40] sm:$0xf]
      %v298 = vld [vmem:[%s273 + $0x44] sm:$0xf]
      %v299 = vld [vmem:[%s273 + $0x48] sm:$0xf]
      %v300 = vld [vmem:[%s273 + $0x4c] sm:$0xf]
      %v301 = vld [vmem:[%s273 + $0x50] sm:$0xf]
      %v302 = vld [vmem:[%s273 + $0x54] sm:$0xf]
      %v303 = vld [vmem:[%s273 + $0x58] sm:$0xf]
      %v304 = vld [vmem:[%s273 + $0x5c] sm:$0xf]
      %v305 = vld [vmem:[%s273 + $0x60] sm:$0xf]
      %v306 = vld [vmem:[%s273 + $0x64] sm:$0xf]
      %v307 = vld [vmem:[%s273 + $0x68] sm:$0xf]
      %v308 = vld [vmem:[%s273 + $0x6c] sm:$0xf]
      %v309 = vld [vmem:[%s273 + $0x70] sm:$0xf]
      %v310 = vld [vmem:[%s273 + $0x74] sm:$0xf]
      %v311 = vld [vmem:[%s273 + $0x78] sm:$0xf]
      %v312 = vld [vmem:[%s273 + $0x7c] sm:$0xf]
      %v345 = vunpack.c.l.b16 %v281
      %v346 = vunpack.c.l.b16 %v282
      %v347 = vunpack.c.l.b16 %v283
      %v348 = vunpack.c.l.b16 %v284
      %v349 = vunpack.c.l.b16 %v285
      %v350 = vunpack.c.l.b16 %v286
      %v351 = vunpack.c.l.b16 %v287
      %v352 = vunpack.c.l.b16 %v288
      %v353 = vunpack.c.l.b16 %v289
      %v354 = vunpack.c.l.b16 %v290
      %v355 = vunpack.c.l.b16 %v291
      %v356 = vunpack.c.l.b16 %v292
      %v357 = vunpack.c.l.b16 %v293
      %v358 = vunpack.c.l.b16 %v294
      %v359 = vunpack.c.l.b16 %v295
      %v360 = vunpack.c.l.b16 %v296
      %v361 = vunpack.c.l.b16 %v297
      %v362 = vunpack.c.l.b16 %v298
      %v363 = vunpack.c.l.b16 %v299
      %v364 = vunpack.c.l.b16 %v300
      %v365 = vunpack.c.l.b16 %v301
      %v366 = vunpack.c.l.b16 %v302
      %v367 = vunpack.c.l.b16 %v303
      %v368 = vunpack.c.l.b16 %v304
      %v369 = vunpack.c.l.b16 %v305
      %v370 = vunpack.c.l.b16 %v306
      %v371 = vunpack.c.l.b16 %v307
      %v372 = vunpack.c.l.b16 %v308
      %v373 = vunpack.c.l.b16 %v309
      %v374 = vunpack.c.l.b16 %v310
      %v375 = vunpack.c.l.b16 %v311
      %v376 = vunpack.c.l.b16 %v312
      %v377 = vpack.c.b16 %v346, %v345
      %v378 = vpack.c.b16 %v348, %v347
      %v379 = vpack.c.b16 %v350, %v349
      %v380 = vpack.c.b16 %v352, %v351
      %v381 = vpack.c.b16 %v354, %v353
      %v382 = vpack.c.b16 %v356, %v355
      %v383 = vpack.c.b16 %v358, %v357
      %v384 = vpack.c.b16 %v360, %v359
      %v385 = vpack.c.b16 %v362, %v361
      %v386 = vpack.c.b16 %v364, %v363
      %v387 = vpack.c.b16 %v366, %v365
      %v388 = vpack.c.b16 %v368, %v367
      %v389 = vpack.c.b16 %v370, %v369
      %v390 = vpack.c.b16 %v372, %v371
      %v391 = vpack.c.b16 %v374, %v373
      %v392 = vpack.c.b16 %v376, %v375
      %v394 = vshrl.u32 %v377, 16
      %v396 = vrot.slane %v394, 7
      %v397 = vshll.u32 %v377, 16
      %v399 = vor.u32 %v396, %v397
      %v401 = vshrl.u32 %v378, 16
      %v403 = vrot.slane %v401, 7
      %v404 = vshll.u32 %v378, 16
      %v406 = vor.u32 %v403, %v404
      %v408 = vshrl.u32 %v379, 16
      %v410 = vrot.slane %v408, 7
      %v411 = vshll.u32 %v379, 16
      %v413 = vor.u32 %v410, %v411
      %v415 = vshrl.u32 %v380, 16
      %v417 = vrot.slane %v415, 7
      %v418 = vshll.u32 %v380, 16
      %v420 = vor.u32 %v417, %v418
      %v422 = vshrl.u32 %v381, 16
      %v424 = vrot.slane %v422, 7
      %v425 = vshll.u32 %v381, 16
      %v427 = vor.u32 %v424, %v425
      %v429 = vshrl.u32 %v382, 16
      %v431 = vrot.slane %v429, 7
      %v432 = vshll.u32 %v382, 16
      %v434 = vor.u32 %v431, %v432
      %v436 = vshrl.u32 %v383, 16
      %v438 = vrot.slane %v436, 7
      %v439 = vshll.u32 %v383, 16
      %v441 = vor.u32 %v438, %v439
      %v443 = vshrl.u32 %v384, 16
      %v445 = vrot.slane %v443, 7
      %v446 = vshll.u32 %v384, 16
      %v448 = vor.u32 %v445, %v446
      %v450 = vshrl.u32 %v385, 16
      %v452 = vrot.slane %v450, 7
      %v453 = vshll.u32 %v385, 16
      %v455 = vor.u32 %v452, %v453
      %v457 = vshrl.u32 %v386, 16
      %v459 = vrot.slane %v457, 7
      %v460 = vshll.u32 %v386, 16
      %v462 = vor.u32 %v459, %v460
      %v464 = vshrl.u32 %v387, 16
      %v466 = vrot.slane %v464, 7
      %v467 = vshll.u32 %v387, 16
      %v469 = vor.u32 %v466, %v467
      %v471 = vshrl.u32 %v388, 16
      %v473 = vrot.slane %v471, 7
      %v474 = vshll.u32 %v388, 16
      %v476 = vor.u32 %v473, %v474
      %v478 = vshrl.u32 %v389, 16
      %v480 = vrot.slane %v478, 7
      %v481 = vshll.u32 %v389, 16
      %v483 = vor.u32 %v480, %v481
      %v485 = vshrl.u32 %v390, 16
      %v487 = vrot.slane %v485, 7
      %v488 = vshll.u32 %v390, 16
      %v490 = vor.u32 %v487, %v488
      %v492 = vshrl.u32 %v391, 16
      %v494 = vrot.slane %v492, 7
      %v495 = vshll.u32 %v391, 16
      %v497 = vor.u32 %v494, %v495
      %v499 = vshrl.u32 %v392, 16
      %v501 = vrot.slane %v499, 7
      %v502 = vshll.u32 %v392, 16
      %v504 = vor.u32 %v501, %v502
      %vm521 = vcmask 1040384
      %vm522 = vsmask.f32 256
      %vm523 = vmand %vm521, %vm522
      %v524 = vsel %vm523, 0, %v399
      %v525 = vsel %vm523, 0, %v406
      %v526 = vsel %vm523, 0, %v413
      %v527 = vsel %vm523, 0, %v420
      %v528 = vsel %vm523, 0, %v427
      %v529 = vsel %vm523, 0, %v434
      %v530 = vsel %vm523, 0, %v441
      %v531 = vsel %vm523, 0, %v448
      %v532 = vsel %vm523, 0, %v455
      %v533 = vsel %vm523, 0, %v462
      %v534 = vsel %vm523, 0, %v469
      %v535 = vsel %vm523, 0, %v476
      %v536 = vsel %vm523, 0, %v483
      %v537 = vsel %vm523, 0, %v490
      %v538 = vsel %vm523, 0, %v497
      %v539 = vsel %vm523, 0, %v504
      %v540 = vrot.slane %v397, 1
      %v541 = vor.u32 %v394, %v540
      %v542 = vrot.slane %v404, 1
      %v543 = vor.u32 %v401, %v542
      %v544 = vrot.slane %v411, 1
      %v545 = vor.u32 %v408, %v544
      %v546 = vrot.slane %v418, 1
      %v547 = vor.u32 %v415, %v546
      %v548 = vrot.slane %v425, 1
      %v549 = vor.u32 %v422, %v548
      %v550 = vrot.slane %v432, 1
      %v551 = vor.u32 %v429, %v550
      %v552 = vrot.slane %v439, 1
      %v553 = vor.u32 %v436, %v552
      %v554 = vrot.slane %v446, 1
      %v555 = vor.u32 %v443, %v554
      %v556 = vrot.slane %v453, 1
      %v557 = vor.u32 %v450, %v556
      %v558 = vrot.slane %v460, 1
      %v559 = vor.u32 %v457, %v558
      %v560 = vrot.slane %v467, 1
      %v561 = vor.u32 %v464, %v560
      %v562 = vrot.slane %v474, 1
      %v563 = vor.u32 %v471, %v562
      %v564 = vrot.slane %v481, 1
      %v565 = vor.u32 %v478, %v564
      %v566 = vrot.slane %v488, 1
      %v567 = vor.u32 %v485, %v566
      %v568 = vrot.slane %v495, 1
      %v569 = vor.u32 %v492, %v568
      %v570 = vrot.slane %v502, 1
      %v571 = vor.u32 %v499, %v570
      %vm588 = vcmask 1047552
      %vm589 = vsmask.f32 7424
      %vm590 = vmand %vm588, %vm589
      %v591 = vsel %vm590, %v541, 0
      %v592 = vsel %vm590, %v543, 0
      %v593 = vsel %vm590, %v545, 0
      %v594 = vsel %vm590, %v547, 0
      %v595 = vsel %vm590, %v549, 0
      %v596 = vsel %vm590, %v551, 0
      %v597 = vsel %vm590, %v553, 0
      %v598 = vsel %vm590, %v555, 0
      %v599 = vsel %vm590, %v557, 0
      %v600 = vsel %vm590, %v559, 0
      %v601 = vsel %vm590, %v561, 0
      %v602 = vsel %vm590, %v563, 0
      %v603 = vsel %vm590, %v565, 0
      %v604 = vsel %vm590, %v567, 0
      %v605 = vsel %vm590, %v569, 0
      %v606 = vsel %vm590, %v571, 0
      %607 = vrot.lane.b32.xlu0 %v377, 4
      %v608 = vpop.permute.xlu0 %607
      %609 = vrot.lane.b32.xlu0 %v378, 4
      %v610 = vpop.permute.xlu0 %609
      %611 = vrot.lane.b32.xlu0 %v379, 4
      %v612 = vpop.permute.xlu0 %611
      %613 = vrot.lane.b32.xlu0 %v380, 4
      %v614 = vpop.permute.xlu0 %613
      %615 = vrot.lane.b32.xlu0 %v381, 4
      %v616 = vpop.permute.xlu0 %615
      %617 = vrot.lane.b32.xlu0 %v382, 4
      %v618 = vpop.permute.xlu0 %617
      %619 = vrot.lane.b32.xlu0 %v383, 4
      %v620 = vpop.permute.xlu0 %619
      %621 = vrot.lane.b32.xlu0 %v384, 4
      %v622 = vpop.permute.xlu0 %621
      %623 = vrot.lane.b32.xlu0 %v385, 4
      %v624 = vpop.permute.xlu0 %623
      %625 = vrot.lane.b32.xlu0 %v386, 4
      %v626 = vpop.permute.xlu0 %625
      %627 = vrot.lane.b32.xlu0 %v387, 4
      %v628 = vpop.permute.xlu0 %627
      %629 = vrot.lane.b32.xlu0 %v388, 4
      %v630 = vpop.permute.xlu0 %629
      %631 = vrot.lane.b32.xlu0 %v389, 4
      %v632 = vpop.permute.xlu0 %631
      %633 = vrot.lane.b32.xlu0 %v390, 4
      %v634 = vpop.permute.xlu0 %633
      %635 = vrot.lane.b32.xlu0 %v391, 4
      %v636 = vpop.permute.xlu0 %635
      %637 = vrot.lane.b32.xlu0 %v392, 4
      %v638 = vpop.permute.xlu0 %637
      %655 = vrot.lane.b32.xlu0 %v591, 8
      %v656 = vpop.permute.xlu0 %655
      %657 = vrot.lane.b32.xlu0 %v592, 8
      %v658 = vpop.permute.xlu0 %657
      %659 = vrot.lane.b32.xlu0 %v593, 8
      %v660 = vpop.permute.xlu0 %659
      %661 = vrot.lane.b32.xlu0 %v594, 8
      %v662 = vpop.permute.xlu0 %661
      %663 = vrot.lane.b32.xlu0 %v595, 8
      %v664 = vpop.permute.xlu0 %663
      %665 = vrot.lane.b32.xlu0 %v596, 8
      %v666 = vpop.permute.xlu0 %665
      %667 = vrot.lane.b32.xlu0 %v597, 8
      %v668 = vpop.permute.xlu0 %667
      %669 = vrot.lane.b32.xlu0 %v598, 8
      %v670 = vpop.permute.xlu0 %669
      %671 = vrot.lane.b32.xlu0 %v599, 8
      %v672 = vpop.permute.xlu0 %671
      %673 = vrot.lane.b32.xlu0 %v600, 8
      %v674 = vpop.permute.xlu0 %673
      %675 = vrot.lane.b32.xlu0 %v601, 8
      %v676 = vpop.permute.xlu0 %675
      %677 = vrot.lane.b32.xlu0 %v602, 8
      %v678 = vpop.permute.xlu0 %677
      %679 = vrot.lane.b32.xlu0 %v603, 8
      %v680 = vpop.permute.xlu0 %679
      %681 = vrot.lane.b32.xlu0 %v604, 8
      %v682 = vpop.permute.xlu0 %681
      %683 = vrot.lane.b32.xlu0 %v605, 8
      %v684 = vpop.permute.xlu0 %683
      %685 = vrot.lane.b32.xlu0 %v606, 8
      %v686 = vpop.permute.xlu0 %685
      %vm687 = vcmask 31744
      %v690 = vsel %vm687, %v524, %v608
      %v693 = vsel %vm687, %v525, %v610
      %v696 = vsel %vm687, %v526, %v612
      %v699 = vsel %vm687, %v527, %v614
      %v702 = vsel %vm687, %v528, %v616
      %v705 = vsel %vm687, %v529, %v618
      %v708 = vsel %vm687, %v530, %v620
      %v711 = vsel %vm687, %v531, %v622
      %v714 = vsel %vm687, %v532, %v624
      %v717 = vsel %vm687, %v533, %v626
      %v720 = vsel %vm687, %v534, %v628
      %v723 = vsel %vm687, %v535, %v630
      %v726 = vsel %vm687, %v536, %v632
      %v729 = vsel %vm687, %v537, %v634
      %v732 = vsel %vm687, %v538, %v636
      %v735 = vsel %vm687, %v539, %v638
      %vm736 = vcmask 64512
      %v738 = vsel %vm736, %v690, %v656
      %v740 = vsel %vm736, %v693, %v658
      %v742 = vsel %vm736, %v696, %v660
      %v744 = vsel %vm736, %v699, %v662
      %v746 = vsel %vm736, %v702, %v664
      %v748 = vsel %vm736, %v705, %v666
      %v750 = vsel %vm736, %v708, %v668
      %v752 = vsel %vm736, %v711, %v670
      %v754 = vsel %vm736, %v714, %v672
      %v756 = vsel %vm736, %v717, %v674
      %v758 = vsel %vm736, %v720, %v676
      %v760 = vsel %vm736, %v723, %v678
      %v762 = vsel %vm736, %v726, %v680
      %v764 = vsel %vm736, %v729, %v682
      %v766 = vsel %vm736, %v732, %v684
      %v768 = vsel %vm736, %v735, %v686
      %v769 = vld [vmem:[%s1] sm:$0xf]
      %v770 = vld [vmem:[%s1 + $0x4] sm:$0x3]
      %s771 = scalar_lea.vmem %s1, 8
      %v772 = vld [vmem:[%s771] sm:$0xf]
      %v773 = vld [vmem:[%s771 + $0x4] sm:$0x3]
      %v776 = vunpack.c.l.b16 %v772
      %v777 = vunpack.c.l.b16 %v773
      %v778 = vpack.c.b16 %v777, %v776
      %vm779 = vcmask 97280
      %v780 = vsel %vm779, %v738, 0
      %v782 = vsel %vm779, %v740, 0
      %v784 = vsel %vm779, %v742, 0
      %v786 = vsel %vm779, %v744, 0
      %v788 = vsel %vm779, %v746, 0
      %v790 = vsel %vm779, %v748, 0
      %v792 = vsel %vm779, %v750, 0
      %v794 = vsel %vm779, %v752, 0
      %v796 = vsel %vm779, %v754, 0
      %v798 = vsel %vm779, %v756, 0
      %v800 = vsel %vm779, %v758, 0
      %v802 = vsel %vm779, %v760, 0
      %v804 = vsel %vm779, %v762, 0
      %v806 = vsel %vm779, %v764, 0
      %v808 = vsel %vm779, %v766, 0
      %v810 = vsel %vm779, %v768, 0
      %vm812 = vcmask 1045504
      %v814 = vsel %vm812, %v778, 0
      %816 = vmatprep.subr.bf16.mxu0 0
      %817 = vmatpush1.bf16.msra.mxu0 %v814
      %818 = vmatprep.subr.bf16.mxu0 0
      %819 = vmatpush1.bf16.msra.mxu0 0
      %820 = vmatprep.subr.bf16.mxu0 0
      %821 = vmatpush1.bf16.msra.mxu0 0
      %822 = vmatprep.subr.bf16.mxu0 0
      %823 = vmatpush1.bf16.msra.mxu0 0
      %824 = vmatprep.subr.bf16.mxu0 0
      %825 = vmatpush1.bf16.msra.mxu0 0
      %826 = vmatprep.subr.bf16.mxu0 0
      %827 = vmatpush1.bf16.msra.mxu0 0
      %828 = vmatprep.subr.bf16.mxu0 0
      %829 = vmatpush1.bf16.msra.mxu0 0
      %830 = vmatprep.subr.bf16.mxu0 0
      %831 = vmatpush1.bf16.msra.mxu0 0
      %832 = vmatprep.subr.bf16.mxu0 0
      %833 = vmatpush1.bf16.msra.mxu0 0
      %834 = vmatprep.subr.bf16.mxu0 0
      %835 = vmatpush1.bf16.msra.mxu0 0
      %836 = vmatprep.subr.bf16.mxu0 0
      %837 = vmatpush1.bf16.msra.mxu0 0
      %838 = vmatprep.subr.bf16.mxu0 0
      %839 = vmatpush1.bf16.msra.mxu0 0
      %840 = vmatprep.subr.bf16.mxu0 0
      %841 = vmatpush1.bf16.msra.mxu0 0
      %842 = vmatprep.subr.bf16.mxu0 0
      %843 = vmatpush1.bf16.msra.mxu0 0
      %844 = vmatprep.subr.bf16.mxu0 0
      %845 = vmatpush1.bf16.msra.mxu0 0
      %846 = vmatprep.subr.bf16.mxu0 0
      %847 = vmatpush1.bf16.msra.mxu0 0
      %848 = vmatprep.mubr.bf16.mxu0 0
      %849 = vmatmul.mubr.bf16.gmra.mrb[0].mxu0 %v780
      %v850 = vpop.f32.mrb[0].mxu0
      %v851 = vadd.f32 0.0, %v850
      %v852 = vpop.f32.mrb[0].mxu0
      %v853 = vpop.f32.mrb[0].mxu0
      %v854 = vadd.f32 0.0, %v853
      %v855 = vpop.f32.mrb[0].mxu0
      %856 = vmatprep.mubr.bf16.mxu0 0
      %857 = vmatmul.mubr.bf16.gmra.mrb[0].mxu0 %v782
      %v858 = vpop.f32.mrb[0].mxu0
      %v859 = vadd.f32 0.0, %v858
      %v860 = vpop.f32.mrb[0].mxu0
      %v861 = vpop.f32.mrb[0].mxu0
      %v862 = vadd.f32 0.0, %v861
      %v863 = vpop.f32.mrb[0].mxu0
      %864 = vmatprep.mubr.bf16.mxu0 0
      %865 = vmatmul.mubr.bf16.gmra.mrb[0].mxu0 %v784
      %v866 = vpop.f32.mrb[0].mxu0
      %v867 = vadd.f32 0.0, %v866
      %v868 = vpop.f32.mrb[0].mxu0
      %v869 = vpop.f32.mrb[0].mxu0
      %v870 = vadd.f32 0.0, %v869
      %v871 = vpop.f32.mrb[0].mxu0
      %872 = vmatprep.mubr.bf16.mxu0 0
      %873 = vmatmul.mubr.bf16.gmra.mrb[0].mxu0 %v786
      %v874 = vpop.f32.mrb[0].mxu0
      %v875 = vadd.f32 0.0, %v874
      %v876 = vpop.f32.mrb[0].mxu0
      %v877 = vpop.f32.mrb[0].mxu0
      %v878 = vadd.f32 0.0, %v877
      %v879 = vpop.f32.mrb[0].mxu0
      %880 = vmatprep.mubr.bf16.mxu0 0
      %881 = vmatmul.mubr.bf16.gmra.mrb[0].mxu0 %v788
      %v882 = vpop.f32.mrb[0].mxu0
      %v883 = vadd.f32 0.0, %v882
      %v884 = vpop.f32.mrb[0].mxu0
      %v885 = vpop.f32.mrb[0].mxu0
      %v886 = vadd.f32 0.0, %v885
      %v887 = vpop.f32.mrb[0].mxu0
      %888 = vmatprep.mubr.bf16.mxu0 0
      %889 = vmatmul.mubr.bf16.gmra.mrb[0].mxu0 %v790
      %v890 = vpop.f32.mrb[0].mxu0
      %v891 = vadd.f32 0.0, %v890
      %v892 = vpop.f32.mrb[0].mxu0
      %v893 = vpop.f32.mrb[0].mxu0
      %v894 = vadd.f32 0.0, %v893
      %v895 = vpop.f32.mrb[0].mxu0
      %896 = vmatprep.mubr.bf16.mxu0 0
      %897 = vmatmul.mubr.bf16.gmra.mrb[0].mxu0 %v792
      %v898 = vpop.f32.mrb[0].mxu0
      %v899 = vadd.f32 0.0, %v898
      %v900 = vpop.f32.mrb[0].mxu0
      %v901 = vpop.f32.mrb[0].mxu0
      %v902 = vadd.f32 0.0, %v901
      %v903 = vpop.f32.mrb[0].mxu0
      %904 = vmatprep.mubr.bf16.mxu0 0
      %905 = vmatmul.mubr.bf16.gmra.mrb[0].mxu0 %v794
      %v906 = vpop.f32.mrb[0].mxu0
      %v907 = vadd.f32 0.0, %v906
      %v908 = vpop.f32.mrb[0].mxu0
      %v909 = vpop.f32.mrb[0].mxu0
      %v910 = vadd.f32 0.0, %v909
      %v911 = vpop.f32.mrb[0].mxu0
      %912 = vmatprep.mubr.bf16.mxu0 0
      %913 = vmatmul.mubr.bf16.gmra.mrb[0].mxu0 %v796
      %v914 = vpop.f32.mrb[0].mxu0
      %v915 = vadd.f32 0.0, %v914
      %v916 = vpop.f32.mrb[0].mxu0
      %v917 = vpop.f32.mrb[0].mxu0
      %v918 = vadd.f32 0.0, %v917
      %v919 = vpop.f32.mrb[0].mxu0
      %920 = vmatprep.mubr.bf16.mxu0 0
      %921 = vmatmul.mubr.bf16.gmra.mrb[0].mxu0 %v798
      %v922 = vpop.f32.mrb[0].mxu0
      %v923 = vadd.f32 0.0, %v922
      %v924 = vpop.f32.mrb[0].mxu0
      %v925 = vpop.f32.mrb[0].mxu0
      %v926 = vadd.f32 0.0, %v925
      %v927 = vpop.f32.mrb[0].mxu0
      %928 = vmatprep.mubr.bf16.mxu0 0
      %929 = vmatmul.mubr.bf16.gmra.mrb[0].mxu0 %v800
      %v930 = vpop.f32.mrb[0].mxu0
      %v931 = vadd.f32 0.0, %v930
      %v932 = vpop.f32.mrb[0].mxu0
      %v933 = vpop.f32.mrb[0].mxu0
      %v934 = vadd.f32 0.0, %v933
      %v935 = vpop.f32.mrb[0].mxu0
      %936 = vmatprep.mubr.bf16.mxu0 0
      %937 = vmatmul.mubr.bf16.gmra.mrb[0].mxu0 %v802
      %v938 = vpop.f32.mrb[0].mxu0
      %v939 = vadd.f32 0.0, %v938
      %v940 = vpop.f32.mrb[0].mxu0
      %v941 = vpop.f32.mrb[0].mxu0
      %v942 = vadd.f32 0.0, %v941
      %v943 = vpop.f32.mrb[0].mxu0
      %944 = vmatprep.mubr.bf16.mxu0 0
      %945 = vmatmul.mubr.bf16.gmra.mrb[0].mxu0 %v804
      %v946 = vpop.f32.mrb[0].mxu0
      %v947 = vadd.f32 0.0, %v946
      %v948 = vpop.f32.mrb[0].mxu0
      %v949 = vpop.f32.mrb[0].mxu0
      %v950 = vadd.f32 0.0, %v949
      %v951 = vpop.f32.mrb[0].mxu0
      %952 = vmatprep.mubr.bf16.mxu0 0
      %953 = vmatmul.mubr.bf16.gmra.mrb[0].mxu0 %v806
      %v954 = vpop.f32.mrb[0].mxu0
      %v955 = vadd.f32 0.0, %v954
      %v956 = vpop.f32.mrb[0].mxu0
      %v957 = vpop.f32.mrb[0].mxu0
      %v958 = vadd.f32 0.0, %v957
      %v959 = vpop.f32.mrb[0].mxu0
      %960 = vmatprep.mubr.bf16.mxu0 0
      %961 = vmatmul.mubr.bf16.gmra.mrb[0].mxu0 %v808
      %v962 = vpop.f32.mrb[0].mxu0
      %v963 = vadd.f32 0.0, %v962
      %v964 = vpop.f32.mrb[0].mxu0
      %v965 = vpop.f32.mrb[0].mxu0
      %v966 = vadd.f32 0.0, %v965
      %v967 = vpop.f32.mrb[0].mxu0
      %968 = vmatprep.mubr.bf16.mxu0 0
      %969 = vmatmul.mubr.bf16.gmra.mrb[0].mxu0 %v810
      %v970 = vpop.f32.mrb[0].mxu0
      %v971 = vadd.f32 0.0, %v970
      %v972 = vpop.f32.mrb[0].mxu0
      %v973 = vpop.f32.mrb[0].mxu0
      %v974 = vadd.f32 0.0, %v973
      %v975 = vpop.f32.mrb[0].mxu0
      %976 = vdwg.mxu0
      %v979 = vunpack.c.l.b16 %v769
      %v980 = vunpack.c.l.b16 %v770
      %v981 = vpack.c.b16 %v980, %v979
      %v983 = vsel %vm779, 0, 0
      %v986 = vsel %vm812, %v981, 0
      %988 = vmatprep.subr.bf16.mxu0 0
      %989 = vmatpush1.bf16.msra.mxu0 %v986
      %990 = vmatprep.subr.bf16.mxu0 0
      %991 = vmatpush1.bf16.msra.mxu0 0
      %992 = vmatprep.subr.bf16.mxu0 0
      %993 = vmatpush1.bf16.msra.mxu0 0
      %994 = vmatprep.subr.bf16.mxu0 0
      %995 = vmatpush1.bf16.msra.mxu0 0
      %996 = vmatprep.subr.bf16.mxu0 0
      %997 = vmatpush1.bf16.msra.mxu0 0
      %998 = vmatprep.subr.bf16.mxu0 0
      %999 = vmatpush1.bf16.msra.mxu0 0
      %1000 = vmatprep.subr.bf16.mxu0 0
      %1001 = vmatpush1.bf16.msra.mxu0 0
      %1002 = vmatprep.subr.bf16.mxu0 0
      %1003 = vmatpush1.bf16.msra.mxu0 0
      %1004 = vmatprep.subr.bf16.mxu0 0
      %1005 = vmatpush1.bf16.msra.mxu0 0
      %1006 = vmatprep.subr.bf16.mxu0 0
      %1007 = vmatpush1.bf16.msra.mxu0 0
      %1008 = vmatprep.subr.bf16.mxu0 0
      %1009 = vmatpush1.bf16.msra.mxu0 0
      %1010 = vmatprep.subr.bf16.mxu0 0
      %1011 = vmatpush1.bf16.msra.mxu0 0
      %1012 = vmatprep.subr.bf16.mxu0 0
      %1013 = vmatpush1.bf16.msra.mxu0 0
      %1014 = vmatprep.subr.bf16.mxu0 0
      %1015 = vmatpush1.bf16.msra.mxu0 0
      %1016 = vmatprep.subr.bf16.mxu0 0
      %1017 = vmatpush1.bf16.msra.mxu0 0
      %1018 = vmatprep.subr.bf16.mxu0 0
      %1019 = vmatpush1.bf16.msra.mxu0 0
      %1020 = vmatprep.mubr.bf16.mxu0 0
      %1021 = vmatmul.mubr.bf16.gmra.mrb[0].mxu0 %v983
      %v1022 = vpop.f32.mrb[0].mxu0
      %v1023 = vadd.f32 %v851, %v1022
      %v1024 = vpop.f32.mrb[0].mxu0
      %v1025 = vpop.f32.mrb[0].mxu0
      %v1026 = vadd.f32 %v854, %v1025
      %v1027 = vpop.f32.mrb[0].mxu0
      %1028 = vmatprep.mubr.bf16.mxu0 0
      %1029 = vmatmul.mubr.bf16.gmra.mrb[0].mxu0 %v780
      %v1030 = vpop.f32.mrb[0].mxu0
      %v1031 = vadd.f32 %v859, %v1030
      %v1032 = vpop.f32.mrb[0].mxu0
      %v1033 = vpop.f32.mrb[0].mxu0
      %v1034 = vadd.f32 %v862, %v1033
      %v1035 = vpop.f32.mrb[0].mxu0
      %1036 = vmatprep.mubr.bf16.mxu0 0
      %1037 = vmatmul.mubr.bf16.gmra.mrb[0].mxu0 %v782
      %v1038 = vpop.f32.mrb[0].mxu0
      %v1039 = vadd.f32 %v867, %v1038
      %v1040 = vpop.f32.mrb[0].mxu0
      %v1041 = vpop.f32.mrb[0].mxu0
      %v1042 = vadd.f32 %v870, %v1041
      %v1043 = vpop.f32.mrb[0].mxu0
      %1044 = vmatprep.mubr.bf16.mxu0 0
      %1045 = vmatmul.mubr.bf16.gmra.mrb[0].mxu0 %v784
      %v1046 = vpop.f32.mrb[0].mxu0
      %v1047 = vadd.f32 %v875, %v1046
      %v1048 = vpop.f32.mrb[0].mxu0
      %v1049 = vpop.f32.mrb[0].mxu0
      %v1050 = vadd.f32 %v878, %v1049
      %v1051 = vpop.f32.mrb[0].mxu0
      %1052 = vmatprep.mubr.bf16.mxu0 0
      %1053 = vmatmul.mubr.bf16.gmra.mrb[0].mxu0 %v786
      %v1054 = vpop.f32.mrb[0].mxu0
      %v1055 = vadd.f32 %v883, %v1054
      %v1056 = vpop.f32.mrb[0].mxu0
      %v1057 = vpop.f32.mrb[0].mxu0
      %v1058 = vadd.f32 %v886, %v1057
      %v1059 = vpop.f32.mrb[0].mxu0
      %1060 = vmatprep.mubr.bf16.mxu0 0
      %1061 = vmatmul.mubr.bf16.gmra.mrb[0].mxu0 %v788
      %v1062 = vpop.f32.mrb[0].mxu0
      %v1063 = vadd.f32 %v891, %v1062
      %v1064 = vpop.f32.mrb[0].mxu0
      %v1065 = vpop.f32.mrb[0].mxu0
      %v1066 = vadd.f32 %v894, %v1065
      %v1067 = vpop.f32.mrb[0].mxu0
      %1068 = vmatprep.mubr.bf16.mxu0 0
      %1069 = vmatmul.mubr.bf16.gmra.mrb[0].mxu0 %v790
      %v1070 = vpop.f32.mrb[0].mxu0
      %v1071 = vadd.f32 %v899, %v1070
      %v1072 = vpop.f32.mrb[0].mxu0
      %v1073 = vpop.f32.mrb[0].mxu0
      %v1074 = vadd.f32 %v902, %v1073
      %v1075 = vpop.f32.mrb[0].mxu0
      %1076 = vmatprep.mubr.bf16.mxu0 0
      %1077 = vmatmul.mubr.bf16.gmra.mrb[0].mxu0 %v792
      %v1078 = vpop.f32.mrb[0].mxu0
      %v1079 = vadd.f32 %v907, %v1078
      %v1080 = vpop.f32.mrb[0].mxu0
      %v1081 = vpop.f32.mrb[0].mxu0
      %v1082 = vadd.f32 %v910, %v1081
      %v1083 = vpop.f32.mrb[0].mxu0
      %1084 = vmatprep.mubr.bf16.mxu0 0
      %1085 = vmatmul.mubr.bf16.gmra.mrb[0].mxu0 %v794
      %v1086 = vpop.f32.mrb[0].mxu0
      %v1087 = vadd.f32 %v915, %v1086
      %v1088 = vpop.f32.mrb[0].mxu0
      %v1089 = vpop.f32.mrb[0].mxu0
      %v1090 = vadd.f32 %v918, %v1089
      %v1091 = vpop.f32.mrb[0].mxu0
      %1092 = vmatprep.mubr.bf16.mxu0 0
      %1093 = vmatmul.mubr.bf16.gmra.mrb[0].mxu0 %v796
      %v1094 = vpop.f32.mrb[0].mxu0
      %v1095 = vadd.f32 %v923, %v1094
      %v1096 = vpop.f32.mrb[0].mxu0
      %v1097 = vpop.f32.mrb[0].mxu0
      %v1098 = vadd.f32 %v926, %v1097
      %v1099 = vpop.f32.mrb[0].mxu0
      %1100 = vmatprep.mubr.bf16.mxu0 0
      %1101 = vmatmul.mubr.bf16.gmra.mrb[0].mxu0 %v798
      %v1102 = vpop.f32.mrb[0].mxu0
      %v1103 = vadd.f32 %v931, %v1102
      %v1104 = vpop.f32.mrb[0].mxu0
      %v1105 = vpop.f32.mrb[0].mxu0
      %v1106 = vadd.f32 %v934, %v1105
      %v1107 = vpop.f32.mrb[0].mxu0
      %1108 = vmatprep.mubr.bf16.mxu0 0
      %1109 = vmatmul.mubr.bf16.gmra.mrb[0].mxu0 %v800
      %v1110 = vpop.f32.mrb[0].mxu0
      %v1111 = vadd.f32 %v939, %v1110
      %v1112 = vpop.f32.mrb[0].mxu0
      %v1113 = vpop.f32.mrb[0].mxu0
      %v1114 = vadd.f32 %v942, %v1113
      %v1115 = vpop.f32.mrb[0].mxu0
      %1116 = vmatprep.mubr.bf16.mxu0 0
      %1117 = vmatmul.mubr.bf16.gmra.mrb[0].mxu0 %v802
      %v1118 = vpop.f32.mrb[0].mxu0
      %v1119 = vadd.f32 %v947, %v1118
      %v1120 = vpop.f32.mrb[0].mxu0
      %v1121 = vpop.f32.mrb[0].mxu0
      %v1122 = vadd.f32 %v950, %v1121
      %v1123 = vpop.f32.mrb[0].mxu0
      %1124 = vmatprep.mubr.bf16.mxu0 0
      %1125 = vmatmul.mubr.bf16.gmra.mrb[0].mxu0 %v804
      %v1126 = vpop.f32.mrb[0].mxu0
      %v1127 = vadd.f32 %v955, %v1126
      %v1128 = vpop.f32.mrb[0].mxu0
      %v1129 = vpop.f32.mrb[0].mxu0
      %v1130 = vadd.f32 %v958, %v1129
      %v1131 = vpop.f32.mrb[0].mxu0
      %1132 = vmatprep.mubr.bf16.mxu0 0
      %1133 = vmatmul.mubr.bf16.gmra.mrb[0].mxu0 %v806
      %v1134 = vpop.f32.mrb[0].mxu0
      %v1135 = vadd.f32 %v963, %v1134
      %v1136 = vpop.f32.mrb[0].mxu0
      %v1137 = vpop.f32.mrb[0].mxu0
      %v1138 = vadd.f32 %v966, %v1137
      %v1139 = vpop.f32.mrb[0].mxu0
      %1140 = vmatprep.mubr.bf16.mxu0 0
      %1141 = vmatmul.mubr.bf16.gmra.mrb[0].mxu0 %v808
      %v1142 = vpop.f32.mrb[0].mxu0
      %v1143 = vadd.f32 %v971, %v1142
      %v1144 = vpop.f32.mrb[0].mxu0
      %v1145 = vpop.f32.mrb[0].mxu0
      %v1146 = vadd.f32 %v974, %v1145
      %v1147 = vpop.f32.mrb[0].mxu0
      %1148 = vdwg.mxu0
      %s1149 = scalar_lea.vmem %s1, 16
      %v1150 = vld [vmem:[%s1149] sm:$0xf]
      %v1151 = vld [vmem:[%s1149 + $0x4] sm:$0x3]
      %v1154 = vunpack.c.l.b16 %v1150
      %v1155 = vunpack.c.l.b16 %v1151
      %v1156 = vpack.c.b16 %v1155, %v1154
      %v1158 = vsel %vm812, %v1156, 0
      %1160 = vmatprep.subr.bf16.mxu0 0
      %1161 = vmatpush1.bf16.msra.mxu0 %v1158
      %1162 = vmatprep.subr.bf16.mxu0 0
      %1163 = vmatpush1.bf16.msra.mxu0 0
      %1164 = vmatprep.subr.bf16.mxu0 0
      %1165 = vmatpush1.bf16.msra.mxu0 0
      %1166 = vmatprep.subr.bf16.mxu0 0
      %1167 = vmatpush1.bf16.msra.mxu0 0
      %1168 = vmatprep.subr.bf16.mxu0 0
      %1169 = vmatpush1.bf16.msra.mxu0 0
      %1170 = vmatprep.subr.bf16.mxu0 0
      %1171 = vmatpush1.bf16.msra.mxu0 0
      %1172 = vmatprep.subr.bf16.mxu0 0
      %1173 = vmatpush1.bf16.msra.mxu0 0
      %1174 = vmatprep.subr.bf16.mxu0 0
      %1175 = vmatpush1.bf16.msra.mxu0 0
      %1176 = vmatprep.subr.bf16.mxu0 0
      %1177 = vmatpush1.bf16.msra.mxu0 0
      %1178 = vmatprep.subr.bf16.mxu0 0
      %1179 = vmatpush1.bf16.msra.mxu0 0
      %1180 = vmatprep.subr.bf16.mxu0 0
      %1181 = vmatpush1.bf16.msra.mxu0 0
      %1182 = vmatprep.subr.bf16.mxu0 0
      %1183 = vmatpush1.bf16.msra.mxu0 0
      %1184 = vmatprep.subr.bf16.mxu0 0
      %1185 = vmatpush1.bf16.msra.mxu0 0
      %1186 = vmatprep.subr.bf16.mxu0 0
      %1187 = vmatpush1.bf16.msra.mxu0 0
      %1188 = vmatprep.subr.bf16.mxu0 0
      %1189 = vmatpush1.bf16.msra.mxu0 0
      %1190 = vmatprep.subr.bf16.mxu0 0
      %1191 = vmatpush1.bf16.msra.mxu0 0
      %1192 = vmatprep.mubr.bf16.mxu0 0
      %1193 = vmatmul.mubr.bf16.gmra.mrb[0].mxu0 %v782
      %v1194 = vpop.f32.mrb[0].mxu0
      %v1195 = vadd.f32 0.0, %v1194
      %v1196 = vpop.f32.mrb[0].mxu0
      %v1197 = vpop.f32.mrb[0].mxu0
      %v1198 = vadd.f32 0.0, %v1197
      %v1199 = vpop.f32.mrb[0].mxu0
      %1200 = vmatprep.mubr.bf16.mxu0 0
      %1201 = vmatmul.mubr.bf16.gmra.mrb[0].mxu0 %v784
      %v1202 = vpop.f32.mrb[0].mxu0
      %v1203 = vadd.f32 0.0, %v1202
      %v1204 = vpop.f32.mrb[0].mxu0
      %v1205 = vpop.f32.mrb[0].mxu0
      %v1206 = vadd.f32 0.0, %v1205
      %v1207 = vpop.f32.mrb[0].mxu0
      %1208 = vmatprep.mubr.bf16.mxu0 0
      %1209 = vmatmul.mubr.bf16.gmra.mrb[0].mxu0 %v786
      %v1210 = vpop.f32.mrb[0].mxu0
      %v1211 = vadd.f32 0.0, %v1210
      %v1212 = vpop.f32.mrb[0].mxu0
      %v1213 = vpop.f32.mrb[0].mxu0
      %v1214 = vadd.f32 0.0, %v1213
      %v1215 = vpop.f32.mrb[0].mxu0
      %1216 = vmatprep.mubr.bf16.mxu0 0
      %1217 = vmatmul.mubr.bf16.gmra.mrb[0].mxu0 %v788
      %v1218 = vpop.f32.mrb[0].mxu0
      %v1219 = vadd.f32 0.0, %v1218
      %v1220 = vpop.f32.mrb[0].mxu0
      %v1221 = vpop.f32.mrb[0].mxu0
      %v1222 = vadd.f32 0.0, %v1221
      %v1223 = vpop.f32.mrb[0].mxu0
      %1224 = vmatprep.mubr.bf16.mxu0 0
      %1225 = vmatmul.mubr.bf16.gmra.mrb[0].mxu0 %v790
      %v1226 = vpop.f32.mrb[0].mxu0
      %v1227 = vadd.f32 0.0, %v1226
      %v1228 = vpop.f32.mrb[0].mxu0
      %v1229 = vpop.f32.mrb[0].mxu0
      %v1230 = vadd.f32 0.0, %v1229
      %v1231 = vpop.f32.mrb[0].mxu0
      %1232 = vmatprep.mubr.bf16.mxu0 0
      %1233 = vmatmul.mubr.bf16.gmra.mrb[0].mxu0 %v792
      %v1234 = vpop.f32.mrb[0].mxu0
      %v1235 = vadd.f32 0.0, %v1234
      %v1236 = vpop.f32.mrb[0].mxu0
      %v1237 = vpop.f32.mrb[0].mxu0
      %v1238 = vadd.f32 0.0, %v1237
      %v1239 = vpop.f32.mrb[0].mxu0
      %1240 = vmatprep.mubr.bf16.mxu0 0
      %1241 = vmatmul.mubr.bf16.gmra.mrb[0].mxu0 %v794
      %v1242 = vpop.f32.mrb[0].mxu0
      %v1243 = vadd.f32 0.0, %v1242
      %v1244 = vpop.f32.mrb[0].mxu0
      %v1245 = vpop.f32.mrb[0].mxu0
      %v1246 = vadd.f32 0.0, %v1245
      %v1247 = vpop.f32.mrb[0].mxu0
      %1248 = vmatprep.mubr.bf16.mxu0 0
      %1249 = vmatmul.mubr.bf16.gmra.mrb[0].mxu0 %v796
      %v1250 = vpop.f32.mrb[0].mxu0
      %v1251 = vadd.f32 0.0, %v1250
      %v1252 = vpop.f32.mrb[0].mxu0
      %v1253 = vpop.f32.mrb[0].mxu0
      %v1254 = vadd.f32 0.0, %v1253
      %v1255 = vpop.f32.mrb[0].mxu0
      %1256 = vmatprep.mubr.bf16.mxu0 0
      %1257 = vmatmul.mubr.bf16.gmra.mrb[0].mxu0 %v798
      %v1258 = vpop.f32.mrb[0].mxu0
      %v1259 = vadd.f32 0.0, %v1258
      %v1260 = vpop.f32.mrb[0].mxu0
      %v1261 = vpop.f32.mrb[0].mxu0
      %v1262 = vadd.f32 0.0, %v1261
      %v1263 = vpop.f32.mrb[0].mxu0
      %1264 = vmatprep.mubr.bf16.mxu0 0
      %1265 = vmatmul.mubr.bf16.gmra.mrb[0].mxu0 %v800
      %v1266 = vpop.f32.mrb[0].mxu0
      %v1267 = vadd.f32 0.0, %v1266
      %v1268 = vpop.f32.mrb[0].mxu0
      %v1269 = vpop.f32.mrb[0].mxu0
      %v1270 = vadd.f32 0.0, %v1269
      %v1271 = vpop.f32.mrb[0].mxu0
      %1272 = vmatprep.mubr.bf16.mxu0 0
      %1273 = vmatmul.mubr.bf16.gmra.mrb[0].mxu0 %v802
      %v1274 = vpop.f32.mrb[0].mxu0
      %v1275 = vadd.f32 0.0, %v1274
      %v1276 = vpop.f32.mrb[0].mxu0
      %v1277 = vpop.f32.mrb[0].mxu0
      %v1278 = vadd.f32 0.0, %v1277
      %v1279 = vpop.f32.mrb[0].mxu0
      %1280 = vmatprep.mubr.bf16.mxu0 0
      %1281 = vmatmul.mubr.bf16.gmra.mrb[0].mxu0 %v804
      %v1282 = vpop.f32.mrb[0].mxu0
      %v1283 = vadd.f32 0.0, %v1282
      %v1284 = vpop.f32.mrb[0].mxu0
      %v1285 = vpop.f32.mrb[0].mxu0
      %v1286 = vadd.f32 0.0, %v1285
      %v1287 = vpop.f32.mrb[0].mxu0
      %1288 = vmatprep.mubr.bf16.mxu0 0
      %1289 = vmatmul.mubr.bf16.gmra.mrb[0].mxu0 %v806
      %v1290 = vpop.f32.mrb[0].mxu0
      %v1291 = vadd.f32 0.0, %v1290
      %v1292 = vpop.f32.mrb[0].mxu0
      %v1293 = vpop.f32.mrb[0].mxu0
      %v1294 = vadd.f32 0.0, %v1293
      %v1295 = vpop.f32.mrb[0].mxu0
      %1296 = vmatprep.mubr.bf16.mxu0 0
      %1297 = vmatmul.mubr.bf16.gmra.mrb[0].mxu0 %v808
      %v1298 = vpop.f32.mrb[0].mxu0
      %v1299 = vadd.f32 0.0, %v1298
      %v1300 = vpop.f32.mrb[0].mxu0
      %v1301 = vpop.f32.mrb[0].mxu0
      %v1302 = vadd.f32 0.0, %v1301
      %v1303 = vpop.f32.mrb[0].mxu0
      %1304 = vmatprep.mubr.bf16.mxu0 0
      %1305 = vmatmul.mubr.bf16.gmra.mrb[0].mxu0 %v810
      %v1306 = vpop.f32.mrb[0].mxu0
      %v1307 = vadd.f32 0.0, %v1306
      %v1308 = vpop.f32.mrb[0].mxu0
      %v1309 = vpop.f32.mrb[0].mxu0
      %v1310 = vadd.f32 0.0, %v1309
      %v1311 = vpop.f32.mrb[0].mxu0
      %1312 = vmatprep.mubr.bf16.mxu0 0
      %1313 = vmatmul.mubr.bf16.gmra.mrb[0].mxu0 %v983
      %v1314 = vpop.f32.mrb[0].mxu0
      %v1315 = vadd.f32 0.0, %v1314
      %v1316 = vpop.f32.mrb[0].mxu0
      %v1317 = vpop.f32.mrb[0].mxu0
      %v1318 = vadd.f32 0.0, %v1317
      %v1319 = vpop.f32.mrb[0].mxu0
      %1320 = vdwg.mxu0
      %v1321 = vadd.f32 %v1023, %v1195
      %v1322 = vadd.f32 %v1026, %v1198
      %v1323 = vadd.f32 %v1031, %v1203
      %v1324 = vadd.f32 %v1034, %v1206
      %v1325 = vadd.f32 %v1039, %v1211
      %v1326 = vadd.f32 %v1042, %v1214
      %v1327 = vadd.f32 %v1047, %v1219
      %v1328 = vadd.f32 %v1050, %v1222
      %v1329 = vadd.f32 %v1055, %v1227
      %v1330 = vadd.f32 %v1058, %v1230
      %v1331 = vadd.f32 %v1063, %v1235
      %v1332 = vadd.f32 %v1066, %v1238
      %v1333 = vadd.f32 %v1071, %v1243
      %v1334 = vadd.f32 %v1074, %v1246
      %v1335 = vadd.f32 %v1079, %v1251
      %v1336 = vadd.f32 %v1082, %v1254
      %v1337 = vadd.f32 %v1087, %v1259
      %v1338 = vadd.f32 %v1090, %v1262
      %v1339 = vadd.f32 %v1095, %v1267
      %v1340 = vadd.f32 %v1098, %v1270
      %v1341 = vadd.f32 %v1103, %v1275
      %v1342 = vadd.f32 %v1106, %v1278
      %v1343 = vadd.f32 %v1111, %v1283
      %v1344 = vadd.f32 %v1114, %v1286
      %v1345 = vadd.f32 %v1119, %v1291
      %v1346 = vadd.f32 %v1122, %v1294
      %v1347 = vadd.f32 %v1127, %v1299
      %v1348 = vadd.f32 %v1130, %v1302
      %v1349 = vadd.f32 %v1135, %v1307
      %v1350 = vadd.f32 %v1138, %v1310
      %v1351 = vadd.f32 %v1143, %v1315
      %v1352 = vadd.f32 %v1146, %v1318
      %v1353 = vld [vmem:[%s2] sm:$0x1]
      %v1355 = vlaneseq
      %v1356 = vshrl.u32 %v1355, 7
      %v1357 = vsub.s32 0, %v1356
      %v1358 = vrot.slane %v1353, %v1357
      %v1360 = vadd.f32 %v1321, %v1358
      %v1361 = vadd.f32 %v1322, %v1358
      %v1362 = vadd.f32 %v1323, %v1358
      %v1363 = vadd.f32 %v1324, %v1358
      %v1364 = vadd.f32 %v1325, %v1358
      %v1365 = vadd.f32 %v1326, %v1358
      %v1366 = vadd.f32 %v1327, %v1358
      %v1367 = vadd.f32 %v1328, %v1358
      %v1368 = vadd.f32 %v1329, %v1358
      %v1369 = vadd.f32 %v1330, %v1358
      %v1370 = vadd.f32 %v1331, %v1358
      %v1371 = vadd.f32 %v1332, %v1358
      %v1372 = vadd.f32 %v1333, %v1358
      %v1373 = vadd.f32 %v1334, %v1358
      %v1374 = vadd.f32 %v1335, %v1358
      %v1375 = vadd.f32 %v1336, %v1358
      %v1376 = vadd.f32 %v1337, %v1358
      %v1377 = vadd.f32 %v1338, %v1358
      %v1378 = vadd.f32 %v1339, %v1358
      %v1379 = vadd.f32 %v1340, %v1358
      %v1380 = vadd.f32 %v1341, %v1358
      %v1381 = vadd.f32 %v1342, %v1358
      %v1382 = vadd.f32 %v1343, %v1358
      %v1383 = vadd.f32 %v1344, %v1358
      %v1384 = vadd.f32 %v1345, %v1358
      %v1385 = vadd.f32 %v1346, %v1358
      %v1386 = vadd.f32 %v1347, %v1358
      %v1387 = vadd.f32 %v1348, %v1358
      %v1388 = vadd.f32 %v1349, %v1358
      %v1389 = vadd.f32 %v1350, %v1358
      %v1390 = vadd.f32 %v1351, %v1358
      %v1391 = vadd.f32 %v1352, %v1358
      %v1392 = vmax.f32 %v1360, 0.0
      %v1393 = vmax.f32 %v1361, 0.0
      %v1394 = vmax.f32 %v1362, 0.0
      %v1395 = vmax.f32 %v1363, 0.0
      %v1396 = vmax.f32 %v1364, 0.0
      %v1397 = vmax.f32 %v1365, 0.0
      %v1398 = vmax.f32 %v1366, 0.0
      %v1399 = vmax.f32 %v1367, 0.0
      %v1400 = vmax.f32 %v1368, 0.0
      %v1401 = vmax.f32 %v1369, 0.0
      %v1402 = vmax.f32 %v1370, 0.0
      %v1403 = vmax.f32 %v1371, 0.0
      %v1404 = vmax.f32 %v1372, 0.0
      %v1405 = vmax.f32 %v1373, 0.0
      %v1406 = vmax.f32 %v1374, 0.0
      %v1407 = vmax.f32 %v1375, 0.0
      %v1408 = vmax.f32 %v1376, 0.0
      %v1409 = vmax.f32 %v1377, 0.0
      %v1410 = vmax.f32 %v1378, 0.0
      %v1411 = vmax.f32 %v1379, 0.0
      %v1412 = vmax.f32 %v1380, 0.0
      %v1413 = vmax.f32 %v1381, 0.0
      %v1414 = vmax.f32 %v1382, 0.0
      %v1415 = vmax.f32 %v1383, 0.0
      %v1416 = vmax.f32 %v1384, 0.0
      %v1417 = vmax.f32 %v1385, 0.0
      %v1418 = vmax.f32 %v1386, 0.0
      %v1419 = vmax.f32 %v1387, 0.0
      %v1420 = vmax.f32 %v1388, 0.0
      %v1421 = vmax.f32 %v1389, 0.0
      %v1422 = vmax.f32 %v1390, 0.0
      %v1423 = vmax.f32 %v1391, 0.0
      %v1424 = vpack.c.bf16 %v1393, %v1392
      %v1425 = vpack.c.bf16 %v1395, %v1394
      %v1426 = vpack.c.bf16 %v1397, %v1396
      %v1427 = vpack.c.bf16 %v1399, %v1398
      %v1428 = vpack.c.bf16 %v1401, %v1400
      %v1429 = vpack.c.bf16 %v1403, %v1402
      %v1430 = vpack.c.bf16 %v1405, %v1404
      %v1431 = vpack.c.bf16 %v1407, %v1406
      %v1432 = vpack.c.bf16 %v1409, %v1408
      %v1433 = vpack.c.bf16 %v1411, %v1410
      %v1434 = vpack.c.bf16 %v1413, %v1412
      %v1435 = vpack.c.bf16 %v1415, %v1414
      %v1436 = vpack.c.bf16 %v1417, %v1416
      %v1437 = vpack.c.bf16 %v1419, %v1418
      %v1438 = vpack.c.bf16 %v1421, %v1420
      %v1439 = vpack.c.bf16 %v1423, %v1422
      %v1440 = vld [vmem:[%s5] sm:$0x3]
      %v1441 = vld [vmem:[%s6] sm:$0x1]
      %v1443 = vlaneseq
      %v1444 = vshrl.u32 %v1443, 7
      %v1445 = vsub.s32 0, %v1444
      %v1446 = vrot.slane %v1441, %v1445
      %v1448 = vsel %vm687, %v377, 0
      %v1450 = vsel %vm687, %v378, 0
      %v1452 = vsel %vm687, %v379, 0
      %v1454 = vsel %vm687, %v380, 0
      %v1456 = vsel %vm687, %v381, 0
      %v1458 = vsel %vm687, %v382, 0
      %v1460 = vsel %vm687, %v383, 0
      %v1462 = vsel %vm687, %v384, 0
      %v1464 = vsel %vm687, %v385, 0
      %v1466 = vsel %vm687, %v386, 0
      %v1468 = vsel %vm687, %v387, 0
      %v1470 = vsel %vm687, %v388, 0
      %v1472 = vsel %vm687, %v389, 0
      %v1474 = vsel %vm687, %v390, 0
      %v1476 = vsel %vm687, %v391, 0
      %v1478 = vsel %vm687, %v392, 0
      %vm1480 = vcmask 1041408
      %v1482 = vsel %vm1480, %v1440, 0
      %1484 = vmatprep.subr.bf16.mxu0 0
      %1485 = vmatpush1.bf16.msra.mxu0 %v1482
      %1486 = vmatprep.subr.bf16.mxu0 0
      %1487 = vmatpush1.bf16.msra.mxu0 0
      %1488 = vmatprep.subr.bf16.mxu0 0
      %1489 = vmatpush1.bf16.msra.mxu0 0
      %1490 = vmatprep.subr.bf16.mxu0 0
      %1491 = vmatpush1.bf16.msra.mxu0 0
      %1492 = vmatprep.subr.bf16.mxu0 0
      %1493 = vmatpush1.bf16.msra.mxu0 0
      %1494 = vmatprep.subr.bf16.mxu0 0
      %1495 = vmatpush1.bf16.msra.mxu0 0
      %1496 = vmatprep.subr.bf16.mxu0 0
      %1497 = vmatpush1.bf16.msra.mxu0 0
      %1498 = vmatprep.subr.bf16.mxu0 0
      %1499 = vmatpush1.bf16.msra.mxu0 0
      %1500 = vmatprep.subr.bf16.mxu0 0
      %1501 = vmatpush1.bf16.msra.mxu0 0
      %1502 = vmatprep.subr.bf16.mxu0 0
      %1503 = vmatpush1.bf16.msra.mxu0 0
      %1504 = vmatprep.subr.bf16.mxu0 0
      %1505 = vmatpush1.bf16.msra.mxu0 0
      %1506 = vmatprep.subr.bf16.mxu0 0
      %1507 = vmatpush1.bf16.msra.mxu0 0
      %1508 = vmatprep.subr.bf16.mxu0 0
      %1509 = vmatpush1.bf16.msra.mxu0 0
      %1510 = vmatprep.subr.bf16.mxu0 0
      %1511 = vmatpush1.bf16.msra.mxu0 0
      %1512 = vmatprep.subr.bf16.mxu0 0
      %1513 = vmatpush1.bf16.msra.mxu0 0
      %1514 = vmatprep.subr.bf16.mxu0 0
      %1515 = vmatpush1.bf16.msra.mxu0 0
      %1516 = vmatprep.mubr.bf16.mxu0 0
      %1517 = vmatmul.mubr.bf16.gmra.mrb[0].mxu0 %v1448
      %v1518 = vpop.f32.mrb[0].mxu0
      %v1519 = vadd.f32 %v1446, %v1518
      %v1520 = vpop.f32.mrb[0].mxu0
      %v1521 = vpop.f32.mrb[0].mxu0
      %v1522 = vadd.f32 %v1446, %v1521
      %v1523 = vpop.f32.mrb[0].mxu0
      %1524 = vmatprep.mubr.bf16.mxu0 0
      %1525 = vmatmul.mubr.bf16.gmra.mrb[0].mxu0 %v1450
      %v1526 = vpop.f32.mrb[0].mxu0
      %v1527 = vadd.f32 %v1446, %v1526
      %v1528 = vpop.f32.mrb[0].mxu0
      %v1529 = vpop.f32.mrb[0].mxu0
      %v1530 = vadd.f32 %v1446, %v1529
      %v1531 = vpop.f32.mrb[0].mxu0
      %1532 = vmatprep.mubr.bf16.mxu0 0
      %1533 = vmatmul.mubr.bf16.gmra.mrb[0].mxu0 %v1452
      %v1534 = vpop.f32.mrb[0].mxu0
      %v1535 = vadd.f32 %v1446, %v1534
      %v1536 = vpop.f32.mrb[0].mxu0
      %v1537 = vpop.f32.mrb[0].mxu0
      %v1538 = vadd.f32 %v1446, %v1537
      %v1539 = vpop.f32.mrb[0].mxu0
      %1540 = vmatprep.mubr.bf16.mxu0 0
      %1541 = vmatmul.mubr.bf16.gmra.mrb[0].mxu0 %v1454
      %v1542 = vpop.f32.mrb[0].mxu0
      %v1543 = vadd.f32 %v1446, %v1542
      %v1544 = vpop.f32.mrb[0].mxu0
      %v1545 = vpop.f32.mrb[0].mxu0
      %v1546 = vadd.f32 %v1446, %v1545
      %v1547 = vpop.f32.mrb[0].mxu0
      %1548 = vmatprep.mubr.bf16.mxu0 0
      %1549 = vmatmul.mubr.bf16.gmra.mrb[0].mxu0 %v1456
      %v1550 = vpop.f32.mrb[0].mxu0
      %v1551 = vadd.f32 %v1446, %v1550
      %v1552 = vpop.f32.mrb[0].mxu0
      %v1553 = vpop.f32.mrb[0].mxu0
      %v1554 = vadd.f32 %v1446, %v1553
      %v1555 = vpop.f32.mrb[0].mxu0
      %1556 = vmatprep.mubr.bf16.mxu0 0
      %1557 = vmatmul.mubr.bf16.gmra.mrb[0].mxu0 %v1458
      %v1558 = vpop.f32.mrb[0].mxu0
      %v1559 = vadd.f32 %v1446, %v1558
      %v1560 = vpop.f32.mrb[0].mxu0
      %v1561 = vpop.f32.mrb[0].mxu0
      %v1562 = vadd.f32 %v1446, %v1561
      %v1563 = vpop.f32.mrb[0].mxu0
      %1564 = vmatprep.mubr.bf16.mxu0 0
      %1565 = vmatmul.mubr.bf16.gmra.mrb[0].mxu0 %v1460
      %v1566 = vpop.f32.mrb[0].mxu0
      %v1567 = vadd.f32 %v1446, %v1566
      %v1568 = vpop.f32.mrb[0].mxu0
      %v1569 = vpop.f32.mrb[0].mxu0
      %v1570 = vadd.f32 %v1446, %v1569
      %v1571 = vpop.f32.mrb[0].mxu0
      %1572 = vmatprep.mubr.bf16.mxu0 0
      %1573 = vmatmul.mubr.bf16.gmra.mrb[0].mxu0 %v1462
      %v1574 = vpop.f32.mrb[0].mxu0
      %v1575 = vadd.f32 %v1446, %v1574
      %v1576 = vpop.f32.mrb[0].mxu0
      %v1577 = vpop.f32.mrb[0].mxu0
      %v1578 = vadd.f32 %v1446, %v1577
      %v1579 = vpop.f32.mrb[0].mxu0
      %1580 = vmatprep.mubr.bf16.mxu0 0
      %1581 = vmatmul.mubr.bf16.gmra.mrb[0].mxu0 %v1464
      %v1582 = vpop.f32.mrb[0].mxu0
      %v1583 = vadd.f32 %v1446, %v1582
      %v1584 = vpop.f32.mrb[0].mxu0
      %v1585 = vpop.f32.mrb[0].mxu0
      %v1586 = vadd.f32 %v1446, %v1585
      %v1587 = vpop.f32.mrb[0].mxu0
      %1588 = vmatprep.mubr.bf16.mxu0 0
      %1589 = vmatmul.mubr.bf16.gmra.mrb[0].mxu0 %v1466
      %v1590 = vpop.f32.mrb[0].mxu0
      %v1591 = vadd.f32 %v1446, %v1590
      %v1592 = vpop.f32.mrb[0].mxu0
      %v1593 = vpop.f32.mrb[0].mxu0
      %v1594 = vadd.f32 %v1446, %v1593
      %v1595 = vpop.f32.mrb[0].mxu0
      %1596 = vmatprep.mubr.bf16.mxu0 0
      %1597 = vmatmul.mubr.bf16.gmra.mrb[0].mxu0 %v1468
      %v1598 = vpop.f32.mrb[0].mxu0
      %v1599 = vadd.f32 %v1446, %v1598
      %v1600 = vpop.f32.mrb[0].mxu0
      %v1601 = vpop.f32.mrb[0].mxu0
      %v1602 = vadd.f32 %v1446, %v1601
      %v1603 = vpop.f32.mrb[0].mxu0
      %1604 = vmatprep.mubr.bf16.mxu0 0
      %1605 = vmatmul.mubr.bf16.gmra.mrb[0].mxu0 %v1470
      %v1606 = vpop.f32.mrb[0].mxu0
      %v1607 = vadd.f32 %v1446, %v1606
      %v1608 = vpop.f32.mrb[0].mxu0
      %v1609 = vpop.f32.mrb[0].mxu0
      %v1610 = vadd.f32 %v1446, %v1609
      %v1611 = vpop.f32.mrb[0].mxu0
      %1612 = vmatprep.mubr.bf16.mxu0 0
      %1613 = vmatmul.mubr.bf16.gmra.mrb[0].mxu0 %v1472
      %v1614 = vpop.f32.mrb[0].mxu0
      %v1615 = vadd.f32 %v1446, %v1614
      %v1616 = vpop.f32.mrb[0].mxu0
      %v1617 = vpop.f32.mrb[0].mxu0
      %v1618 = vadd.f32 %v1446, %v1617
      %v1619 = vpop.f32.mrb[0].mxu0
      %1620 = vmatprep.mubr.bf16.mxu0 0
      %1621 = vmatmul.mubr.bf16.gmra.mrb[0].mxu0 %v1474
      %v1622 = vpop.f32.mrb[0].mxu0
      %v1623 = vadd.f32 %v1446, %v1622
      %v1624 = vpop.f32.mrb[0].mxu0
      %v1625 = vpop.f32.mrb[0].mxu0
      %v1626 = vadd.f32 %v1446, %v1625
      %v1627 = vpop.f32.mrb[0].mxu0
      %1628 = vmatprep.mubr.bf16.mxu0 0
      %1629 = vmatmul.mubr.bf16.gmra.mrb[0].mxu0 %v1476
      %v1630 = vpop.f32.mrb[0].mxu0
      %v1631 = vadd.f32 %v1446, %v1630
      %v1632 = vpop.f32.mrb[0].mxu0
      %v1633 = vpop.f32.mrb[0].mxu0
      %v1634 = vadd.f32 %v1446, %v1633
      %v1635 = vpop.f32.mrb[0].mxu0
      %1636 = vmatprep.mubr.bf16.mxu0 0
      %1637 = vmatmul.mubr.bf16.gmra.mrb[0].mxu0 %v1478
      %v1638 = vpop.f32.mrb[0].mxu0
      %v1639 = vadd.f32 %v1446, %v1638
      %v1640 = vpop.f32.mrb[0].mxu0
      %v1641 = vpop.f32.mrb[0].mxu0
      %v1642 = vadd.f32 %v1446, %v1641
      %v1643 = vpop.f32.mrb[0].mxu0
      %1644 = vdwg.mxu0
      %v1645 = vld [vmem:[%s4] sm:$0x1]
      %v1647 = vlaneseq
      %v1648 = vshrl.u32 %v1647, 7
      %v1649 = vsub.s32 0, %v1648
      %v1650 = vrot.slane %v1645, %v1649
      %v1652 = vadd.f32 %v1519, %v1650
      %v1653 = vadd.f32 %v1522, %v1650
      %v1654 = vadd.f32 %v1527, %v1650
      %v1655 = vadd.f32 %v1530, %v1650
      %v1656 = vadd.f32 %v1535, %v1650
      %v1657 = vadd.f32 %v1538, %v1650
      %v1658 = vadd.f32 %v1543, %v1650
      %v1659 = vadd.f32 %v1546, %v1650
      %v1660 = vadd.f32 %v1551, %v1650
      %v1661 = vadd.f32 %v1554, %v1650
      %v1662 = vadd.f32 %v1559, %v1650
      %v1663 = vadd.f32 %v1562, %v1650
      %v1664 = vadd.f32 %v1567, %v1650
      %v1665 = vadd.f32 %v1570, %v1650
      %v1666 = vadd.f32 %v1575, %v1650
      %v1667 = vadd.f32 %v1578, %v1650
      %v1668 = vadd.f32 %v1583, %v1650
      %v1669 = vadd.f32 %v1586, %v1650
      %v1670 = vadd.f32 %v1591, %v1650
      %v1671 = vadd.f32 %v1594, %v1650
      %v1672 = vadd.f32 %v1599, %v1650
      %v1673 = vadd.f32 %v1602, %v1650
      %v1674 = vadd.f32 %v1607, %v1650
      %v1675 = vadd.f32 %v1610, %v1650
      %v1676 = vadd.f32 %v1615, %v1650
      %v1677 = vadd.f32 %v1618, %v1650
      %v1678 = vadd.f32 %v1623, %v1650
      %v1679 = vadd.f32 %v1626, %v1650
      %v1680 = vadd.f32 %v1631, %v1650
      %v1681 = vadd.f32 %v1634, %v1650
      %v1682 = vadd.f32 %v1639, %v1650
      %v1683 = vadd.f32 %v1642, %v1650
      %v1685 = vshrl.u32 %v1424, 16
      %v1687 = vrot.slane %v1685, 7
      %v1688 = vshll.u32 %v1424, 16
      %v1690 = vor.u32 %v1687, %v1688
      %v1692 = vshrl.u32 %v1425, 16
      %v1694 = vrot.slane %v1692, 7
      %v1695 = vshll.u32 %v1425, 16
      %v1697 = vor.u32 %v1694, %v1695
      %v1699 = vshrl.u32 %v1426, 16
      %v1701 = vrot.slane %v1699, 7
      %v1702 = vshll.u32 %v1426, 16
      %v1704 = vor.u32 %v1701, %v1702
      %v1706 = vshrl.u32 %v1427, 16
      %v1708 = vrot.slane %v1706, 7
      %v1709 = vshll.u32 %v1427, 16
      %v1711 = vor.u32 %v1708, %v1709
      %v1713 = vshrl.u32 %v1428, 16
      %v1715 = vrot.slane %v1713, 7
      %v1716 = vshll.u32 %v1428, 16
      %v1718 = vor.u32 %v1715, %v1716
      %v1720 = vshrl.u32 %v1429, 16
      %v1722 = vrot.slane %v1720, 7
      %v1723 = vshll.u32 %v1429, 16
      %v1725 = vor.u32 %v1722, %v1723
      %v1727 = vshrl.u32 %v1430, 16
      %v1729 = vrot.slane %v1727, 7
      %v1730 = vshll.u32 %v1430, 16
      %v1732 = vor.u32 %v1729, %v1730
      %v1734 = vshrl.u32 %v1431, 16
      %v1736 = vrot.slane %v1734, 7
      %v1737 = vshll.u32 %v1431, 16
      %v1739 = vor.u32 %v1736, %v1737
      %v1741 = vshrl.u32 %v1432, 16
      %v1743 = vrot.slane %v1741, 7
      %v1744 = vshll.u32 %v1432, 16
      %v1746 = vor.u32 %v1743, %v1744
      %v1748 = vshrl.u32 %v1433, 16
      %v1750 = vrot.slane %v1748, 7
      %v1751 = vshll.u32 %v1433, 16
      %v1753 = vor.u32 %v1750, %v1751
      %v1755 = vshrl.u32 %v1434, 16
      %v1757 = vrot.slane %v1755, 7
      %v1758 = vshll.u32 %v1434, 16
      %v1760 = vor.u32 %v1757, %v1758
      %v1762 = vshrl.u32 %v1435, 16
      %v1764 = vrot.slane %v1762, 7
      %v1765 = vshll.u32 %v1435, 16
      %v1767 = vor.u32 %v1764, %v1765
      %v1769 = vshrl.u32 %v1436, 16
      %v1771 = vrot.slane %v1769, 7
      %v1772 = vshll.u32 %v1436, 16
      %v1774 = vor.u32 %v1771, %v1772
      %v1776 = vshrl.u32 %v1437, 16
      %v1778 = vrot.slane %v1776, 7
      %v1779 = vshll.u32 %v1437, 16
      %v1781 = vor.u32 %v1778, %v1779
      %v1783 = vshrl.u32 %v1438, 16
      %v1785 = vrot.slane %v1783, 7
      %v1786 = vshll.u32 %v1438, 16
      %v1788 = vor.u32 %v1785, %v1786
      %v1790 = vshrl.u32 %v1439, 16
      %v1792 = vrot.slane %v1790, 7
      %v1793 = vshll.u32 %v1439, 16
      %v1795 = vor.u32 %v1792, %v1793
      %v1812 = vsel %vm523, 0, %v1690
      %v1813 = vsel %vm523, 0, %v1697
      %v1814 = vsel %vm523, 0, %v1704
      %v1815 = vsel %vm523, 0, %v1711
      %v1816 = vsel %vm523, 0, %v1718
      %v1817 = vsel %vm523, 0, %v1725
      %v1818 = vsel %vm523, 0, %v1732
      %v1819 = vsel %vm523, 0, %v1739
      %v1820 = vsel %vm523, 0, %v1746
      %v1821 = vsel %vm523, 0, %v1753
      %v1822 = vsel %vm523, 0, %v1760
      %v1823 = vsel %vm523, 0, %v1767
      %v1824 = vsel %vm523, 0, %v1774
      %v1825 = vsel %vm523, 0, %v1781
      %v1826 = vsel %vm523, 0, %v1788
      %v1827 = vsel %vm523, 0, %v1795
      %v1828 = vrot.slane %v1688, 1
      %v1829 = vor.u32 %v1685, %v1828
      %v1830 = vrot.slane %v1695, 1
      %v1831 = vor.u32 %v1692, %v1830
      %v1832 = vrot.slane %v1702, 1
      %v1833 = vor.u32 %v1699, %v1832
      %v1834 = vrot.slane %v1709, 1
      %v1835 = vor.u32 %v1706, %v1834
      %v1836 = vrot.slane %v1716, 1
      %v1837 = vor.u32 %v1713, %v1836
      %v1838 = vrot.slane %v1723, 1
      %v1839 = vor.u32 %v1720, %v1838
      %v1840 = vrot.slane %v1730, 1
      %v1841 = vor.u32 %v1727, %v1840
      %v1842 = vrot.slane %v1737, 1
      %v1843 = vor.u32 %v1734, %v1842
      %v1844 = vrot.slane %v1744, 1
      %v1845 = vor.u32 %v1741, %v1844
      %v1846 = vrot.slane %v1751, 1
      %v1847 = vor.u32 %v1748, %v1846
      %v1848 = vrot.slane %v1758, 1
      %v1849 = vor.u32 %v1755, %v1848
      %v1850 = vrot.slane %v1765, 1
      %v1851 = vor.u32 %v1762, %v1850
      %v1852 = vrot.slane %v1772, 1
      %v1853 = vor.u32 %v1769, %v1852
      %v1854 = vrot.slane %v1779, 1
      %v1855 = vor.u32 %v1776, %v1854
      %v1856 = vrot.slane %v1786, 1
      %v1857 = vor.u32 %v1783, %v1856
      %v1858 = vrot.slane %v1793, 1
      %v1859 = vor.u32 %v1790, %v1858
      %v1876 = vsel %vm590, %v1829, 0
      %v1877 = vsel %vm590, %v1831, 0
      %v1878 = vsel %vm590, %v1833, 0
      %v1879 = vsel %vm590, %v1835, 0
      %v1880 = vsel %vm590, %v1837, 0
      %v1881 = vsel %vm590, %v1839, 0
      %v1882 = vsel %vm590, %v1841, 0
      %v1883 = vsel %vm590, %v1843, 0
      %v1884 = vsel %vm590, %v1845, 0
      %v1885 = vsel %vm590, %v1847, 0
      %v1886 = vsel %vm590, %v1849, 0
      %v1887 = vsel %vm590, %v1851, 0
      %v1888 = vsel %vm590, %v1853, 0
      %v1889 = vsel %vm590, %v1855, 0
      %v1890 = vsel %vm590, %v1857, 0
      %v1891 = vsel %vm590, %v1859, 0
      %1908 = vrot.lane.b32.xlu0 %v1424, 8
      %v1909 = vpop.permute.xlu0 %1908
      %1910 = vrot.lane.b32.xlu0 %v1425, 8
      %v1911 = vpop.permute.xlu0 %1910
      %1912 = vrot.lane.b32.xlu0 %v1426, 8
      %v1913 = vpop.permute.xlu0 %1912
      %1914 = vrot.lane.b32.xlu0 %v1427, 8
      %v1915 = vpop.permute.xlu0 %1914
      %1916 = vrot.lane.b32.xlu0 %v1428, 8
      %v1917 = vpop.permute.xlu0 %1916
      %1918 = vrot.lane.b32.xlu0 %v1429, 8
      %v1919 = vpop.permute.xlu0 %1918
      %1920 = vrot.lane.b32.xlu0 %v1430, 8
      %v1921 = vpop.permute.xlu0 %1920
      %1922 = vrot.lane.b32.xlu0 %v1431, 8
      %v1923 = vpop.permute.xlu0 %1922
      %1924 = vrot.lane.b32.xlu0 %v1432, 8
      %v1925 = vpop.permute.xlu0 %1924
      %1926 = vrot.lane.b32.xlu0 %v1433, 8
      %v1927 = vpop.permute.xlu0 %1926
      %1928 = vrot.lane.b32.xlu0 %v1434, 8
      %v1929 = vpop.permute.xlu0 %1928
      %1930 = vrot.lane.b32.xlu0 %v1435, 8
      %v1931 = vpop.permute.xlu0 %1930
      %1932 = vrot.lane.b32.xlu0 %v1436, 8
      %v1933 = vpop.permute.xlu0 %1932
      %1934 = vrot.lane.b32.xlu0 %v1437, 8
      %v1935 = vpop.permute.xlu0 %1934
      %1936 = vrot.lane.b32.xlu0 %v1438, 8
      %v1937 = vpop.permute.xlu0 %1936
      %1938 = vrot.lane.b32.xlu0 %v1439, 8
      %v1939 = vpop.permute.xlu0 %1938
      %1956 = vrot.lane.b32.xlu0 %v1876, 16
      %v1957 = vpop.permute.xlu0 %1956
      %1958 = vrot.lane.b32.xlu0 %v1877, 16
      %v1959 = vpop.permute.xlu0 %1958
      %1960 = vrot.lane.b32.xlu0 %v1878, 16
      %v1961 = vpop.permute.xlu0 %1960
      %1962 = vrot.lane.b32.xlu0 %v1879, 16
      %v1963 = vpop.permute.xlu0 %1962
      %1964 = vrot.lane.b32.xlu0 %v1880, 16
      %v1965 = vpop.permute.xlu0 %1964
      %1966 = vrot.lane.b32.xlu0 %v1881, 16
      %v1967 = vpop.permute.xlu0 %1966
      %1968 = vrot.lane.b32.xlu0 %v1882, 16
      %v1969 = vpop.permute.xlu0 %1968
      %1970 = vrot.lane.b32.xlu0 %v1883, 16
      %v1971 = vpop.permute.xlu0 %1970
      %1972 = vrot.lane.b32.xlu0 %v1884, 16
      %v1973 = vpop.permute.xlu0 %1972
      %1974 = vrot.lane.b32.xlu0 %v1885, 16
      %v1975 = vpop.permute.xlu0 %1974
      %1976 = vrot.lane.b32.xlu0 %v1886, 16
      %v1977 = vpop.permute.xlu0 %1976
      %1978 = vrot.lane.b32.xlu0 %v1887, 16
      %v1979 = vpop.permute.xlu0 %1978
      %1980 = vrot.lane.b32.xlu0 %v1888, 16
      %v1981 = vpop.permute.xlu0 %1980
      %1982 = vrot.lane.b32.xlu0 %v1889, 16
      %v1983 = vpop.permute.xlu0 %1982
      %1984 = vrot.lane.b32.xlu0 %v1890, 16
      %v1985 = vpop.permute.xlu0 %1984
      %1986 = vrot.lane.b32.xlu0 %v1891, 16
      %v1987 = vpop.permute.xlu0 %1986
      %v1990 = vsel %vm736, %v1812, %v1909
      %v1993 = vsel %vm736, %v1813, %v1911
      %v1996 = vsel %vm736, %v1814, %v1913
      %v1999 = vsel %vm736, %v1815, %v1915
      %v2002 = vsel %vm736, %v1816, %v1917
      %v2005 = vsel %vm736, %v1817, %v1919
      %v2008 = vsel %vm736, %v1818, %v1921
      %v2011 = vsel %vm736, %v1819, %v1923
      %v2014 = vsel %vm736, %v1820, %v1925
      %v2017 = vsel %vm736, %v1821, %v1927
      %v2020 = vsel %vm736, %v1822, %v1929
      %v2023 = vsel %vm736, %v1823, %v1931
      %v2026 = vsel %vm736, %v1824, %v1933
      %v2029 = vsel %vm736, %v1825, %v1935
      %v2032 = vsel %vm736, %v1826, %v1937
      %v2035 = vsel %vm736, %v1827, %v1939
      %vm2036 = vcmask 130048
      %v2038 = vsel %vm2036, %v1990, %v1957
      %v2040 = vsel %vm2036, %v1993, %v1959
      %v2042 = vsel %vm2036, %v1996, %v1961
      %v2044 = vsel %vm2036, %v1999, %v1963
      %v2046 = vsel %vm2036, %v2002, %v1965
      %v2048 = vsel %vm2036, %v2005, %v1967
      %v2050 = vsel %vm2036, %v2008, %v1969
      %v2052 = vsel %vm2036, %v2011, %v1971
      %v2054 = vsel %vm2036, %v2014, %v1973
      %v2056 = vsel %vm2036, %v2017, %v1975
      %v2058 = vsel %vm2036, %v2020, %v1977
      %v2060 = vsel %vm2036, %v2023, %v1979
      %v2062 = vsel %vm2036, %v2026, %v1981
      %v2064 = vsel %vm2036, %v2029, %v1983
      %v2066 = vsel %vm2036, %v2032, %v1985
      %v2068 = vsel %vm2036, %v2035, %v1987
      %v2069 = vld [vmem:[%s3] sm:$0xf]
      %v2070 = vld [vmem:[%s3 + $0x4] sm:$0xf]
      %v2071 = vld [vmem:[%s3 + $0x8] sm:$0xf]
      %v2075 = vunpack.c.l.b16 %v2069
      %v2076 = vunpack.c.l.b16 %v2070
      %v2077 = vunpack.c.l.b16 %v2071
      %v2078 = vpack.c.b16 %v2076, %v2075
      %v2079 = vpack.c.b16 %v2077, %v2077
      %vm2081 = vcmask 195584
      %v2082 = vsel %vm2081, 0, 0
      %v2084 = vsel %vm2081, %v2038, 0
      %v2086 = vsel %vm2081, %v2040, 0
      %v2088 = vsel %vm2081, %v2042, 0
      %v2090 = vsel %vm2081, %v2044, 0
      %v2092 = vsel %vm2081, %v2046, 0
      %v2094 = vsel %vm2081, %v2048, 0
      %v2096 = vsel %vm2081, %v2050, 0
      %v2098 = vsel %vm2081, %v2052, 0
      %v2100 = vsel %vm2081, %v2054, 0
      %v2102 = vsel %vm2081, %v2056, 0
      %v2104 = vsel %vm2081, %v2058, 0
      %v2106 = vsel %vm2081, %v2060, 0
      %v2108 = vsel %vm2081, %v2062, 0
      %v2110 = vsel %vm2081, %v2064, 0
      %v2112 = vsel %vm2081, %v2066, 0
      %vm2114 = vcmask 1043456
      %v2116 = vsel %vm2114, %v2079, 0
      %2118 = vmatprep.subr.bf16.mxu0 0
      %2119 = vmatpush1.bf16.msra.mxu0 %v2078
      %2120 = vmatprep.subr.bf16.mxu0 0
      %2121 = vmatpush1.bf16.msra.mxu0 %v2116
      %2122 = vmatprep.subr.bf16.mxu0 0
      %2123 = vmatpush1.bf16.msra.mxu0 0
      %2124 = vmatprep.subr.bf16.mxu0 0
      %2125 = vmatpush1.bf16.msra.mxu0 0
      %2126 = vmatprep.subr.bf16.mxu0 0
      %2127 = vmatpush1.bf16.msra.mxu0 0
      %2128 = vmatprep.subr.bf16.mxu0 0
      %2129 = vmatpush1.bf16.msra.mxu0 0
      %2130 = vmatprep.subr.bf16.mxu0 0
      %2131 = vmatpush1.bf16.msra.mxu0 0
      %2132 = vmatprep.subr.bf16.mxu0 0
      %2133 = vmatpush1.bf16.msra.mxu0 0
      %2134 = vmatprep.subr.bf16.mxu0 0
      %2135 = vmatpush1.bf16.msra.mxu0 0
      %2136 = vmatprep.subr.bf16.mxu0 0
      %2137 = vmatpush1.bf16.msra.mxu0 0
      %2138 = vmatprep.subr.bf16.mxu0 0
      %2139 = vmatpush1.bf16.msra.mxu0 0
      %2140 = vmatprep.subr.bf16.mxu0 0
      %2141 = vmatpush1.bf16.msra.mxu0 0
      %2142 = vmatprep.subr.bf16.mxu0 0
      %2143 = vmatpush1.bf16.msra.mxu0 0
      %2144 = vmatprep.subr.bf16.mxu0 0
      %2145 = vmatpush1.bf16.msra.mxu0 0
      %2146 = vmatprep.subr.bf16.mxu0 0
      %2147 = vmatpush1.bf16.msra.mxu0 0
      %2148 = vmatprep.subr.bf16.mxu0 0
      %2149 = vmatpush1.bf16.msra.mxu0 0
      %2150 = vmatprep.mubr.bf16.mxu0 0
      %2151 = vmatmul.mubr.bf16.gmra.mrb[0].mxu0 %v2082
      %v2152 = vpop.f32.mrb[0].mxu0
      %v2153 = vadd.f32 0.0, %v2152
      %v2154 = vpop.f32.mrb[0].mxu0
      %v2155 = vpop.f32.mrb[0].mxu0
      %v2156 = vadd.f32 0.0, %v2155
      %v2157 = vpop.f32.mrb[0].mxu0
      %2158 = vmatprep.mubr.bf16.mxu0 0
      %2159 = vmatmul.mubr.bf16.gmra.mrb[0].mxu0 %v2084
      %v2160 = vpop.f32.mrb[0].mxu0
      %v2161 = vadd.f32 0.0, %v2160
      %v2162 = vpop.f32.mrb[0].mxu0
      %v2163 = vpop.f32.mrb[0].mxu0
      %v2164 = vadd.f32 0.0, %v2163
      %v2165 = vpop.f32.mrb[0].mxu0
      %2166 = vmatprep.mubr.bf16.mxu0 0
      %2167 = vmatmul.mubr.bf16.gmra.mrb[0].mxu0 %v2086
      %v2168 = vpop.f32.mrb[0].mxu0
      %v2169 = vadd.f32 0.0, %v2168
      %v2170 = vpop.f32.mrb[0].mxu0
      %v2171 = vpop.f32.mrb[0].mxu0
      %v2172 = vadd.f32 0.0, %v2171
      %v2173 = vpop.f32.mrb[0].mxu0
      %2174 = vmatprep.mubr.bf16.mxu0 0
      %2175 = vmatmul.mubr.bf16.gmra.mrb[0].mxu0 %v2088
      %v2176 = vpop.f32.mrb[0].mxu0
      %v2177 = vadd.f32 0.0, %v2176
      %v2178 = vpop.f32.mrb[0].mxu0
      %v2179 = vpop.f32.mrb[0].mxu0
      %v2180 = vadd.f32 0.0, %v2179
      %v2181 = vpop.f32.mrb[0].mxu0
      %2182 = vmatprep.mubr.bf16.mxu0 0
      %2183 = vmatmul.mubr.bf16.gmra.mrb[0].mxu0 %v2090
      %v2184 = vpop.f32.mrb[0].mxu0
      %v2185 = vadd.f32 0.0, %v2184
      %v2186 = vpop.f32.mrb[0].mxu0
      %v2187 = vpop.f32.mrb[0].mxu0
      %v2188 = vadd.f32 0.0, %v2187
      %v2189 = vpop.f32.mrb[0].mxu0
      %2190 = vmatprep.mubr.bf16.mxu0 0
      %2191 = vmatmul.mubr.bf16.gmra.mrb[0].mxu0 %v2092
      %v2192 = vpop.f32.mrb[0].mxu0
      %v2193 = vadd.f32 0.0, %v2192
      %v2194 = vpop.f32.mrb[0].mxu0
      %v2195 = vpop.f32.mrb[0].mxu0
      %v2196 = vadd.f32 0.0, %v2195
      %v2197 = vpop.f32.mrb[0].mxu0
      %2198 = vmatprep.mubr.bf16.mxu0 0
      %2199 = vmatmul.mubr.bf16.gmra.mrb[0].mxu0 %v2094
      %v2200 = vpop.f32.mrb[0].mxu0
      %v2201 = vadd.f32 0.0, %v2200
      %v2202 = vpop.f32.mrb[0].mxu0
      %v2203 = vpop.f32.mrb[0].mxu0
      %v2204 = vadd.f32 0.0, %v2203
      %v2205 = vpop.f32.mrb[0].mxu0
      %2206 = vmatprep.mubr.bf16.mxu0 0
      %2207 = vmatmul.mubr.bf16.gmra.mrb[0].mxu0 %v2096
      %v2208 = vpop.f32.mrb[0].mxu0
      %v2209 = vadd.f32 0.0, %v2208
      %v2210 = vpop.f32.mrb[0].mxu0
      %v2211 = vpop.f32.mrb[0].mxu0
      %v2212 = vadd.f32 0.0, %v2211
      %v2213 = vpop.f32.mrb[0].mxu0
      %2214 = vmatprep.mubr.bf16.mxu0 0
      %2215 = vmatmul.mubr.bf16.gmra.mrb[0].mxu0 %v2098
      %v2216 = vpop.f32.mrb[0].mxu0
      %v2217 = vadd.f32 0.0, %v2216
      %v2218 = vpop.f32.mrb[0].mxu0
      %v2219 = vpop.f32.mrb[0].mxu0
      %v2220 = vadd.f32 0.0, %v2219
      %v2221 = vpop.f32.mrb[0].mxu0
      %2222 = vmatprep.mubr.bf16.mxu0 0
      %2223 = vmatmul.mubr.bf16.gmra.mrb[0].mxu0 %v2100
      %v2224 = vpop.f32.mrb[0].mxu0
      %v2225 = vadd.f32 0.0, %v2224
      %v2226 = vpop.f32.mrb[0].mxu0
      %v2227 = vpop.f32.mrb[0].mxu0
      %v2228 = vadd.f32 0.0, %v2227
      %v2229 = vpop.f32.mrb[0].mxu0
      %2230 = vmatprep.mubr.bf16.mxu0 0
      %2231 = vmatmul.mubr.bf16.gmra.mrb[0].mxu0 %v2102
      %v2232 = vpop.f32.mrb[0].mxu0
      %v2233 = vadd.f32 0.0, %v2232
      %v2234 = vpop.f32.mrb[0].mxu0
      %v2235 = vpop.f32.mrb[0].mxu0
      %v2236 = vadd.f32 0.0, %v2235
      %v2237 = vpop.f32.mrb[0].mxu0
      %2238 = vmatprep.mubr.bf16.mxu0 0
      %2239 = vmatmul.mubr.bf16.gmra.mrb[0].mxu0 %v2104
      %v2240 = vpop.f32.mrb[0].mxu0
      %v2241 = vadd.f32 0.0, %v2240
      %v2242 = vpop.f32.mrb[0].mxu0
      %v2243 = vpop.f32.mrb[0].mxu0
      %v2244 = vadd.f32 0.0, %v2243
      %v2245 = vpop.f32.mrb[0].mxu0
      %2246 = vmatprep.mubr.bf16.mxu0 0
      %2247 = vmatmul.mubr.bf16.gmra.mrb[0].mxu0 %v2106
      %v2248 = vpop.f32.mrb[0].mxu0
      %v2249 = vadd.f32 0.0, %v2248
      %v2250 = vpop.f32.mrb[0].mxu0
      %v2251 = vpop.f32.mrb[0].mxu0
      %v2252 = vadd.f32 0.0, %v2251
      %v2253 = vpop.f32.mrb[0].mxu0
      %2254 = vmatprep.mubr.bf16.mxu0 0
      %2255 = vmatmul.mubr.bf16.gmra.mrb[0].mxu0 %v2108
      %v2256 = vpop.f32.mrb[0].mxu0
      %v2257 = vadd.f32 0.0, %v2256
      %v2258 = vpop.f32.mrb[0].mxu0
      %v2259 = vpop.f32.mrb[0].mxu0
      %v2260 = vadd.f32 0.0, %v2259
      %v2261 = vpop.f32.mrb[0].mxu0
      %2262 = vmatprep.mubr.bf16.mxu0 0
      %2263 = vmatmul.mubr.bf16.gmra.mrb[0].mxu0 %v2110
      %v2264 = vpop.f32.mrb[0].mxu0
      %v2265 = vadd.f32 0.0, %v2264
      %v2266 = vpop.f32.mrb[0].mxu0
      %v2267 = vpop.f32.mrb[0].mxu0
      %v2268 = vadd.f32 0.0, %v2267
      %v2269 = vpop.f32.mrb[0].mxu0
      %2270 = vmatprep.mubr.bf16.mxu0 0
      %2271 = vmatmul.mubr.bf16.gmra.mrb[0].mxu0 %v2112
      %v2272 = vpop.f32.mrb[0].mxu0
      %v2273 = vadd.f32 0.0, %v2272
      %v2274 = vpop.f32.mrb[0].mxu0
      %v2275 = vpop.f32.mrb[0].mxu0
      %v2276 = vadd.f32 0.0, %v2275
      %v2277 = vpop.f32.mrb[0].mxu0
      %2278 = vdwg.mxu0
      %v2279 = vadd.f32 %v1652, %v2153
      %v2280 = vadd.f32 %v1653, %v2156
      %v2281 = vadd.f32 %v1654, %v2161
      %v2282 = vadd.f32 %v1655, %v2164
      %v2283 = vadd.f32 %v1656, %v2169
      %v2284 = vadd.f32 %v1657, %v2172
      %v2285 = vadd.f32 %v1658, %v2177
      %v2286 = vadd.f32 %v1659, %v2180
      %v2287 = vadd.f32 %v1660, %v2185
      %v2288 = vadd.f32 %v1661, %v2188
      %v2289 = vadd.f32 %v1662, %v2193
      %v2290 = vadd.f32 %v1663, %v2196
      %v2291 = vadd.f32 %v1664, %v2201
      %v2292 = vadd.f32 %v1665, %v2204
      %v2293 = vadd.f32 %v1666, %v2209
      %v2294 = vadd.f32 %v1667, %v2212
      %v2295 = vadd.f32 %v1668, %v2217
      %v2296 = vadd.f32 %v1669, %v2220
      %v2297 = vadd.f32 %v1670, %v2225
      %v2298 = vadd.f32 %v1671, %v2228
      %v2299 = vadd.f32 %v1672, %v2233
      %v2300 = vadd.f32 %v1673, %v2236
      %v2301 = vadd.f32 %v1674, %v2241
      %v2302 = vadd.f32 %v1675, %v2244
      %v2303 = vadd.f32 %v1676, %v2249
      %v2304 = vadd.f32 %v1677, %v2252
      %v2305 = vadd.f32 %v1678, %v2257
      %v2306 = vadd.f32 %v1679, %v2260
      %v2307 = vadd.f32 %v1680, %v2265
      %v2308 = vadd.f32 %v1681, %v2268
      %v2309 = vadd.f32 %v1682, %v2273
      %v2310 = vadd.f32 %v1683, %v2276
      %s2311 = scalar_lea.vmem %s3, 12
      %v2312 = vld [vmem:[%s2311] sm:$0xf]
      %v2313 = vld [vmem:[%s2311 + $0x4] sm:$0xf]
      %v2314 = vld [vmem:[%s2311 + $0x8] sm:$0xf]
      %v2318 = vunpack.c.l.b16 %v2312
      %v2319 = vunpack.c.l.b16 %v2313
      %v2320 = vunpack.c.l.b16 %v2314
      %v2321 = vpack.c.b16 %v2319, %v2318
      %v2322 = vpack.c.b16 %v2320, %v2320
      %v2324 = vsel %vm2081, %v2068, 0
      %v2327 = vsel %vm2114, %v2322, 0
      %2329 = vmatprep.subr.bf16.mxu0 0
      %2330 = vmatpush1.bf16.msra.mxu0 %v2321
      %2331 = vmatprep.subr.bf16.mxu0 0
      %2332 = vmatpush1.bf16.msra.mxu0 %v2327
      %2333 = vmatprep.subr.bf16.mxu0 0
      %2334 = vmatpush1.bf16.msra.mxu0 0
      %2335 = vmatprep.subr.bf16.mxu0 0
      %2336 = vmatpush1.bf16.msra.mxu0 0
      %2337 = vmatprep.subr.bf16.mxu0 0
      %2338 = vmatpush1.bf16.msra.mxu0 0
      %2339 = vmatprep.subr.bf16.mxu0 0
      %2340 = vmatpush1.bf16.msra.mxu0 0
      %2341 = vmatprep.subr.bf16.mxu0 0
      %2342 = vmatpush1.bf16.msra.mxu0 0
      %2343 = vmatprep.subr.bf16.mxu0 0
      %2344 = vmatpush1.bf16.msra.mxu0 0
      %2345 = vmatprep.subr.bf16.mxu0 0
      %2346 = vmatpush1.bf16.msra.mxu0 0
      %2347 = vmatprep.subr.bf16.mxu0 0
      %2348 = vmatpush1.bf16.msra.mxu0 0
      %2349 = vmatprep.subr.bf16.mxu0 0
      %2350 = vmatpush1.bf16.msra.mxu0 0
      %2351 = vmatprep.subr.bf16.mxu0 0
      %2352 = vmatpush1.bf16.msra.mxu0 0
      %2353 = vmatprep.subr.bf16.mxu0 0
      %2354 = vmatpush1.bf16.msra.mxu0 0
      %2355 = vmatprep.subr.bf16.mxu0 0
      %2356 = vmatpush1.bf16.msra.mxu0 0
      %2357 = vmatprep.subr.bf16.mxu0 0
      %2358 = vmatpush1.bf16.msra.mxu0 0
      %2359 = vmatprep.subr.bf16.mxu0 0
      %2360 = vmatpush1.bf16.msra.mxu0 0
      %2361 = vmatprep.mubr.bf16.mxu0 0
      %2362 = vmatmul.mubr.bf16.gmra.mrb[0].mxu0 %v2084
      %v2363 = vpop.f32.mrb[0].mxu0
      %v2364 = vadd.f32 0.0, %v2363
      %v2365 = vpop.f32.mrb[0].mxu0
      %v2366 = vpop.f32.mrb[0].mxu0
      %v2367 = vadd.f32 0.0, %v2366
      %v2368 = vpop.f32.mrb[0].mxu0
      %2369 = vmatprep.mubr.bf16.mxu0 0
      %2370 = vmatmul.mubr.bf16.gmra.mrb[0].mxu0 %v2086
      %v2371 = vpop.f32.mrb[0].mxu0
      %v2372 = vadd.f32 0.0, %v2371
      %v2373 = vpop.f32.mrb[0].mxu0
      %v2374 = vpop.f32.mrb[0].mxu0
      %v2375 = vadd.f32 0.0, %v2374
      %v2376 = vpop.f32.mrb[0].mxu0
      %2377 = vmatprep.mubr.bf16.mxu0 0
      %2378 = vmatmul.mubr.bf16.gmra.mrb[0].mxu0 %v2088
      %v2379 = vpop.f32.mrb[0].mxu0
      %v2380 = vadd.f32 0.0, %v2379
      %v2381 = vpop.f32.mrb[0].mxu0
      %v2382 = vpop.f32.mrb[0].mxu0
      %v2383 = vadd.f32 0.0, %v2382
      %v2384 = vpop.f32.mrb[0].mxu0
      %2385 = vmatprep.mubr.bf16.mxu0 0
      %2386 = vmatmul.mubr.bf16.gmra.mrb[0].mxu0 %v2090
      %v2387 = vpop.f32.mrb[0].mxu0
      %v2388 = vadd.f32 0.0, %v2387
      %v2389 = vpop.f32.mrb[0].mxu0
      %v2390 = vpop.f32.mrb[0].mxu0
      %v2391 = vadd.f32 0.0, %v2390
      %v2392 = vpop.f32.mrb[0].mxu0
      %2393 = vmatprep.mubr.bf16.mxu0 0
      %2394 = vmatmul.mubr.bf16.gmra.mrb[0].mxu0 %v2092
      %v2395 = vpop.f32.mrb[0].mxu0
      %v2396 = vadd.f32 0.0, %v2395
      %v2397 = vpop.f32.mrb[0].mxu0
      %v2398 = vpop.f32.mrb[0].mxu0
      %v2399 = vadd.f32 0.0, %v2398
      %v2400 = vpop.f32.mrb[0].mxu0
      %2401 = vmatprep.mubr.bf16.mxu0 0
      %2402 = vmatmul.mubr.bf16.gmra.mrb[0].mxu0 %v2094
      %v2403 = vpop.f32.mrb[0].mxu0
      %v2404 = vadd.f32 0.0, %v2403
      %v2405 = vpop.f32.mrb[0].mxu0
      %v2406 = vpop.f32.mrb[0].mxu0
      %v2407 = vadd.f32 0.0, %v2406
      %v2408 = vpop.f32.mrb[0].mxu0
      %2409 = vmatprep.mubr.bf16.mxu0 0
      %2410 = vmatmul.mubr.bf16.gmra.mrb[0].mxu0 %v2096
      %v2411 = vpop.f32.mrb[0].mxu0
      %v2412 = vadd.f32 0.0, %v2411
      %v2413 = vpop.f32.mrb[0].mxu0
      %v2414 = vpop.f32.mrb[0].mxu0
      %v2415 = vadd.f32 0.0, %v2414
      %v2416 = vpop.f32.mrb[0].mxu0
      %2417 = vmatprep.mubr.bf16.mxu0 0
      %2418 = vmatmul.mubr.bf16.gmra.mrb[0].mxu0 %v2098
      %v2419 = vpop.f32.mrb[0].mxu0
      %v2420 = vadd.f32 0.0, %v2419
      %v2421 = vpop.f32.mrb[0].mxu0
      %v2422 = vpop.f32.mrb[0].mxu0
      %v2423 = vadd.f32 0.0, %v2422
      %v2424 = vpop.f32.mrb[0].mxu0
      %2425 = vmatprep.mubr.bf16.mxu0 0
      %2426 = vmatmul.mubr.bf16.gmra.mrb[0].mxu0 %v2100
      %v2427 = vpop.f32.mrb[0].mxu0
      %v2428 = vadd.f32 0.0, %v2427
      %v2429 = vpop.f32.mrb[0].mxu0
      %v2430 = vpop.f32.mrb[0].mxu0
      %v2431 = vadd.f32 0.0, %v2430
      %v2432 = vpop.f32.mrb[0].mxu0
      %2433 = vmatprep.mubr.bf16.mxu0 0
      %2434 = vmatmul.mubr.bf16.gmra.mrb[0].mxu0 %v2102
      %v2435 = vpop.f32.mrb[0].mxu0
      %v2436 = vadd.f32 0.0, %v2435
      %v2437 = vpop.f32.mrb[0].mxu0
      %v2438 = vpop.f32.mrb[0].mxu0
      %v2439 = vadd.f32 0.0, %v2438
      %v2440 = vpop.f32.mrb[0].mxu0
      %2441 = vmatprep.mubr.bf16.mxu0 0
      %2442 = vmatmul.mubr.bf16.gmra.mrb[0].mxu0 %v2104
      %v2443 = vpop.f32.mrb[0].mxu0
      %v2444 = vadd.f32 0.0, %v2443
      %v2445 = vpop.f32.mrb[0].mxu0
      %v2446 = vpop.f32.mrb[0].mxu0
      %v2447 = vadd.f32 0.0, %v2446
      %v2448 = vpop.f32.mrb[0].mxu0
      %2449 = vmatprep.mubr.bf16.mxu0 0
      %2450 = vmatmul.mubr.bf16.gmra.mrb[0].mxu0 %v2106
      %v2451 = vpop.f32.mrb[0].mxu0
      %v2452 = vadd.f32 0.0, %v2451
      %v2453 = vpop.f32.mrb[0].mxu0
      %v2454 = vpop.f32.mrb[0].mxu0
      %v2455 = vadd.f32 0.0, %v2454
      %v2456 = vpop.f32.mrb[0].mxu0
      %2457 = vmatprep.mubr.bf16.mxu0 0
      %2458 = vmatmul.mubr.bf16.gmra.mrb[0].mxu0 %v2108
      %v2459 = vpop.f32.mrb[0].mxu0
      %v2460 = vadd.f32 0.0, %v2459
      %v2461 = vpop.f32.mrb[0].mxu0
      %v2462 = vpop.f32.mrb[0].mxu0
      %v2463 = vadd.f32 0.0, %v2462
      %v2464 = vpop.f32.mrb[0].mxu0
      %2465 = vmatprep.mubr.bf16.mxu0 0
      %2466 = vmatmul.mubr.bf16.gmra.mrb[0].mxu0 %v2110
      %v2467 = vpop.f32.mrb[0].mxu0
      %v2468 = vadd.f32 0.0, %v2467
      %v2469 = vpop.f32.mrb[0].mxu0
      %v2470 = vpop.f32.mrb[0].mxu0
      %v2471 = vadd.f32 0.0, %v2470
      %v2472 = vpop.f32.mrb[0].mxu0
      %2473 = vmatprep.mubr.bf16.mxu0 0
      %2474 = vmatmul.mubr.bf16.gmra.mrb[0].mxu0 %v2112
      %v2475 = vpop.f32.mrb[0].mxu0
      %v2476 = vadd.f32 0.0, %v2475
      %v2477 = vpop.f32.mrb[0].mxu0
      %v2478 = vpop.f32.mrb[0].mxu0
      %v2479 = vadd.f32 0.0, %v2478
      %v2480 = vpop.f32.mrb[0].mxu0
      %2481 = vmatprep.mubr.bf16.mxu0 0
      %2482 = vmatmul.mubr.bf16.gmra.mrb[0].mxu0 %v2324
      %v2483 = vpop.f32.mrb[0].mxu0
      %v2484 = vadd.f32 0.0, %v2483
      %v2485 = vpop.f32.mrb[0].mxu0
      %v2486 = vpop.f32.mrb[0].mxu0
      %v2487 = vadd.f32 0.0, %v2486
      %v2488 = vpop.f32.mrb[0].mxu0
      %2489 = vdwg.mxu0
      %v2490 = vadd.f32 %v2279, %v2364
      %v2491 = vadd.f32 %v2280, %v2367
      %v2492 = vadd.f32 %v2281, %v2372
      %v2493 = vadd.f32 %v2282, %v2375
      %v2494 = vadd.f32 %v2283, %v2380
      %v2495 = vadd.f32 %v2284, %v2383
      %v2496 = vadd.f32 %v2285, %v2388
      %v2497 = vadd.f32 %v2286, %v2391
      %v2498 = vadd.f32 %v2287, %v2396
      %v2499 = vadd.f32 %v2288, %v2399
      %v2500 = vadd.f32 %v2289, %v2404
      %v2501 = vadd.f32 %v2290, %v2407
      %v2502 = vadd.f32 %v2291, %v2412
      %v2503 = vadd.f32 %v2292, %v2415
      %v2504 = vadd.f32 %v2293, %v2420
      %v2505 = vadd.f32 %v2294, %v2423
      %v2506 = vadd.f32 %v2295, %v2428
      %v2507 = vadd.f32 %v2296, %v2431
      %v2508 = vadd.f32 %v2297, %v2436
      %v2509 = vadd.f32 %v2298, %v2439
      %v2510 = vadd.f32 %v2299, %v2444
      %v2511 = vadd.f32 %v2300, %v2447
      %v2512 = vadd.f32 %v2301, %v2452
      %v2513 = vadd.f32 %v2302, %v2455
      %v2514 = vadd.f32 %v2303, %v2460
      %v2515 = vadd.f32 %v2304, %v2463
      %v2516 = vadd.f32 %v2305, %v2468
      %v2517 = vadd.f32 %v2306, %v2471
      %v2518 = vadd.f32 %v2307, %v2476
      %v2519 = vadd.f32 %v2308, %v2479
      %v2520 = vadd.f32 %v2309, %v2484
      %v2521 = vadd.f32 %v2310, %v2487
      %s2522 = scalar_lea.vmem %s3, 24
      %v2523 = vld [vmem:[%s2522] sm:$0xf]
      %v2524 = vld [vmem:[%s2522 + $0x4] sm:$0xf]
      %v2525 = vld [vmem:[%s2522 + $0x8] sm:$0xf]
      %v2529 = vunpack.c.l.b16 %v2523
      %v2530 = vunpack.c.l.b16 %v2524
      %v2531 = vunpack.c.l.b16 %v2525
      %v2532 = vpack.c.b16 %v2530, %v2529
      %v2533 = vpack.c.b16 %v2531, %v2531
      %v2536 = vsel %vm2114, %v2533, 0
      %2538 = vmatprep.subr.bf16.mxu0 0
      %2539 = vmatpush1.bf16.msra.mxu0 %v2532
      %2540 = vmatprep.subr.bf16.mxu0 0
      %2541 = vmatpush1.bf16.msra.mxu0 %v2536
      %2542 = vmatprep.subr.bf16.mxu0 0
      %2543 = vmatpush1.bf16.msra.mxu0 0
      %2544 = vmatprep.subr.bf16.mxu0 0
      %2545 = vmatpush1.bf16.msra.mxu0 0
      %2546 = vmatprep.subr.bf16.mxu0 0
      %2547 = vmatpush1.bf16.msra.mxu0 0
      %2548 = vmatprep.subr.bf16.mxu0 0
      %2549 = vmatpush1.bf16.msra.mxu0 0
      %2550 = vmatprep.subr.bf16.mxu0 0
      %2551 = vmatpush1.bf16.msra.mxu0 0
      %2552 = vmatprep.subr.bf16.mxu0 0
      %2553 = vmatpush1.bf16.msra.mxu0 0
      %2554 = vmatprep.subr.bf16.mxu0 0
      %2555 = vmatpush1.bf16.msra.mxu0 0
      %2556 = vmatprep.subr.bf16.mxu0 0
      %2557 = vmatpush1.bf16.msra.mxu0 0
      %2558 = vmatprep.subr.bf16.mxu0 0
      %2559 = vmatpush1.bf16.msra.mxu0 0
      %2560 = vmatprep.subr.bf16.mxu0 0
      %2561 = vmatpush1.bf16.msra.mxu0 0
      %2562 = vmatprep.subr.bf16.mxu0 0
      %2563 = vmatpush1.bf16.msra.mxu0 0
      %2564 = vmatprep.subr.bf16.mxu0 0
      %2565 = vmatpush1.bf16.msra.mxu0 0
      %2566 = vmatprep.subr.bf16.mxu0 0
      %2567 = vmatpush1.bf16.msra.mxu0 0
      %2568 = vmatprep.subr.bf16.mxu0 0
      %2569 = vmatpush1.bf16.msra.mxu0 0
      %2570 = vmatprep.mubr.bf16.mxu0 0
      %2571 = vmatmul.mubr.bf16.gmra.mrb[0].mxu0 %v2086
      %v2572 = vpop.f32.mrb[0].mxu0
      %v2573 = vadd.f32 0.0, %v2572
      %v2574 = vpop.f32.mrb[0].mxu0
      %v2575 = vpop.f32.mrb[0].mxu0
      %v2576 = vadd.f32 0.0, %v2575
      %v2577 = vpop.f32.mrb[0].mxu0
      %2578 = vmatprep.mubr.bf16.mxu0 0
      %2579 = vmatmul.mubr.bf16.gmra.mrb[0].mxu0 %v2088
      %v2580 = vpop.f32.mrb[0].mxu0
      %v2581 = vadd.f32 0.0, %v2580
      %v2582 = vpop.f32.mrb[0].mxu0
      %v2583 = vpop.f32.mrb[0].mxu0
      %v2584 = vadd.f32 0.0, %v2583
      %v2585 = vpop.f32.mrb[0].mxu0
      %2586 = vmatprep.mubr.bf16.mxu0 0
      %2587 = vmatmul.mubr.bf16.gmra.mrb[0].mxu0 %v2090
      %v2588 = vpop.f32.mrb[0].mxu0
      %v2589 = vadd.f32 0.0, %v2588
      %v2590 = vpop.f32.mrb[0].mxu0
      %v2591 = vpop.f32.mrb[0].mxu0
      %v2592 = vadd.f32 0.0, %v2591
      %v2593 = vpop.f32.mrb[0].mxu0
      %2594 = vmatprep.mubr.bf16.mxu0 0
      %2595 = vmatmul.mubr.bf16.gmra.mrb[0].mxu0 %v2092
      %v2596 = vpop.f32.mrb[0].mxu0
      %v2597 = vadd.f32 0.0, %v2596
      %v2598 = vpop.f32.mrb[0].mxu0
      %v2599 = vpop.f32.mrb[0].mxu0
      %v2600 = vadd.f32 0.0, %v2599
      %v2601 = vpop.f32.mrb[0].mxu0
      %2602 = vmatprep.mubr.bf16.mxu0 0
      %2603 = vmatmul.mubr.bf16.gmra.mrb[0].mxu0 %v2094
      %v2604 = vpop.f32.mrb[0].mxu0
      %v2605 = vadd.f32 0.0, %v2604
      %v2606 = vpop.f32.mrb[0].mxu0
      %v2607 = vpop.f32.mrb[0].mxu0
      %v2608 = vadd.f32 0.0, %v2607
      %v2609 = vpop.f32.mrb[0].mxu0
      %2610 = vmatprep.mubr.bf16.mxu0 0
      %2611 = vmatmul.mubr.bf16.gmra.mrb[0].mxu0 %v2096
      %v2612 = vpop.f32.mrb[0].mxu0
      %v2613 = vadd.f32 0.0, %v2612
      %v2614 = vpop.f32.mrb[0].mxu0
      %v2615 = vpop.f32.mrb[0].mxu0
      %v2616 = vadd.f32 0.0, %v2615
      %v2617 = vpop.f32.mrb[0].mxu0
      %2618 = vmatprep.mubr.bf16.mxu0 0
      %2619 = vmatmul.mubr.bf16.gmra.mrb[0].mxu0 %v2098
      %v2620 = vpop.f32.mrb[0].mxu0
      %v2621 = vadd.f32 0.0, %v2620
      %v2622 = vpop.f32.mrb[0].mxu0
      %v2623 = vpop.f32.mrb[0].mxu0
      %v2624 = vadd.f32 0.0, %v2623
      %v2625 = vpop.f32.mrb[0].mxu0
      %2626 = vmatprep.mubr.bf16.mxu0 0
      %2627 = vmatmul.mubr.bf16.gmra.mrb[0].mxu0 %v2100
      %v2628 = vpop.f32.mrb[0].mxu0
      %v2629 = vadd.f32 0.0, %v2628
      %v2630 = vpop.f32.mrb[0].mxu0
      %v2631 = vpop.f32.mrb[0].mxu0
      %v2632 = vadd.f32 0.0, %v2631
      %v2633 = vpop.f32.mrb[0].mxu0
      %2634 = vmatprep.mubr.bf16.mxu0 0
      %2635 = vmatmul.mubr.bf16.gmra.mrb[0].mxu0 %v2102
      %v2636 = vpop.f32.mrb[0].mxu0
      %v2637 = vadd.f32 0.0, %v2636
      %v2638 = vpop.f32.mrb[0].mxu0
      %v2639 = vpop.f32.mrb[0].mxu0
      %v2640 = vadd.f32 0.0, %v2639
      %v2641 = vpop.f32.mrb[0].mxu0
      %2642 = vmatprep.mubr.bf16.mxu0 0
      %2643 = vmatmul.mubr.bf16.gmra.mrb[0].mxu0 %v2104
      %v2644 = vpop.f32.mrb[0].mxu0
      %v2645 = vadd.f32 0.0, %v2644
      %v2646 = vpop.f32.mrb[0].mxu0
      %v2647 = vpop.f32.mrb[0].mxu0
      %v2648 = vadd.f32 0.0, %v2647
      %v2649 = vpop.f32.mrb[0].mxu0
      %2650 = vmatprep.mubr.bf16.mxu0 0
      %2651 = vmatmul.mubr.bf16.gmra.mrb[0].mxu0 %v2106
      %v2652 = vpop.f32.mrb[0].mxu0
      %v2653 = vadd.f32 0.0, %v2652
      %v2654 = vpop.f32.mrb[0].mxu0
      %v2655 = vpop.f32.mrb[0].mxu0
      %v2656 = vadd.f32 0.0, %v2655
      %v2657 = vpop.f32.mrb[0].mxu0
      %2658 = vmatprep.mubr.bf16.mxu0 0
      %2659 = vmatmul.mubr.bf16.gmra.mrb[0].mxu0 %v2108
      %v2660 = vpop.f32.mrb[0].mxu0
      %v2661 = vadd.f32 0.0, %v2660
      %v2662 = vpop.f32.mrb[0].mxu0
      %v2663 = vpop.f32.mrb[0].mxu0
      %v2664 = vadd.f32 0.0, %v2663
      %v2665 = vpop.f32.mrb[0].mxu0
      %2666 = vmatprep.mubr.bf16.mxu0 0
      %2667 = vmatmul.mubr.bf16.gmra.mrb[0].mxu0 %v2110
      %v2668 = vpop.f32.mrb[0].mxu0
      %v2669 = vadd.f32 0.0, %v2668
      %v2670 = vpop.f32.mrb[0].mxu0
      %v2671 = vpop.f32.mrb[0].mxu0
      %v2672 = vadd.f32 0.0, %v2671
      %v2673 = vpop.f32.mrb[0].mxu0
      %2674 = vmatprep.mubr.bf16.mxu0 0
      %2675 = vmatmul.mubr.bf16.gmra.mrb[0].mxu0 %v2112
      %v2676 = vpop.f32.mrb[0].mxu0
      %v2677 = vadd.f32 0.0, %v2676
      %v2678 = vpop.f32.mrb[0].mxu0
      %v2679 = vpop.f32.mrb[0].mxu0
      %v2680 = vadd.f32 0.0, %v2679
      %v2681 = vpop.f32.mrb[0].mxu0
      %2682 = vmatprep.mubr.bf16.mxu0 0
      %2683 = vmatmul.mubr.bf16.gmra.mrb[0].mxu0 %v2324
      %v2684 = vpop.f32.mrb[0].mxu0
      %v2685 = vadd.f32 0.0, %v2684
      %v2686 = vpop.f32.mrb[0].mxu0
      %v2687 = vpop.f32.mrb[0].mxu0
      %v2688 = vadd.f32 0.0, %v2687
      %v2689 = vpop.f32.mrb[0].mxu0
      %2690 = vmatprep.mubr.bf16.mxu0 0
      %2691 = vmatmul.mubr.bf16.gmra.mrb[0].mxu0 %v2082
      %v2692 = vpop.f32.mrb[0].mxu0
      %v2693 = vadd.f32 0.0, %v2692
      %v2694 = vpop.f32.mrb[0].mxu0
      %v2695 = vpop.f32.mrb[0].mxu0
      %v2696 = vadd.f32 0.0, %v2695
      %v2697 = vpop.f32.mrb[0].mxu0
      %2698 = vdwg.mxu0
      %v2699 = vadd.f32 %v2490, %v2573
      %v2700 = vadd.f32 %v2491, %v2576
      %v2701 = vadd.f32 %v2492, %v2581
      %v2702 = vadd.f32 %v2493, %v2584
      %v2703 = vadd.f32 %v2494, %v2589
      %v2704 = vadd.f32 %v2495, %v2592
      %v2705 = vadd.f32 %v2496, %v2597
      %v2706 = vadd.f32 %v2497, %v2600
      %v2707 = vadd.f32 %v2498, %v2605
      %v2708 = vadd.f32 %v2499, %v2608
      %v2709 = vadd.f32 %v2500, %v2613
      %v2710 = vadd.f32 %v2501, %v2616
      %v2711 = vadd.f32 %v2502, %v2621
      %v2712 = vadd.f32 %v2503, %v2624
      %v2713 = vadd.f32 %v2504, %v2629
      %v2714 = vadd.f32 %v2505, %v2632
      %v2715 = vadd.f32 %v2506, %v2637
      %v2716 = vadd.f32 %v2507, %v2640
      %v2717 = vadd.f32 %v2508, %v2645
      %v2718 = vadd.f32 %v2509, %v2648
      %v2719 = vadd.f32 %v2510, %v2653
      %v2720 = vadd.f32 %v2511, %v2656
      %v2721 = vadd.f32 %v2512, %v2661
      %v2722 = vadd.f32 %v2513, %v2664
      %v2723 = vadd.f32 %v2514, %v2669
      %v2724 = vadd.f32 %v2515, %v2672
      %v2725 = vadd.f32 %v2516, %v2677
      %v2726 = vadd.f32 %v2517, %v2680
      %v2727 = vadd.f32 %v2518, %v2685
      %v2728 = vadd.f32 %v2519, %v2688
      %v2729 = vadd.f32 %v2520, %v2693
      %v2730 = vadd.f32 %v2521, %v2696
      %v2731 = vmax.f32 %v2699, 0.0
      %v2732 = vmax.f32 %v2700, 0.0
      %v2733 = vmax.f32 %v2701, 0.0
      %v2734 = vmax.f32 %v2702, 0.0
      %v2735 = vmax.f32 %v2703, 0.0
      %v2736 = vmax.f32 %v2704, 0.0
      %v2737 = vmax.f32 %v2705, 0.0
      %v2738 = vmax.f32 %v2706, 0.0
      %v2739 = vmax.f32 %v2707, 0.0
      %v2740 = vmax.f32 %v2708, 0.0
      %v2741 = vmax.f32 %v2709, 0.0
      %v2742 = vmax.f32 %v2710, 0.0
      %v2743 = vmax.f32 %v2711, 0.0
      %v2744 = vmax.f32 %v2712, 0.0
      %v2745 = vmax.f32 %v2713, 0.0
      %v2746 = vmax.f32 %v2714, 0.0
      %v2747 = vmax.f32 %v2715, 0.0
      %v2748 = vmax.f32 %v2716, 0.0
      %v2749 = vmax.f32 %v2717, 0.0
      %v2750 = vmax.f32 %v2718, 0.0
      %v2751 = vmax.f32 %v2719, 0.0
      %v2752 = vmax.f32 %v2720, 0.0
      %v2753 = vmax.f32 %v2721, 0.0
      %v2754 = vmax.f32 %v2722, 0.0
      %v2755 = vmax.f32 %v2723, 0.0
      %v2756 = vmax.f32 %v2724, 0.0
      %v2757 = vmax.f32 %v2725, 0.0
      %v2758 = vmax.f32 %v2726, 0.0
      %v2759 = vmax.f32 %v2727, 0.0
      %v2760 = vmax.f32 %v2728, 0.0
      %v2761 = vmax.f32 %v2729, 0.0
      %v2762 = vmax.f32 %v2730, 0.0
      %v2763 = vpack.c.bf16 %v2732, %v2731
      %v2764 = vpack.c.bf16 %v2734, %v2733
      %v2765 = vpack.c.bf16 %v2736, %v2735
      %v2766 = vpack.c.bf16 %v2738, %v2737
      %v2767 = vpack.c.bf16 %v2740, %v2739
      %v2768 = vpack.c.bf16 %v2742, %v2741
      %v2769 = vpack.c.bf16 %v2744, %v2743
      %v2770 = vpack.c.bf16 %v2746, %v2745
      %v2771 = vpack.c.bf16 %v2748, %v2747
      %v2772 = vpack.c.bf16 %v2750, %v2749
      %v2773 = vpack.c.bf16 %v2752, %v2751
      %v2774 = vpack.c.bf16 %v2754, %v2753
      %v2775 = vpack.c.bf16 %v2756, %v2755
      %v2776 = vpack.c.bf16 %v2758, %v2757
      %v2777 = vpack.c.bf16 %v2760, %v2759
      %v2778 = vpack.c.bf16 %v2762, %v2761
      %v2795 = vunpack.c.l.b16 %v2763
      %v2796 = vunpack.c.h.b16 %v2763
      %v2797 = vunpack.c.l.b16 %v2764
      %v2798 = vunpack.c.h.b16 %v2764
      %v2799 = vunpack.c.l.b16 %v2765
      %v2800 = vunpack.c.h.b16 %v2765
      %v2801 = vunpack.c.l.b16 %v2766
      %v2802 = vunpack.c.h.b16 %v2766
      %v2803 = vunpack.c.l.b16 %v2767
      %v2804 = vunpack.c.h.b16 %v2767
      %v2805 = vunpack.c.l.b16 %v2768
      %v2806 = vunpack.c.h.b16 %v2768
      %v2807 = vunpack.c.l.b16 %v2769
      %v2808 = vunpack.c.h.b16 %v2769
      %v2809 = vunpack.c.l.b16 %v2770
      %v2810 = vunpack.c.h.b16 %v2770
      %v2811 = vunpack.c.l.b16 %v2771
      %v2812 = vunpack.c.h.b16 %v2771
      %v2813 = vunpack.c.l.b16 %v2772
      %v2814 = vunpack.c.h.b16 %v2772
      %v2815 = vunpack.c.l.b16 %v2773
      %v2816 = vunpack.c.h.b16 %v2773
      %v2817 = vunpack.c.l.b16 %v2774
      %v2818 = vunpack.c.h.b16 %v2774
      %v2819 = vunpack.c.l.b16 %v2775
      %v2820 = vunpack.c.h.b16 %v2775
      %v2821 = vunpack.c.l.b16 %v2776
      %v2822 = vunpack.c.h.b16 %v2776
      %v2823 = vunpack.c.l.b16 %v2777
      %v2824 = vunpack.c.h.b16 %v2777
      %v2825 = vunpack.c.l.b16 %v2778
      %v2826 = vunpack.c.h.b16 %v2778
      %v2827 = vpack.c.b16 %v2795, %v2795
      %v2828 = vpack.c.b16 %v2796, %v2796
      %v2829 = vpack.c.b16 %v2797, %v2797
      %v2830 = vpack.c.b16 %v2798, %v2798
      %v2831 = vpack.c.b16 %v2799, %v2799
      %v2832 = vpack.c.b16 %v2800, %v2800
      %v2833 = vpack.c.b16 %v2801, %v2801
      %v2834 = vpack.c.b16 %v2802, %v2802
      %v2835 = vpack.c.b16 %v2803, %v2803
      %v2836 = vpack.c.b16 %v2804, %v2804
      %v2837 = vpack.c.b16 %v2805, %v2805
      %v2838 = vpack.c.b16 %v2806, %v2806
      %v2839 = vpack.c.b16 %v2807, %v2807
      %v2840 = vpack.c.b16 %v2808, %v2808
      %v2841 = vpack.c.b16 %v2809, %v2809
      %v2842 = vpack.c.b16 %v2810, %v2810
      %v2843 = vpack.c.b16 %v2811, %v2811
      %v2844 = vpack.c.b16 %v2812, %v2812
      %v2845 = vpack.c.b16 %v2813, %v2813
      %v2846 = vpack.c.b16 %v2814, %v2814
      %v2847 = vpack.c.b16 %v2815, %v2815
      %v2848 = vpack.c.b16 %v2816, %v2816
      %v2849 = vpack.c.b16 %v2817, %v2817
      %v2850 = vpack.c.b16 %v2818, %v2818
      %v2851 = vpack.c.b16 %v2819, %v2819
      %v2852 = vpack.c.b16 %v2820, %v2820
      %v2853 = vpack.c.b16 %v2821, %v2821
      %v2854 = vpack.c.b16 %v2822, %v2822
      %v2855 = vpack.c.b16 %v2823, %v2823
      %v2856 = vpack.c.b16 %v2824, %v2824
      %v2857 = vpack.c.b16 %v2825, %v2825
      %v2858 = vpack.c.b16 %v2826, %v2826
      %vm2891 = vcmask 60416
      %2892 = vst.msk [vmem:[%s278] sm:$0xf] %vm2891, %v2827
      %2893 = vst.msk [vmem:[%s278 + $0x4] sm:$0xf] %vm2891, %v2828
      %2894 = vst.msk [vmem:[%s278 + $0x8] sm:$0xf] %vm2891, %v2829
      %2895 = vst.msk [vmem:[%s278 + $0xc] sm:$0xf] %vm2891, %v2830
      %2896 = vst.msk [vmem:[%s278 + $0x10] sm:$0xf] %vm2891, %v2831
      %2897 = vst.msk [vmem:[%s278 + $0x14] sm:$0xf] %vm2891, %v2832
      %2898 = vst.msk [vmem:[%s278 + $0x18] sm:$0xf] %vm2891, %v2833
      %2899 = vst.msk [vmem:[%s278 + $0x1c] sm:$0xf] %vm2891, %v2834
      %2900 = vst.msk [vmem:[%s278 + $0x20] sm:$0xf] %vm2891, %v2835
      %2901 = vst.msk [vmem:[%s278 + $0x24] sm:$0xf] %vm2891, %v2836
      %2902 = vst.msk [vmem:[%s278 + $0x28] sm:$0xf] %vm2891, %v2837
      %2903 = vst.msk [vmem:[%s278 + $0x2c] sm:$0xf] %vm2891, %v2838
      %2904 = vst.msk [vmem:[%s278 + $0x30] sm:$0xf] %vm2891, %v2839
      %2905 = vst.msk [vmem:[%s278 + $0x34] sm:$0xf] %vm2891, %v2840
      %2906 = vst.msk [vmem:[%s278 + $0x38] sm:$0xf] %vm2891, %v2841
      %2907 = vst.msk [vmem:[%s278 + $0x3c] sm:$0xf] %vm2891, %v2842
      %2908 = vst.msk [vmem:[%s278 + $0x40] sm:$0xf] %vm2891, %v2843
      %2909 = vst.msk [vmem:[%s278 + $0x44] sm:$0xf] %vm2891, %v2844
      %2910 = vst.msk [vmem:[%s278 + $0x48] sm:$0xf] %vm2891, %v2845
      %2911 = vst.msk [vmem:[%s278 + $0x4c] sm:$0xf] %vm2891, %v2846
      %2912 = vst.msk [vmem:[%s278 + $0x50] sm:$0xf] %vm2891, %v2847
      %2913 = vst.msk [vmem:[%s278 + $0x54] sm:$0xf] %vm2891, %v2848
      %2914 = vst.msk [vmem:[%s278 + $0x58] sm:$0xf] %vm2891, %v2849
      %2915 = vst.msk [vmem:[%s278 + $0x5c] sm:$0xf] %vm2891, %v2850
      %2916 = vst.msk [vmem:[%s278 + $0x60] sm:$0xf] %vm2891, %v2851
      %2917 = vst.msk [vmem:[%s278 + $0x64] sm:$0xf] %vm2891, %v2852
      %2918 = vst.msk [vmem:[%s278 + $0x68] sm:$0xf] %vm2891, %v2853
      %2919 = vst.msk [vmem:[%s278 + $0x6c] sm:$0xf] %vm2891, %v2854
      %2920 = vst.msk [vmem:[%s278 + $0x70] sm:$0xf] %vm2891, %v2855
      %2921 = vst.msk [vmem:[%s278 + $0x74] sm:$0xf] %vm2891, %v2856
      %2922 = vst.msk [vmem:[%s278 + $0x78] sm:$0xf] %vm2891, %v2857
      %2923 = vst.msk [vmem:[%s278 + $0x7c] sm:$0xf] %vm2891, %v2858
      %s2924 = smul.u32 32, %s18
      %p2925 = scmp.lt.s32.totalorder %s2924, 63
      %s2926 = scalar_select %p2925, %s2924, 63
      %s2927 = smul.addr %s2926, 4
      %s2928 = scalar_lea.vmem %s7, %s2927
      // Predicated region
      $region49: #{tpu_custom_call.1} parent=47 // pred_check
        %p2929 = pneg %p188
      $region50: #{tpu_custom_call.1} parent=47 // pred_check_branch
        %2931 = sbr.rel (%p2929) target = $region52
      $region51: #{tpu_custom_call.1} parent=47 // pred_region
        %s2932 = smul.u32 32, %s18
      $region52: #{tpu_custom_call.1} parent=47 // pred_fallthru
        _
    $region48: #{tpu_custom_call.1} parent=5 // pred_fallthru
      _
    %p2933 = scmp.le.s32.totalorder 2, %s13
    // Predicated region
    $region53: #{tpu_custom_call.1} parent=5 // pred_check
      %p2934 = pneg %p2933
    $region54: #{tpu_custom_call.1} parent=5 // pred_check_branch
      %2936 = sbr.rel (%p2934) target = $region56
    $region55: #{tpu_custom_call.1} parent=5 // pred_region
      %s2937 = ssub.s32 %s13, 2
      // Predicated region
      $region57: #{tpu_custom_call.1} parent=55 // pred_check
        %p2938 = pneg %p194
      $region58: #{tpu_custom_call.1} parent=55 // pred_check_branch
        %2940 = sbr.rel (%p2938) target = $region60
      $region59: #{tpu_custom_call.1} parent=55 // pred_region
        %s2941 = smul.u32 32, %s19
        %p2942 = scmp.lt.s32.totalorder %s2941, 63
        %s2943 = scalar_select %p2942, %s2941, 63
        %s2944 = smul.addr %s2943, 4
        %s2945 = scalar_lea.vmem %s7, %s2944
      $region60: #{tpu_custom_call.1} parent=55 // pred_fallthru
        _
    $region56: #{tpu_custom_call.1} parent=5 // pred_fallthru
      _
  $region6: #{tpu_custom_call.1} parent=0 // loop_footer
    %s17 = sadd.s32 1, %s13
  $region7: #{tpu_custom_call.1} parent=0 // loop_footer_branch
    %12 = sbr.rel target = $region3
  $region8: #{tpu_custom_call.1} parent=0 // loop_exit
    _

</llo_original>
